<compile_context>
chip_gen: v7x
topology: tpu7x:2x2x1
jax: 0.10.0
libtpu: 0.0.40
codegen_flags: <defaults>
</compile_context>

<pallas_src>
import jax
import jax.numpy as jnp
from jax.experimental import pallas as pl
from jax.experimental.pallas import tpu as pltpu


# --------------------------------------------------------------------------
# In-kernel helpers (only ops with guaranteed Mosaic lowering)
# --------------------------------------------------------------------------
def _erf(x):
    # Abramowitz & Stegun 7.1.26 polynomial, max abs err ~1.5e-7 (~= f32 eps).
    a1, a2, a3, a4, a5 = 0.254829592, -0.284496736, 1.421413741, -1.453152027, 1.061405429
    p = 0.3275911
    sgn = jnp.where(x >= 0.0, 1.0, -1.0)
    ax = jnp.abs(x)
    t = 1.0 / (1.0 + p * ax)
    poly = ((((a5 * t + a4) * t + a3) * t + a2) * t + a1) * t
    return sgn * (1.0 - poly * jnp.exp(-ax * ax))


def _gelu(x):
    # exact (erf-based) GELU, matching torch.nn.GELU() default
    return 0.5 * x * (1.0 + _erf(x * 0.7071067811865476))


def _pick_tile(rows, target=512):
    """Largest row-tile <= target that divides `rows` and is a multiple of 8."""
    if rows <= target:
        return rows
    t = target
    while t >= 8:
        if rows % t == 0:
            return t
        t -= 8
    return rows


# --------------------------------------------------------------------------
# Pallas kernels
# --------------------------------------------------------------------------
def _fused_upscale_mask_kernel(x_ref, w1_ref, b1_ref, g_ref, beta_ref,
                               w2_ref, b2_ref, hbd_ref, o_ref):
    """Fused: ConvT1(k2,s2)+LN2d+GELU -> ConvT2(k2,s2)+GELU -> @hyper_in^T.

    x_ref:  (1, TILE, C)        rows of src (channels-last)
    w1_ref: (C, 4*C1)           ConvT1 weight, columns grouped (di1, dj1, c1)
    w2_ref: (C1, 4*C2)          ConvT2 weight, columns grouped (di2, dj2, c2)
    hbd_ref:(1, 4*C2, 4*T)      block-diag of hyper_in[b]^T (one block per g2)
    o_ref:  (1, TILE, 16*T)     mask contributions, cols (di1,dj1,di2,dj2,t)
    """
    x = x_ref[0].astype(jnp.float32)                                   # (TILE, C)
    y1 = jnp.dot(x, w1_ref[...], preferred_element_type=jnp.float32) + b1_ref[...]

    cout1 = g_ref.shape[-1]
    gamma = g_ref[...]                                                 # (1, C1)
    beta = beta_ref[...]
    w2 = w2_ref[...]
    b2 = b2_ref[...]
    hbd = hbd_ref[0]                                                   # (4*C2, 4*T)
    tcols = hbd.shape[-1]                                              # 4*T

    # static loop over the 2x2 positions of ConvT1 (each is one upscaled pixel)
    for g1 in range(4):
        seg = y1[:, g1 * cout1:(g1 + 1) * cout1]
        # LayerNorm2d over channels (eps=1e-6); rsqrt -> EUP instead of div/sqrt
        mu = jnp.mean(seg, axis=-1, keepdims=True)
        var = jnp.mean(jnp.square(seg - mu), axis=-1, keepdims=True)
        u1 = _gelu((seg - mu) * jax.lax.rsqrt(var + 1e-6) * gamma + beta)
        # ConvT2 as matmul, then GELU, then project onto hyper tokens via the
        # block-diagonal hyper matrix (one matmul + one store per g1 group).
        y2 = jnp.dot(u1, w2, preferred_element_type=jnp.float32) + b2  # (TILE, 4*C2)
        m = jnp.dot(_gelu(y2), hbd, preferred_element_type=jnp.float32)  # (TILE, 4*T)
        o_ref[0, :, g1 * tcols:(g1 + 1) * tcols] = m.astype(o_ref.dtype)


def _mlp3_batched_kernel(x_ref, w1_ref, b1_ref, w2_ref, b2_ref, w3_ref, b3_ref, o_ref):
    """Grid-of-G 3-layer MLP: Linear -> ReLU -> Linear -> ReLU -> Linear."""
    x = x_ref[0].astype(jnp.float32)
    h = jnp.maximum(jnp.dot(x, w1_ref[0], preferred_element_type=jnp.float32) + b1_ref[0], 0.0)
    h = jnp.maximum(jnp.dot(h, w2_ref[0], preferred_element_type=jnp.float32) + b2_ref[0], 0.0)
    o = jnp.dot(h, w3_ref[0], preferred_element_type=jnp.float32) + b3_ref[0]
    o_ref[0] = o.astype(o_ref.dtype)


# --------------------------------------------------------------------------
# pallas_call wrappers
# --------------------------------------------------------------------------
def _fused_upscale_mask(src_cl, wct1, bct1, ln_g, ln_b, wct2, bct2, hyper_bd):
    """src_cl: (B, HW, C) -> mask contributions (B, HW, 16*T)."""
    B, HW, C = src_cl.shape
    tcols4 = hyper_bd.shape[2]            # 4*T
    TILE = _pick_tile(HW)
    n_tiles = HW // TILE

    full2 = lambda b, r: (0, 0)
    return pl.pallas_call(
        _fused_upscale_mask_kernel,
        out_shape=jax.ShapeDtypeStruct((B, HW, 4 * tcols4), jnp.float32),
        grid=(B, n_tiles),
        in_specs=[
            pl.BlockSpec((1, TILE, C), lambda b, r: (b, r, 0)),
            pl.BlockSpec(wct1.shape, full2),
            pl.BlockSpec(bct1.shape, full2),
            pl.BlockSpec(ln_g.shape, full2),
            pl.BlockSpec(ln_b.shape, full2),
            pl.BlockSpec(wct2.shape, full2),
            pl.BlockSpec(bct2.shape, full2),
            pl.BlockSpec((1,) + hyper_bd.shape[1:], lambda b, r: (b, 0, 0)),
        ],
        out_specs=pl.BlockSpec((1, TILE, 4 * tcols4), lambda b, r: (b, r, 0)),
        compiler_params=pltpu.CompilerParams(
            dimension_semantics=("parallel", "parallel")),
    )(src_cl, wct1, bct1, ln_g, ln_b, wct2, bct2, hyper_bd)


def _mlp3_batched(x, w1, b1, w2, b2, w3, b3):
    """x: (G, N, Din); weights (G, Din, D*); biases (G, 1, D*). One call, grid=(G,)."""
    G, N, _ = x.shape
    dout = w3.shape[-1]

    def bspec(a):
        return pl.BlockSpec((1,) + a.shape[1:], lambda g: (g, 0, 0))

    return pl.pallas_call(
        _mlp3_batched_kernel,
        out_shape=jax.ShapeDtypeStruct((G, N, dout), jnp.float32),
        grid=(G,),
        in_specs=[bspec(a) for a in (x, w1, b1, w2, b2, w3, b3)],
        out_specs=pl.BlockSpec((1, N, dout), lambda g: (g, 0, 0)),
        compiler_params=pltpu.CompilerParams(dimension_semantics=("parallel",)),
    )(x, w1, b1, w2, b2, w3, b3)


# --------------------------------------------------------------------------
# Transformer stand-in (injected dependency in the PyTorch module)
# --------------------------------------------------------------------------
def _transformer_standin(src, pos_src, tokens):
    # src/pos_src: (B, C, H, W) NCHW; tokens: (B, N, C)
    b, c, h, w = src.shape
    src_f = src.reshape(b, c, h * w).transpose(0, 2, 1)    # (B, HW, C)
    pos_f = pos_src.reshape(b, c, h * w).transpose(0, 2, 1)
    scale = 1.0 / jnp.sqrt(jnp.float32(c))
    k = src_f + pos_f
    attn = jax.nn.softmax(jnp.einsum("bnc,bmc->bnm", tokens, k) * scale, axis=-1)
    hs = tokens + jnp.einsum("bnm,bmc->bnc", attn, src_f)
    attn2 = jax.nn.softmax(jnp.einsum("bmc,bnc->bmn", k, hs) * scale, axis=-1)
    src_out = src_f + jnp.einsum("bmn,bnc->bmc", attn2, hs)
    return hs, src_out                                      # (B, N, C), (B, HW, C)


# --------------------------------------------------------------------------
# Parameter init (deterministic, synthetic)
# --------------------------------------------------------------------------
def init_params(key, transformer_dim=32, num_multimask_outputs=3,
                iou_head_hidden_dim=64, iou_head_depth=3):
    assert iou_head_depth == 3  # fused MLP kernel handles 3 layers
    C = transformer_dim
    T = num_multimask_outputs + 1
    H = iou_head_hidden_dim
    ks = jax.random.split(key, 20)

    def w(k, shape, scale=0.05):
        return scale * jax.random.normal(k, shape, jnp.float32)

    params = {
        "iou_token": w(ks[0], (1, C)),
        "mask_tokens": w(ks[1], (T, C)),
        # ConvTranspose2d weights stored PyTorch-style: (C_in, C_out, kH, kW)
        "ct1_w": w(ks[2], (C, C // 4, 2, 2)),
        "ct1_b": w(ks[3], (C // 4,)),
        "ln_g": jnp.ones((C // 4,), jnp.float32),
        "ln_b": jnp.zeros((C // 4,), jnp.float32),
        "ct2_w": w(ks[4], (C // 4, C // 8, 2, 2)),
        "ct2_b": w(ks[5], (C // 8,)),
        # hypernetwork MLPs, stacked over the T mask tokens
        "hyp_w1": w(ks[6], (T, C, C)),        "hyp_b1": w(ks[7], (T, 1, C)),
        "hyp_w2": w(ks[8], (T, C, C)),        "hyp_b2": w(ks[9], (T, 1, C)),
        "hyp_w3": w(ks[10], (T, C, C // 8)),  "hyp_b3": w(ks[11], (T, 1, C // 8)),
        # IoU prediction head (stacked with G=1 so it reuses the same kernel)
        "iou_w1": w(ks[12], (1, C, H)),  "iou_b1": w(ks[13], (1, 1, H)),
        "iou_w2": w(ks[14], (1, H, H)),  "iou_b2": w(ks[15], (1, 1, H)),
        "iou_w3": w(ks[16], (1, H, T)),  "iou_b3": w(ks[17], (1, 1, T)),
    }
    return params


# --------------------------------------------------------------------------
# MaskDecoder forward
# --------------------------------------------------------------------------
def _mask_decoder_forward_impl(params, image_embeddings, image_pe,
                               sparse_prompt_embeddings, dense_prompt_embeddings,
                               multimask_output=True):
    B = sparse_prompt_embeddings.shape[0]
    T = params["mask_tokens"].shape[0]

    # ---- token assembly ----------------------------------------------------
    output_tokens = jnp.concatenate([params["iou_token"], params["mask_tokens"]], axis=0)
    output_tokens = jnp.broadcast_to(output_tokens[None], (B,) + output_tokens.shape)
    tokens = jnp.concatenate([output_tokens, sparse_prompt_embeddings], axis=1)

    src = image_embeddings + dense_prompt_embeddings          # (B, C, H, W)
    pos_src = jnp.repeat(image_pe, tokens.shape[0], axis=0)
    b, c, h, w = src.shape
    cout1, cout2 = c // 4, c // 8

    # ---- transformer (injected dependency -> stand-in) ----------------------
    hs, src_seq = _transformer_standin(src, pos_src, tokens)  # src_seq: (B, HW, C)
    iou_token_out = hs[:, 0, :]                               # (B, C)
    mask_tokens_out = hs[:, 1:1 + T, :]                       # (B, T, C)

    # ---- hypernetwork MLPs: single pallas_call, grid=(T,) --------------------
    hyper_x = mask_tokens_out.transpose(1, 0, 2)              # (T, B, C)
    hyper_out = _mlp3_batched(hyper_x,
                              params["hyp_w1"], params["hyp_b1"],
                              params["hyp_w2"], params["hyp_b2"],
                              params["hyp_w3"], params["hyp_b3"])  # (T, B, C/8)
    hyper_in = hyper_out.transpose(1, 0, 2)                   # (B, T, C/8)

    # block-diagonal hyper weights: 4 copies of hyper_in^T on the diagonal so
    # the per-g2-group mask projection is one matmul inside the fused kernel.
    hyper_t = hyper_in.transpose(0, 2, 1)                     # (B, C/8, T)
    eye4 = jnp.eye(4, dtype=jnp.float32)
    hyper_bd = jnp.einsum("ij,bct->bicjt", eye4, hyper_t).reshape(b, 4 * cout2, 4 * T)

    # ---- fused upscaling + mask projection -----------------------------------
    # ConvTranspose2d(k=2,s=2): out[b,2i+di,2j+dj,co] = x[b,i,j,:] @ W[:,co,di,dj] + bias
    wct1 = params["ct1_w"].transpose(0, 2, 3, 1).reshape(c, 4 * cout1)   # cols (di,dj,co)
    bct1 = jnp.tile(params["ct1_b"], 4)[None, :]
    wct2 = params["ct2_w"].transpose(0, 2, 3, 1).reshape(cout1, 4 * cout2)
    bct2 = jnp.tile(params["ct2_b"], 4)[None, :]

    masks_cl = _fused_upscale_mask(
        src_seq, wct1, bct1,
        params["ln_g"][None, :], params["ln_b"][None, :],
        wct2, bct2, hyper_bd)                                 # (B, HW, 16*T)

    # column layout is (di1, dj1, di2, dj2, t); rearrange (tiny T-channel tensor)
    masks = (masks_cl.reshape(b, h, w, 2, 2, 2, 2, T)
                     .transpose(0, 7, 1, 3, 5, 2, 4, 6)
                     .reshape(b, T, 4 * h, 4 * w))

    # ---- IoU prediction head --------------------------------------------------
    iou_pred = _mlp3_batched(iou_token_out[None],
                             params["iou_w1"], params["iou_b1"],
                             params["iou_w2"], params["iou_b2"],
                             params["iou_w3"], params["iou_b3"])[0]   # (B, T)

    # ---- multimask slicing ------------------------------------------------------
    if multimask_output:
        masks = masks[:, 1:, :, :]
        iou_pred = iou_pred[:, 1:]
    else:
        masks = masks[:, 0:1, :, :]
        iou_pred = iou_pred[:, 0:1]
    return masks, iou_pred


mask_decoder_forward = jax.jit(_mask_decoder_forward_impl,
                               static_argnames=("multimask_output",))


# --------------------------------------------------------------------------
if __name__ == "__main__":
    key = jax.random.PRNGKey(0)
    C, B, H, W, NPTS = 32, 2, 8, 8, 3

    k_params, k1, k2, k3, k4 = jax.random.split(key, 5)
    params = init_params(k_params, transformer_dim=C, num_multimask_outputs=3,
                         iou_head_hidden_dim=64, iou_head_depth=3)

    image_embeddings = jax.random.normal(k1, (B, C, H, W), jnp.float32)
    image_pe = jax.random.normal(k2, (1, C, H, W), jnp.float32)
    sparse_prompt_embeddings = jax.random.normal(k3, (B, NPTS, C), jnp.float32)
    dense_prompt_embeddings = jax.random.normal(k4, (B, C, H, W), jnp.float32)

    masks, iou_pred = mask_decoder_forward(
        params, image_embeddings, image_pe,
        sparse_prompt_embeddings, dense_prompt_embeddings,
        multimask_output=True,
    )
    jax.block_until_ready((masks, iou_pred))
    assert masks.shape == (B, 3, 4 * H, 4 * W), masks.shape
    assert iou_pred.shape == (B, 3), iou_pred.shape
    print("KERNEL_OK")
</pallas_src>

<mosaic_0001>
module attributes {stable_mosaic.version = 11 : i64} {
  func.func @_mlp3_batched_kernel(%arg0: i32, %arg1: memref<1x2x32xf32, #tpu.memory_space<vmem>>, %arg2: memref<1x32x32xf32, #tpu.memory_space<vmem>>, %arg3: memref<1x1x32xf32, #tpu.memory_space<vmem>>, %arg4: memref<1x32x32xf32, #tpu.memory_space<vmem>>, %arg5: memref<1x1x32xf32, #tpu.memory_space<vmem>>, %arg6: memref<1x32x4xf32, #tpu.memory_space<vmem>>, %arg7: memref<1x1x4xf32, #tpu.memory_space<vmem>>, %arg8: memref<1x2x4xf32, #tpu.memory_space<vmem>>) attributes {dimension_semantics = [#tpu.dimension_semantics<parallel>], iteration_bounds = array<i64: 4>, scalar_prefetch = 0 : i64, scratch_operands = 0 : i64, tpu.core_type = #tpu.core_type<tc>, window_params = [{transform_indices = @transform_0, window_bounds = array<i64: 1, 2, 32>}, {transform_indices = @transform_1, window_bounds = array<i64: 1, 32, 32>}, {transform_indices = @transform_2, window_bounds = array<i64: 1, 1, 32>}, {transform_indices = @transform_3, window_bounds = array<i64: 1, 32, 32>}, {transform_indices = @transform_4, window_bounds = array<i64: 1, 1, 32>}, {transform_indices = @transform_5, window_bounds = array<i64: 1, 32, 4>}, {transform_indices = @transform_6, window_bounds = array<i64: 1, 1, 4>}, {transform_indices = @transform_7, window_bounds = array<i64: 1, 2, 4>}]} {
    %c0 = arith.constant 0 : index
    %c0_0 = arith.constant 0 : index
    %c0_1 = arith.constant 0 : index
    %0 = vector.load %arg1[%c0, %c0_0, %c0_1] : memref<1x2x32xf32, #tpu.memory_space<vmem>>, vector<1x2x32xf32>
    %1 = vector.shape_cast %0 : vector<1x2x32xf32> to vector<2x32xf32>
    %c0_2 = arith.constant 0 : index
    %c0_3 = arith.constant 0 : index
    %c0_4 = arith.constant 0 : index
    %2 = vector.load %arg2[%c0_2, %c0_3, %c0_4] : memref<1x32x32xf32, #tpu.memory_space<vmem>>, vector<1x32x32xf32>
    %3 = vector.shape_cast %2 : vector<1x32x32xf32> to vector<32x32xf32>
    %cst = arith.constant dense<0.000000e+00> : vector<2x32xf32>
    %4 = tpu.matmul %1, %3, %cst {dimension_numbers = #tpu.dot_dimension_numbers<[1], [0], [0], [1], [0, 0, 1, 1], [], []>} : vector<2x32xf32>, vector<32x32xf32>, vector<2x32xf32> -> vector<2x32xf32>
    %c0_5 = arith.constant 0 : index
    %c0_6 = arith.constant 0 : index
    %c0_7 = arith.constant 0 : index
    %5 = vector.load %arg3[%c0_5, %c0_6, %c0_7] : memref<1x1x32xf32, #tpu.memory_space<vmem>>, vector<1x1x32xf32>
    %6 = vector.shape_cast %5 : vector<1x1x32xf32> to vector<1x32xf32>
    %7 = vector.broadcast %6 : vector<1x32xf32> to vector<2x32xf32>
    %8 = arith.addf %4, %7 : vector<2x32xf32>
    %cst_8 = arith.constant 0.000000e+00 : f32
    %9 = vector.broadcast %cst_8 : f32 to vector<2x32xf32>
    %10 = arith.maximumf %8, %9 : vector<2x32xf32>
    %c0_9 = arith.constant 0 : index
    %c0_10 = arith.constant 0 : index
    %c0_11 = arith.constant 0 : index
    %11 = vector.load %arg4[%c0_9, %c0_10, %c0_11] : memref<1x32x32xf32, #tpu.memory_space<vmem>>, vector<1x32x32xf32>
    %12 = vector.shape_cast %11 : vector<1x32x32xf32> to vector<32x32xf32>
    %cst_12 = arith.constant dense<0.000000e+00> : vector<2x32xf32>
    %13 = tpu.matmul %10, %12, %cst_12 {dimension_numbers = #tpu.dot_dimension_numbers<[1], [0], [0], [1], [0, 0, 1, 1], [], []>} : vector<2x32xf32>, vector<32x32xf32>, vector<2x32xf32> -> vector<2x32xf32>
    %c0_13 = arith.constant 0 : index
    %c0_14 = arith.constant 0 : index
    %c0_15 = arith.constant 0 : index
    %14 = vector.load %arg5[%c0_13, %c0_14, %c0_15] : memref<1x1x32xf32, #tpu.memory_space<vmem>>, vector<1x1x32xf32>
    %15 = vector.shape_cast %14 : vector<1x1x32xf32> to vector<1x32xf32>
    %16 = vector.broadcast %15 : vector<1x32xf32> to vector<2x32xf32>
    %17 = arith.addf %13, %16 : vector<2x32xf32>
    %cst_16 = arith.constant 0.000000e+00 : f32
    %18 = vector.broadcast %cst_16 : f32 to vector<2x32xf32>
    %19 = arith.maximumf %17, %18 : vector<2x32xf32>
    %c0_17 = arith.constant 0 : index
    %c0_18 = arith.constant 0 : index
    %c0_19 = arith.constant 0 : index
    %20 = vector.load %arg6[%c0_17, %c0_18, %c0_19] : memref<1x32x4xf32, #tpu.memory_space<vmem>>, vector<1x32x4xf32>
    %21 = vector.shape_cast %20 : vector<1x32x4xf32> to vector<32x4xf32>
    %cst_20 = arith.constant dense<0.000000e+00> : vector<2x4xf32>
    %22 = tpu.matmul %19, %21, %cst_20 {dimension_numbers = #tpu.dot_dimension_numbers<[1], [0], [0], [1], [0, 0, 1, 1], [], []>} : vector<2x32xf32>, vector<32x4xf32>, vector<2x4xf32> -> vector<2x4xf32>
    %c0_21 = arith.constant 0 : index
    %c0_22 = arith.constant 0 : index
    %c0_23 = arith.constant 0 : index
    %23 = vector.load %arg7[%c0_21, %c0_22, %c0_23] : memref<1x1x4xf32, #tpu.memory_space<vmem>>, vector<1x1x4xf32>
    %24 = vector.shape_cast %23 : vector<1x1x4xf32> to vector<1x4xf32>
    %25 = vector.broadcast %24 : vector<1x4xf32> to vector<2x4xf32>
    %26 = arith.addf %22, %25 : vector<2x4xf32>
    %c0_24 = arith.constant 0 : index
    %c0_25 = arith.constant 0 : index
    %c0_26 = arith.constant 0 : index
    %27 = vector.load %arg8[%c0_24, %c0_25, %c0_26] : memref<1x2x4xf32, #tpu.memory_space<vmem>>, vector<1x2x4xf32>
    %28 = vector.shape_cast %27 : vector<1x2x4xf32> to vector<2x4xf32>
    %29 = vector.shape_cast %26 : vector<2x4xf32> to vector<1x2x4xf32>
    tpu.vector_store %arg8[%c0_24, %c0_25, %c0_26], %29 {strides = array<i32>} : memref<1x2x4xf32, #tpu.memory_space<vmem>>, vector<1x2x4xf32>,
    return
  }
  func.func @transform_0(%arg0: i32) -> (i32, i32, i32) {
    %c0_i32 = arith.constant 0 : i32
    %c0_i32_0 = arith.constant 0 : i32
    %c0_i32_1 = arith.constant 0 : i32
    return %arg0, %c0_i32, %c0_i32_0 : i32, i32, i32
  }
  func.func @transform_1(%arg0: i32) -> (i32, i32, i32) {
    %c0_i32 = arith.constant 0 : i32
    %c0_i32_0 = arith.constant 0 : i32
    %c0_i32_1 = arith.constant 0 : i32
    return %arg0, %c0_i32, %c0_i32_0 : i32, i32, i32
  }
  func.func @transform_2(%arg0: i32) -> (i32, i32, i32) {
    %c0_i32 = arith.constant 0 : i32
    %c0_i32_0 = arith.constant 0 : i32
    %c0_i32_1 = arith.constant 0 : i32
    return %arg0, %c0_i32, %c0_i32_0 : i32, i32, i32
  }
  func.func @transform_3(%arg0: i32) -> (i32, i32, i32) {
    %c0_i32 = arith.constant 0 : i32
    %c0_i32_0 = arith.constant 0 : i32
    %c0_i32_1 = arith.constant 0 : i32
    return %arg0, %c0_i32, %c0_i32_0 : i32, i32, i32
  }
  func.func @transform_4(%arg0: i32) -> (i32, i32, i32) {
    %c0_i32 = arith.constant 0 : i32
    %c0_i32_0 = arith.constant 0 : i32
    %c0_i32_1 = arith.constant 0 : i32
    return %arg0, %c0_i32, %c0_i32_0 : i32, i32, i32
  }
  func.func @transform_5(%arg0: i32) -> (i32, i32, i32) {
    %c0_i32 = arith.constant 0 : i32
    %c0_i32_0 = arith.constant 0 : i32
    %c0_i32_1 = arith.constant 0 : i32
    return %arg0, %c0_i32, %c0_i32_0 : i32, i32, i32
  }
  func.func @transform_6(%arg0: i32) -> (i32, i32, i32) {
    %c0_i32 = arith.constant 0 : i32
    %c0_i32_0 = arith.constant 0 : i32
    %c0_i32_1 = arith.constant 0 : i32
    return %arg0, %c0_i32, %c0_i32_0 : i32, i32, i32
  }
  func.func @transform_7(%arg0: i32) -> (i32, i32, i32) {
    %c0_i32 = arith.constant 0 : i32
    %c0_i32_0 = arith.constant 0 : i32
    %c0_i32_1 = arith.constant 0 : i32
    return %arg0, %c0_i32, %c0_i32_0 : i32, i32, i32
  }
}

module attributes {stable_mosaic.version = 11 : i64} {
  func.func @_mlp3_batched_kernel(%arg0: i32, %arg1: memref<1x2x32xf32, #tpu.memory_space<vmem>>, %arg2: memref<1x32x64xf32, #tpu.memory_space<vmem>>, %arg3: memref<1x1x64xf32, #tpu.memory_space<vmem>>, %arg4: memref<1x64x64xf32, #tpu.memory_space<vmem>>, %arg5: memref<1x1x64xf32, #tpu.memory_space<vmem>>, %arg6: memref<1x64x4xf32, #tpu.memory_space<vmem>>, %arg7: memref<1x1x4xf32, #tpu.memory_space<vmem>>, %arg8: memref<1x2x4xf32, #tpu.memory_space<vmem>>) attributes {dimension_semantics = [#tpu.dimension_semantics<parallel>], iteration_bounds = array<i64: 1>, scalar_prefetch = 0 : i64, scratch_operands = 0 : i64, tpu.core_type = #tpu.core_type<tc>, window_params = [{transform_indices = @transform_0, window_bounds = array<i64: 1, 2, 32>}, {transform_indices = @transform_1, window_bounds = array<i64: 1, 32, 64>}, {transform_indices = @transform_2, window_bounds = array<i64: 1, 1, 64>}, {transform_indices = @transform_3, window_bounds = array<i64: 1, 64, 64>}, {transform_indices = @transform_4, window_bounds = array<i64: 1, 1, 64>}, {transform_indices = @transform_5, window_bounds = array<i64: 1, 64, 4>}, {transform_indices = @transform_6, window_bounds = array<i64: 1, 1, 4>}, {transform_indices = @transform_7, window_bounds = array<i64: 1, 2, 4>}]} {
    %c0 = arith.constant 0 : index
    %c0_0 = arith.constant 0 : index
    %c0_1 = arith.constant 0 : index
    %0 = vector.load %arg1[%c0, %c0_0, %c0_1] : memref<1x2x32xf32, #tpu.memory_space<vmem>>, vector<1x2x32xf32>
    %1 = vector.shape_cast %0 : vector<1x2x32xf32> to vector<2x32xf32>
    %c0_2 = arith.constant 0 : index
    %c0_3 = arith.constant 0 : index
    %c0_4 = arith.constant 0 : index
    %2 = vector.load %arg2[%c0_2, %c0_3, %c0_4] : memref<1x32x64xf32, #tpu.memory_space<vmem>>, vector<1x32x64xf32>
    %3 = vector.shape_cast %2 : vector<1x32x64xf32> to vector<32x64xf32>
    %cst = arith.constant dense<0.000000e+00> : vector<2x64xf32>
    %4 = tpu.matmul %1, %3, %cst {dimension_numbers = #tpu.dot_dimension_numbers<[1], [0], [0], [1], [0, 0, 1, 1], [], []>} : vector<2x32xf32>, vector<32x64xf32>, vector<2x64xf32> -> vector<2x64xf32>
    %c0_5 = arith.constant 0 : index
    %c0_6 = arith.constant 0 : index
    %c0_7 = arith.constant 0 : index
    %5 = vector.load %arg3[%c0_5, %c0_6, %c0_7] : memref<1x1x64xf32, #tpu.memory_space<vmem>>, vector<1x1x64xf32>
    %6 = vector.shape_cast %5 : vector<1x1x64xf32> to vector<1x64xf32>
    %7 = vector.broadcast %6 : vector<1x64xf32> to vector<2x64xf32>
    %8 = arith.addf %4, %7 : vector<2x64xf32>
    %cst_8 = arith.constant 0.000000e+00 : f32
    %9 = vector.broadcast %cst_8 : f32 to vector<2x64xf32>
    %10 = arith.maximumf %8, %9 : vector<2x64xf32>
    %c0_9 = arith.constant 0 : index
    %c0_10 = arith.constant 0 : index
    %c0_11 = arith.constant 0 : index
    %11 = vector.load %arg4[%c0_9, %c0_10, %c0_11] : memref<1x64x64xf32, #tpu.memory_space<vmem>>, vector<1x64x64xf32>
    %12 = vector.shape_cast %11 : vector<1x64x64xf32> to vector<64x64xf32>
    %cst_12 = arith.constant dense<0.000000e+00> : vector<2x64xf32>
    %13 = tpu.matmul %10, %12, %cst_12 {dimension_numbers = #tpu.dot_dimension_numbers<[1], [0], [0], [1], [0, 0, 1, 1], [], []>} : vector<2x64xf32>, vector<64x64xf32>, vector<2x64xf32> -> vector<2x64xf32>
    %c0_13 = arith.constant 0 : index
    %c0_14 = arith.constant 0 : index
    %c0_15 = arith.constant 0 : index
    %14 = vector.load %arg5[%c0_13, %c0_14, %c0_15] : memref<1x1x64xf32, #tpu.memory_space<vmem>>, vector<1x1x64xf32>
    %15 = vector.shape_cast %14 : vector<1x1x64xf32> to vector<1x64xf32>
    %16 = vector.broadcast %15 : vector<1x64xf32> to vector<2x64xf32>
    %17 = arith.addf %13, %16 : vector<2x64xf32>
    %cst_16 = arith.constant 0.000000e+00 : f32
    %18 = vector.broadcast %cst_16 : f32 to vector<2x64xf32>
    %19 = arith.maximumf %17, %18 : vector<2x64xf32>
    %c0_17 = arith.constant 0 : index
    %c0_18 = arith.constant 0 : index
    %c0_19 = arith.constant 0 : index
    %20 = vector.load %arg6[%c0_17, %c0_18, %c0_19] : memref<1x64x4xf32, #tpu.memory_space<vmem>>, vector<1x64x4xf32>
    %21 = vector.shape_cast %20 : vector<1x64x4xf32> to vector<64x4xf32>
    %cst_20 = arith.constant dense<0.000000e+00> : vector<2x4xf32>
    %22 = tpu.matmul %19, %21, %cst_20 {dimension_numbers = #tpu.dot_dimension_numbers<[1], [0], [0], [1], [0, 0, 1, 1], [], []>} : vector<2x64xf32>, vector<64x4xf32>, vector<2x4xf32> -> vector<2x4xf32>
    %c0_21 = arith.constant 0 : index
    %c0_22 = arith.constant 0 : index
    %c0_23 = arith.constant 0 : index
    %23 = vector.load %arg7[%c0_21, %c0_22, %c0_23] : memref<1x1x4xf32, #tpu.memory_space<vmem>>, vector<1x1x4xf32>
    %24 = vector.shape_cast %23 : vector<1x1x4xf32> to vector<1x4xf32>
    %25 = vector.broadcast %24 : vector<1x4xf32> to vector<2x4xf32>
    %26 = arith.addf %22, %25 : vector<2x4xf32>
    %c0_24 = arith.constant 0 : index
    %c0_25 = arith.constant 0 : index
    %c0_26 = arith.constant 0 : index
    %27 = vector.load %arg8[%c0_24, %c0_25, %c0_26] : memref<1x2x4xf32, #tpu.memory_space<vmem>>, vector<1x2x4xf32>
    %28 = vector.shape_cast %27 : vector<1x2x4xf32> to vector<2x4xf32>
    %29 = vector.shape_cast %26 : vector<2x4xf32> to vector<1x2x4xf32>
    tpu.vector_store %arg8[%c0_24, %c0_25, %c0_26], %29 {strides = array<i32>} : memref<1x2x4xf32, #tpu.memory_space<vmem>>, vector<1x2x4xf32>,
    return
  }
  func.func @transform_0(%arg0: i32) -> (i32, i32, i32) {
    %c0_i32 = arith.constant 0 : i32
    %c0_i32_0 = arith.constant 0 : i32
    %c0_i32_1 = arith.constant 0 : i32
    return %arg0, %c0_i32, %c0_i32_0 : i32, i32, i32
  }
  func.func @transform_1(%arg0: i32) -> (i32, i32, i32) {
    %c0_i32 = arith.constant 0 : i32
    %c0_i32_0 = arith.constant 0 : i32
    %c0_i32_1 = arith.constant 0 : i32
    return %arg0, %c0_i32, %c0_i32_0 : i32, i32, i32
  }
  func.func @transform_2(%arg0: i32) -> (i32, i32, i32) {
    %c0_i32 = arith.constant 0 : i32
    %c0_i32_0 = arith.constant 0 : i32
    %c0_i32_1 = arith.constant 0 : i32
    return %arg0, %c0_i32, %c0_i32_0 : i32, i32, i32
  }
  func.func @transform_3(%arg0: i32) -> (i32, i32, i32) {
    %c0_i32 = arith.constant 0 : i32
    %c0_i32_0 = arith.constant 0 : i32
    %c0_i32_1 = arith.constant 0 : i32
    return %arg0, %c0_i32, %c0_i32_0 : i32, i32, i32
  }
  func.func @transform_4(%arg0: i32) -> (i32, i32, i32) {
    %c0_i32 = arith.constant 0 : i32
    %c0_i32_0 = arith.constant 0 : i32
    %c0_i32_1 = arith.constant 0 : i32
    return %arg0, %c0_i32, %c0_i32_0 : i32, i32, i32
  }
  func.func @transform_5(%arg0: i32) -> (i32, i32, i32) {
    %c0_i32 = arith.constant 0 : i32
    %c0_i32_0 = arith.constant 0 : i32
    %c0_i32_1 = arith.constant 0 : i32
    return %arg0, %c0_i32, %c0_i32_0 : i32, i32, i32
  }
  func.func @transform_6(%arg0: i32) -> (i32, i32, i32) {
    %c0_i32 = arith.constant 0 : i32
    %c0_i32_0 = arith.constant 0 : i32
    %c0_i32_1 = arith.constant 0 : i32
    return %arg0, %c0_i32, %c0_i32_0 : i32, i32, i32
  }
  func.func @transform_7(%arg0: i32) -> (i32, i32, i32) {
    %c0_i32 = arith.constant 0 : i32
    %c0_i32_0 = arith.constant 0 : i32
    %c0_i32_1 = arith.constant 0 : i32
    return %arg0, %c0_i32, %c0_i32_0 : i32, i32, i32
  }
}

module attributes {stable_mosaic.version = 11 : i64} {
  func.func @_fused_upscale_mask_kernel(%arg0: i32, %arg1: i32, %arg2: memref<1x64x32xf32, #tpu.memory_space<vmem>>, %arg3: memref<32x32xf32, #tpu.memory_space<vmem>>, %arg4: memref<1x32xf32, #tpu.memory_space<vmem>>, %arg5: memref<1x8xf32, #tpu.memory_space<vmem>>, %arg6: memref<1x8xf32, #tpu.memory_space<vmem>>, %arg7: memref<8x16xf32, #tpu.memory_space<vmem>>, %arg8: memref<1x16xf32, #tpu.memory_space<vmem>>, %arg9: memref<1x16x16xf32, #tpu.memory_space<vmem>>, %arg10: memref<1x64x64xf32, #tpu.memory_space<vmem>>) attributes {dimension_semantics = [#tpu.dimension_semantics<parallel>, #tpu.dimension_semantics<parallel>], iteration_bounds = array<i64: 2, 1>, scalar_prefetch = 0 : i64, scratch_operands = 0 : i64, tpu.core_type = #tpu.core_type<tc>, window_params = [{transform_indices = @transform_0, window_bounds = array<i64: 1, 64, 32>}, {pipeline_mode = #tpu.pipeline_mode<synchronous>, transform_indices = @transform_1, window_bounds = array<i64: 32, 32>}, {pipeline_mode = #tpu.pipeline_mode<synchronous>, transform_indices = @transform_2, window_bounds = array<i64: 1, 32>}, {pipeline_mode = #tpu.pipeline_mode<synchronous>, transform_indices = @transform_3, window_bounds = array<i64: 1, 8>}, {pipeline_mode = #tpu.pipeline_mode<synchronous>, transform_indices = @transform_4, window_bounds = array<i64: 1, 8>}, {pipeline_mode = #tpu.pipeline_mode<synchronous>, transform_indices = @transform_5, window_bounds = array<i64: 8, 16>}, {pipeline_mode = #tpu.pipeline_mode<synchronous>, transform_indices = @transform_6, window_bounds = array<i64: 1, 16>}, {transform_indices = @transform_7, window_bounds = array<i64: 1, 16, 16>}, {transform_indices = @transform_8, window_bounds = array<i64: 1, 64, 64>}]} {
    %c0 = arith.constant 0 : index
    %c0_0 = arith.constant 0 : index
    %c0_1 = arith.constant 0 : index
    %0 = vector.load %arg2[%c0, %c0_0, %c0_1] : memref<1x64x32xf32, #tpu.memory_space<vmem>>, vector<1x64x32xf32>
    %1 = vector.shape_cast %0 : vector<1x64x32xf32> to vector<64x32xf32>
    %c0_2 = arith.constant 0 : index
    %c0_3 = arith.constant 0 : index
    %2 = vector.load %arg3[%c0_2, %c0_3] : memref<32x32xf32, #tpu.memory_space<vmem>>, vector<32x32xf32>
    %cst = arith.constant dense<0.000000e+00> : vector<64x32xf32>
    %3 = tpu.matmul %1, %2, %cst {dimension_numbers = #tpu.dot_dimension_numbers<[1], [0], [0], [1], [0, 0, 1, 1], [], []>} : vector<64x32xf32>, vector<32x32xf32>, vector<64x32xf32> -> vector<64x32xf32>
    %c0_4 = arith.constant 0 : index
    %c0_5 = arith.constant 0 : index
    %4 = vector.load %arg4[%c0_4, %c0_5] : memref<1x32xf32, #tpu.memory_space<vmem>>, vector<1x32xf32>
    %5 = vector.broadcast %4 : vector<1x32xf32> to vector<64x32xf32>
    %6 = arith.addf %3, %5 : vector<64x32xf32>
    %c0_6 = arith.constant 0 : index
    %c0_7 = arith.constant 0 : index
    %7 = vector.load %arg5[%c0_6, %c0_7] : memref<1x8xf32, #tpu.memory_space<vmem>>, vector<1x8xf32>
    %c0_8 = arith.constant 0 : index
    %c0_9 = arith.constant 0 : index
    %8 = vector.load %arg6[%c0_8, %c0_9] : memref<1x8xf32, #tpu.memory_space<vmem>>, vector<1x8xf32>
    %c0_10 = arith.constant 0 : index
    %c0_11 = arith.constant 0 : index
    %9 = vector.load %arg7[%c0_10, %c0_11] : memref<8x16xf32, #tpu.memory_space<vmem>>, vector<8x16xf32>
    %c0_12 = arith.constant 0 : index
    %c0_13 = arith.constant 0 : index
    %10 = vector.load %arg8[%c0_12, %c0_13] : memref<1x16xf32, #tpu.memory_space<vmem>>, vector<1x16xf32>
    %c0_14 = arith.constant 0 : index
    %c0_15 = arith.constant 0 : index
    %c0_16 = arith.constant 0 : index
    %11 = vector.load %arg9[%c0_14, %c0_15, %c0_16] : memref<1x16x16xf32, #tpu.memory_space<vmem>>, vector<1x16x16xf32>
    %12 = vector.shape_cast %11 : vector<1x16x16xf32> to vector<16x16xf32>
    %13 = vector.extract_strided_slice %6 {offsets = [0, 0], sizes = [64, 8], strides = [1, 1]} : vector<64x32xf32> to vector<64x8xf32>
    %cst_17 = arith.constant dense<0.000000e+00> : vector<64xf32>
    %14 = vector.multi_reduction <add>, %13, %cst_17 [1] : vector<64x8xf32> to vector<64xf32>
    %15 = vector.shape_cast %14 : vector<64xf32> to vector<64x1xf32>
    %cst_18 = arith.constant 8.000000e+00 : f32
    %16 = vector.broadcast %cst_18 : f32 to vector<64x1xf32>
    %17 = arith.divf %15, %16 : vector<64x1xf32>
    %18 = vector.broadcast %17 : vector<64x1xf32> to vector<64x8xf32>
    %19 = arith.subf %13, %18 : vector<64x8xf32>
    %20 = arith.mulf %19, %19 : vector<64x8xf32>
    %cst_19 = arith.constant dense<0.000000e+00> : vector<64xf32>
    %21 = vector.multi_reduction <add>, %20, %cst_19 [1] : vector<64x8xf32> to vector<64xf32>
    %22 = vector.shape_cast %21 : vector<64xf32> to vector<64x1xf32>
    %cst_20 = arith.constant 8.000000e+00 : f32
    %23 = vector.broadcast %cst_20 : f32 to vector<64x1xf32>
    %24 = arith.divf %22, %23 : vector<64x1xf32>
    %25 = vector.broadcast %17 : vector<64x1xf32> to vector<64x8xf32>
    %26 = arith.subf %13, %25 : vector<64x8xf32>
    %cst_21 = arith.constant 9.99999997E-7 : f32
    %27 = vector.broadcast %cst_21 : f32 to vector<64x1xf32>
    %28 = arith.addf %24, %27 : vector<64x1xf32>
    %29 = math.rsqrt %28 : vector<64x1xf32>
    %30 = vector.broadcast %29 : vector<64x1xf32> to vector<64x8xf32>
    %31 = arith.mulf %26, %30 : vector<64x8xf32>
    %32 = vector.broadcast %7 : vector<1x8xf32> to vector<64x8xf32>
    %33 = arith.mulf %31, %32 : vector<64x8xf32>
    %34 = vector.broadcast %8 : vector<1x8xf32> to vector<64x8xf32>
    %35 = arith.addf %33, %34 : vector<64x8xf32>
    %cst_22 = arith.constant 5.000000e-01 : f32
    %36 = vector.broadcast %cst_22 : f32 to vector<64x8xf32>
    %37 = arith.mulf %36, %35 : vector<64x8xf32>
    %cst_23 = arith.constant 0.707106769 : f32
    %38 = vector.broadcast %cst_23 : f32 to vector<64x8xf32>
    %39 = arith.mulf %35, %38 : vector<64x8xf32>
    %cst_24 = arith.constant 0.000000e+00 : f32
    %40 = vector.broadcast %cst_24 : f32 to vector<64x8xf32>
    %41 = arith.cmpf oge, %39, %40 : vector<64x8xf32>
    %cst_25 = arith.constant 1.000000e+00 : f32
    %cst_26 = arith.constant -1.000000e+00 : f32
    %42 = vector.broadcast %cst_25 : f32 to vector<64x8xf32>
    %43 = vector.broadcast %cst_26 : f32 to vector<64x8xf32>
    %44 = arith.select %41, %42, %43 : vector<64x8xi1>, vector<64x8xf32>
    %45 = math.absf %39 : vector<64x8xf32>
    %cst_27 = arith.constant 0.327591091 : f32
    %46 = vector.broadcast %cst_27 : f32 to vector<64x8xf32>
    %47 = arith.mulf %46, %45 : vector<64x8xf32>
    %cst_28 = arith.constant 1.000000e+00 : f32
    %48 = vector.broadcast %cst_28 : f32 to vector<64x8xf32>
    %49 = arith.addf %48, %47 : vector<64x8xf32>
    %cst_29 = arith.constant 1.000000e+00 : f32
    %50 = vector.broadcast %cst_29 : f32 to vector<64x8xf32>
    %51 = arith.divf %50, %49 : vector<64x8xf32>
    %cst_30 = arith.constant 1.06140542 : f32
    %52 = vector.broadcast %cst_30 : f32 to vector<64x8xf32>
    %53 = arith.mulf %52, %51 : vector<64x8xf32>
    %cst_31 = arith.constant -1.45315206 : f32
    %54 = vector.broadcast %cst_31 : f32 to vector<64x8xf32>
    %55 = arith.addf %53, %54 : vector<64x8xf32>
    %56 = arith.mulf %55, %51 : vector<64x8xf32>
    %cst_32 = arith.constant 1.42141378 : f32
    %57 = vector.broadcast %cst_32 : f32 to vector<64x8xf32>
    %58 = arith.addf %56, %57 : vector<64x8xf32>
    %59 = arith.mulf %58, %51 : vector<64x8xf32>
    %cst_33 = arith.constant -0.284496725 : f32
    %60 = vector.broadcast %cst_33 : f32 to vector<64x8xf32>
    %61 = arith.addf %59, %60 : vector<64x8xf32>
    %62 = arith.mulf %61, %51 : vector<64x8xf32>
    %cst_34 = arith.constant 0.254829586 : f32
    %63 = vector.broadcast %cst_34 : f32 to vector<64x8xf32>
    %64 = arith.addf %62, %63 : vector<64x8xf32>
    %65 = arith.mulf %64, %51 : vector<64x8xf32>
    %cst_35 = arith.constant 0.000000e+00 : f32
    %66 = vector.broadcast %cst_35 : f32 to vector<64x8xf32>
    %67 = arith.subf %66, %45 : vector<64x8xf32>
    %68 = arith.mulf %67, %45 : vector<64x8xf32>
    %69 = math.exp %68 : vector<64x8xf32>
    %70 = arith.mulf %65, %69 : vector<64x8xf32>
    %cst_36 = arith.constant 1.000000e+00 : f32
    %71 = vector.broadcast %cst_36 : f32 to vector<64x8xf32>
    %72 = arith.subf %71, %70 : vector<64x8xf32>
    %73 = arith.mulf %44, %72 : vector<64x8xf32>
    %cst_37 = arith.constant 1.000000e+00 : f32
    %74 = vector.broadcast %cst_37 : f32 to vector<64x8xf32>
    %75 = arith.addf %74, %73 : vector<64x8xf32>
    %76 = arith.mulf %37, %75 : vector<64x8xf32>
    %cst_38 = arith.constant dense<0.000000e+00> : vector<64x16xf32>
    %77 = tpu.matmul %76, %9, %cst_38 {dimension_numbers = #tpu.dot_dimension_numbers<[1], [0], [0], [1], [0, 0, 1, 1], [], []>} : vector<64x8xf32>, vector<8x16xf32>, vector<64x16xf32> -> vector<64x16xf32>
    %78 = vector.broadcast %10 : vector<1x16xf32> to vector<64x16xf32>
    %79 = arith.addf %77, %78 : vector<64x16xf32>
    %cst_39 = arith.constant 5.000000e-01 : f32
    %80 = vector.broadcast %cst_39 : f32 to vector<64x16xf32>
    %81 = arith.mulf %80, %79 : vector<64x16xf32>
    %cst_40 = arith.constant 0.707106769 : f32
    %82 = vector.broadcast %cst_40 : f32 to vector<64x16xf32>
    %83 = arith.mulf %79, %82 : vector<64x16xf32>
    %cst_41 = arith.constant 0.000000e+00 : f32
    %84 = vector.broadcast %cst_41 : f32 to vector<64x16xf32>
    %85 = arith.cmpf oge, %83, %84 : vector<64x16xf32>
    %cst_42 = arith.constant 1.000000e+00 : f32
    %cst_43 = arith.constant -1.000000e+00 : f32
    %86 = vector.broadcast %cst_42 : f32 to vector<64x16xf32>
    %87 = vector.broadcast %cst_43 : f32 to vector<64x16xf32>
    %88 = arith.select %85, %86, %87 : vector<64x16xi1>, vector<64x16xf32>
    %89 = math.absf %83 : vector<64x16xf32>
    %cst_44 = arith.constant 0.327591091 : f32
    %90 = vector.broadcast %cst_44 : f32 to vector<64x16xf32>
    %91 = arith.mulf %90, %89 : vector<64x16xf32>
    %cst_45 = arith.constant 1.000000e+00 : f32
    %92 = vector.broadcast %cst_45 : f32 to vector<64x16xf32>
    %93 = arith.addf %92, %91 : vector<64x16xf32>
    %cst_46 = arith.constant 1.000000e+00 : f32
    %94 = vector.broadcast %cst_46 : f32 to vector<64x16xf32>
    %95 = arith.divf %94, %93 : vector<64x16xf32>
    %cst_47 = arith.constant 1.06140542 : f32
    %96 = vector.broadcast %cst_47 : f32 to vector<64x16xf32>
    %97 = arith.mulf %96, %95 : vector<64x16xf32>
    %cst_48 = arith.constant -1.45315206 : f32
    %98 = vector.broadcast %cst_48 : f32 to vector<64x16xf32>
    %99 = arith.addf %97, %98 : vector<64x16xf32>
    %100 = arith.mulf %99, %95 : vector<64x16xf32>
    %cst_49 = arith.constant 1.42141378 : f32
    %101 = vector.broadcast %cst_49 : f32 to vector<64x16xf32>
    %102 = arith.addf %100, %101 : vector<64x16xf32>
    %103 = arith.mulf %102, %95 : vector<64x16xf32>
    %cst_50 = arith.constant -0.284496725 : f32
    %104 = vector.broadcast %cst_50 : f32 to vector<64x16xf32>
    %105 = arith.addf %103, %104 : vector<64x16xf32>
    %106 = arith.mulf %105, %95 : vector<64x16xf32>
    %cst_51 = arith.constant 0.254829586 : f32
    %107 = vector.broadcast %cst_51 : f32 to vector<64x16xf32>
    %108 = arith.addf %106, %107 : vector<64x16xf32>
    %109 = arith.mulf %108, %95 : vector<64x16xf32>
    %cst_52 = arith.constant 0.000000e+00 : f32
    %110 = vector.broadcast %cst_52 : f32 to vector<64x16xf32>
    %111 = arith.subf %110, %89 : vector<64x16xf32>
    %112 = arith.mulf %111, %89 : vector<64x16xf32>
    %113 = math.exp %112 : vector<64x16xf32>
    %114 = arith.mulf %109, %113 : vector<64x16xf32>
    %cst_53 = arith.constant 1.000000e+00 : f32
    %115 = vector.broadcast %cst_53 : f32 to vector<64x16xf32>
    %116 = arith.subf %115, %114 : vector<64x16xf32>
    %117 = arith.mulf %88, %116 : vector<64x16xf32>
    %cst_54 = arith.constant 1.000000e+00 : f32
    %118 = vector.broadcast %cst_54 : f32 to vector<64x16xf32>
    %119 = arith.addf %118, %117 : vector<64x16xf32>
    %120 = arith.mulf %81, %119 : vector<64x16xf32>
    %cst_55 = arith.constant dense<0.000000e+00> : vector<64x16xf32>
    %121 = tpu.matmul %120, %12, %cst_55 {dimension_numbers = #tpu.dot_dimension_numbers<[1], [0], [0], [1], [0, 0, 1, 1], [], []>} : vector<64x16xf32>, vector<16x16xf32>, vector<64x16xf32> -> vector<64x16xf32>
    %c0_56 = arith.constant 0 : index
    %c0_57 = arith.constant 0 : index
    %c0_58 = arith.constant 0 : index
    %122 = vector.load %arg10[%c0_56, %c0_57, %c0_58] : memref<1x64x64xf32, #tpu.memory_space<vmem>>, vector<1x64x16xf32>
    %123 = vector.shape_cast %122 : vector<1x64x16xf32> to vector<64x16xf32>
    %124 = vector.shape_cast %121 : vector<64x16xf32> to vector<1x64x16xf32>
    tpu.vector_store %arg10[%c0_56, %c0_57, %c0_58], %124 {strides = array<i32>} : memref<1x64x64xf32, #tpu.memory_space<vmem>>, vector<1x64x16xf32>,
    %125 = vector.extract_strided_slice %6 {offsets = [0, 8], sizes = [64, 8], strides = [1, 1]} : vector<64x32xf32> to vector<64x8xf32>
    %cst_59 = arith.constant dense<0.000000e+00> : vector<64xf32>
    %126 = vector.multi_reduction <add>, %125, %cst_59 [1] : vector<64x8xf32> to vector<64xf32>
    %127 = vector.shape_cast %126 : vector<64xf32> to vector<64x1xf32>
    %cst_60 = arith.constant 8.000000e+00 : f32
    %128 = vector.broadcast %cst_60 : f32 to vector<64x1xf32>
    %129 = arith.divf %127, %128 : vector<64x1xf32>
    %130 = vector.broadcast %129 : vector<64x1xf32> to vector<64x8xf32>
    %131 = arith.subf %125, %130 : vector<64x8xf32>
    %132 = arith.mulf %131, %131 : vector<64x8xf32>
    %cst_61 = arith.constant dense<0.000000e+00> : vector<64xf32>
    %133 = vector.multi_reduction <add>, %132, %cst_61 [1] : vector<64x8xf32> to vector<64xf32>
    %134 = vector.shape_cast %133 : vector<64xf32> to vector<64x1xf32>
    %cst_62 = arith.constant 8.000000e+00 : f32
    %135 = vector.broadcast %cst_62 : f32 to vector<64x1xf32>
    %136 = arith.divf %134, %135 : vector<64x1xf32>
    %137 = vector.broadcast %129 : vector<64x1xf32> to vector<64x8xf32>
    %138 = arith.subf %125, %137 : vector<64x8xf32>
    %cst_63 = arith.constant 9.99999997E-7 : f32
    %139 = vector.broadcast %cst_63 : f32 to vector<64x1xf32>
    %140 = arith.addf %136, %139 : vector<64x1xf32>
    %141 = math.rsqrt %140 : vector<64x1xf32>
    %142 = vector.broadcast %141 : vector<64x1xf32> to vector<64x8xf32>
    %143 = arith.mulf %138, %142 : vector<64x8xf32>
    %144 = vector.broadcast %7 : vector<1x8xf32> to vector<64x8xf32>
    %145 = arith.mulf %143, %144 : vector<64x8xf32>
    %146 = vector.broadcast %8 : vector<1x8xf32> to vector<64x8xf32>
    %147 = arith.addf %145, %146 : vector<64x8xf32>
    %cst_64 = arith.constant 5.000000e-01 : f32
    %148 = vector.broadcast %cst_64 : f32 to vector<64x8xf32>
    %149 = arith.mulf %148, %147 : vector<64x8xf32>
    %cst_65 = arith.constant 0.707106769 : f32
    %150 = vector.broadcast %cst_65 : f32 to vector<64x8xf32>
    %151 = arith.mulf %147, %150 : vector<64x8xf32>
    %cst_66 = arith.constant 0.000000e+00 : f32
    %152 = vector.broadcast %cst_66 : f32 to vector<64x8xf32>
    %153 = arith.cmpf oge, %151, %152 : vector<64x8xf32>
    %cst_67 = arith.constant 1.000000e+00 : f32
    %cst_68 = arith.constant -1.000000e+00 : f32
    %154 = vector.broadcast %cst_67 : f32 to vector<64x8xf32>
    %155 = vector.broadcast %cst_68 : f32 to vector<64x8xf32>
    %156 = arith.select %153, %154, %155 : vector<64x8xi1>, vector<64x8xf32>
    %157 = math.absf %151 : vector<64x8xf32>
    %cst_69 = arith.constant 0.327591091 : f32
    %158 = vector.broadcast %cst_69 : f32 to vector<64x8xf32>
    %159 = arith.mulf %158, %157 : vector<64x8xf32>
    %cst_70 = arith.constant 1.000000e+00 : f32
    %160 = vector.broadcast %cst_70 : f32 to vector<64x8xf32>
    %161 = arith.addf %160, %159 : vector<64x8xf32>
    %cst_71 = arith.constant 1.000000e+00 : f32
    %162 = vector.broadcast %cst_71 : f32 to vector<64x8xf32>
    %163 = arith.divf %162, %161 : vector<64x8xf32>
    %cst_72 = arith.constant 1.06140542 : f32
    %164 = vector.broadcast %cst_72 : f32 to vector<64x8xf32>
    %165 = arith.mulf %164, %163 : vector<64x8xf32>
    %cst_73 = arith.constant -1.45315206 : f32
    %166 = vector.broadcast %cst_73 : f32 to vector<64x8xf32>
    %167 = arith.addf %165, %166 : vector<64x8xf32>
    %168 = arith.mulf %167, %163 : vector<64x8xf32>
    %cst_74 = arith.constant 1.42141378 : f32
    %169 = vector.broadcast %cst_74 : f32 to vector<64x8xf32>
    %170 = arith.addf %168, %169 : vector<64x8xf32>
    %171 = arith.mulf %170, %163 : vector<64x8xf32>
    %cst_75 = arith.constant -0.284496725 : f32
    %172 = vector.broadcast %cst_75 : f32 to vector<64x8xf32>
    %173 = arith.addf %171, %172 : vector<64x8xf32>
    %174 = arith.mulf %173, %163 : vector<64x8xf32>
    %cst_76 = arith.constant 0.254829586 : f32
    %175 = vector.broadcast %cst_76 : f32 to vector<64x8xf32>
    %176 = arith.addf %174, %175 : vector<64x8xf32>
    %177 = arith.mulf %176, %163 : vector<64x8xf32>
    %cst_77 = arith.constant 0.000000e+00 : f32
    %178 = vector.broadcast %cst_77 : f32 to vector<64x8xf32>
    %179 = arith.subf %178, %157 : vector<64x8xf32>
    %180 = arith.mulf %179, %157 : vector<64x8xf32>
    %181 = math.exp %180 : vector<64x8xf32>
    %182 = arith.mulf %177, %181 : vector<64x8xf32>
    %cst_78 = arith.constant 1.000000e+00 : f32
    %183 = vector.broadcast %cst_78 : f32 to vector<64x8xf32>
    %184 = arith.subf %183, %182 : vector<64x8xf32>
    %185 = arith.mulf %156, %184 : vector<64x8xf32>
    %cst_79 = arith.constant 1.000000e+00 : f32
    %186 = vector.broadcast %cst_79 : f32 to vector<64x8xf32>
    %187 = arith.addf %186, %185 : vector<64x8xf32>
    %188 = arith.mulf %149, %187 : vector<64x8xf32>
    %cst_80 = arith.constant dense<0.000000e+00> : vector<64x16xf32>
    %189 = tpu.matmul %188, %9, %cst_80 {dimension_numbers = #tpu.dot_dimension_numbers<[1], [0], [0], [1], [0, 0, 1, 1], [], []>} : vector<64x8xf32>, vector<8x16xf32>, vector<64x16xf32> -> vector<64x16xf32>
    %190 = vector.broadcast %10 : vector<1x16xf32> to vector<64x16xf32>
    %191 = arith.addf %189, %190 : vector<64x16xf32>
    %cst_81 = arith.constant 5.000000e-01 : f32
    %192 = vector.broadcast %cst_81 : f32 to vector<64x16xf32>
    %193 = arith.mulf %192, %191 : vector<64x16xf32>
    %cst_82 = arith.constant 0.707106769 : f32
    %194 = vector.broadcast %cst_82 : f32 to vector<64x16xf32>
    %195 = arith.mulf %191, %194 : vector<64x16xf32>
    %cst_83 = arith.constant 0.000000e+00 : f32
    %196 = vector.broadcast %cst_83 : f32 to vector<64x16xf32>
    %197 = arith.cmpf oge, %195, %196 : vector<64x16xf32>
    %cst_84 = arith.constant 1.000000e+00 : f32
    %cst_85 = arith.constant -1.000000e+00 : f32
    %198 = vector.broadcast %cst_84 : f32 to vector<64x16xf32>
    %199 = vector.broadcast %cst_85 : f32 to vector<64x16xf32>
    %200 = arith.select %197, %198, %199 : vector<64x16xi1>, vector<64x16xf32>
    %201 = math.absf %195 : vector<64x16xf32>
    %cst_86 = arith.constant 0.327591091 : f32
    %202 = vector.broadcast %cst_86 : f32 to vector<64x16xf32>
    %203 = arith.mulf %202, %201 : vector<64x16xf32>
    %cst_87 = arith.constant 1.000000e+00 : f32
    %204 = vector.broadcast %cst_87 : f32 to vector<64x16xf32>
    %205 = arith.addf %204, %203 : vector<64x16xf32>
    %cst_88 = arith.constant 1.000000e+00 : f32
    %206 = vector.broadcast %cst_88 : f32 to vector<64x16xf32>
    %207 = arith.divf %206, %205 : vector<64x16xf32>
    %cst_89 = arith.constant 1.06140542 : f32
    %208 = vector.broadcast %cst_89 : f32 to vector<64x16xf32>
    %209 = arith.mulf %208, %207 : vector<64x16xf32>
    %cst_90 = arith.constant -1.45315206 : f32
    %210 = vector.broadcast %cst_90 : f32 to vector<64x16xf32>
    %211 = arith.addf %209, %210 : vector<64x16xf32>
    %212 = arith.mulf %211, %207 : vector<64x16xf32>
    %cst_91 = arith.constant 1.42141378 : f32
    %213 = vector.broadcast %cst_91 : f32 to vector<64x16xf32>
    %214 = arith.addf %212, %213 : vector<64x16xf32>
    %215 = arith.mulf %214, %207 : vector<64x16xf32>
    %cst_92 = arith.constant -0.284496725 : f32
    %216 = vector.broadcast %cst_92 : f32 to vector<64x16xf32>
    %217 = arith.addf %215, %216 : vector<64x16xf32>
    %218 = arith.mulf %217, %207 : vector<64x16xf32>
    %cst_93 = arith.constant 0.254829586 : f32
    %219 = vector.broadcast %cst_93 : f32 to vector<64x16xf32>
    %220 = arith.addf %218, %219 : vector<64x16xf32>
    %221 = arith.mulf %220, %207 : vector<64x16xf32>
    %cst_94 = arith.constant 0.000000e+00 : f32
    %222 = vector.broadcast %cst_94 : f32 to vector<64x16xf32>
    %223 = arith.subf %222, %201 : vector<64x16xf32>
    %224 = arith.mulf %223, %201 : vector<64x16xf32>
    %225 = math.exp %224 : vector<64x16xf32>
    %226 = arith.mulf %221, %225 : vector<64x16xf32>
    %cst_95 = arith.constant 1.000000e+00 : f32
    %227 = vector.broadcast %cst_95 : f32 to vector<64x16xf32>
    %228 = arith.subf %227, %226 : vector<64x16xf32>
    %229 = arith.mulf %200, %228 : vector<64x16xf32>
    %cst_96 = arith.constant 1.000000e+00 : f32
    %230 = vector.broadcast %cst_96 : f32 to vector<64x16xf32>
    %231 = arith.addf %230, %229 : vector<64x16xf32>
    %232 = arith.mulf %193, %231 : vector<64x16xf32>
    %cst_97 = arith.constant dense<0.000000e+00> : vector<64x16xf32>
    %233 = tpu.matmul %232, %12, %cst_97 {dimension_numbers = #tpu.dot_dimension_numbers<[1], [0], [0], [1], [0, 0, 1, 1], [], []>} : vector<64x16xf32>, vector<16x16xf32>, vector<64x16xf32> -> vector<64x16xf32>
    %c0_98 = arith.constant 0 : index
    %c0_99 = arith.constant 0 : index
    %c16 = arith.constant 16 : index
    %234 = vector.load %arg10[%c0_98, %c0_99, %c16] : memref<1x64x64xf32, #tpu.memory_space<vmem>>, vector<1x64x16xf32>
    %235 = vector.shape_cast %234 : vector<1x64x16xf32> to vector<64x16xf32>
    %236 = vector.shape_cast %233 : vector<64x16xf32> to vector<1x64x16xf32>
    tpu.vector_store %arg10[%c0_98, %c0_99, %c16], %236 {strides = array<i32>} : memref<1x64x64xf32, #tpu.memory_space<vmem>>, vector<1x64x16xf32>,
    %237 = vector.extract_strided_slice %6 {offsets = [0, 16], sizes = [64, 8], strides = [1, 1]} : vector<64x32xf32> to vector<64x8xf32>
    %cst_100 = arith.constant dense<0.000000e+00> : vector<64xf32>
    %238 = vector.multi_reduction <add>, %237, %cst_100 [1] : vector<64x8xf32> to vector<64xf32>
    %239 = vector.shape_cast %238 : vector<64xf32> to vector<64x1xf32>
    %cst_101 = arith.constant 8.000000e+00 : f32
    %240 = vector.broadcast %cst_101 : f32 to vector<64x1xf32>
    %241 = arith.divf %239, %240 : vector<64x1xf32>
    %242 = vector.broadcast %241 : vector<64x1xf32> to vector<64x8xf32>
    %243 = arith.subf %237, %242 : vector<64x8xf32>
    %244 = arith.mulf %243, %243 : vector<64x8xf32>
    %cst_102 = arith.constant dense<0.000000e+00> : vector<64xf32>
    %245 = vector.multi_reduction <add>, %244, %cst_102 [1] : vector<64x8xf32> to vector<64xf32>
    %246 = vector.shape_cast %245 : vector<64xf32> to vector<64x1xf32>
    %cst_103 = arith.constant 8.000000e+00 : f32
    %247 = vector.broadcast %cst_103 : f32 to vector<64x1xf32>
    %248 = arith.divf %246, %247 : vector<64x1xf32>
    %249 = vector.broadcast %241 : vector<64x1xf32> to vector<64x8xf32>
    %250 = arith.subf %237, %249 : vector<64x8xf32>
    %cst_104 = arith.constant 9.99999997E-7 : f32
    %251 = vector.broadcast %cst_104 : f32 to vector<64x1xf32>
    %252 = arith.addf %248, %251 : vector<64x1xf32>
    %253 = math.rsqrt %252 : vector<64x1xf32>
    %254 = vector.broadcast %253 : vector<64x1xf32> to vector<64x8xf32>
    %255 = arith.mulf %250, %254 : vector<64x8xf32>
    %256 = vector.broadcast %7 : vector<1x8xf32> to vector<64x8xf32>
    %257 = arith.mulf %255, %256 : vector<64x8xf32>
    %258 = vector.broadcast %8 : vector<1x8xf32> to vector<64x8xf32>
    %259 = arith.addf %257, %258 : vector<64x8xf32>
    %cst_105 = arith.constant 5.000000e-01 : f32
    %260 = vector.broadcast %cst_105 : f32 to vector<64x8xf32>
    %261 = arith.mulf %260, %259 : vector<64x8xf32>
    %cst_106 = arith.constant 0.707106769 : f32
    %262 = vector.broadcast %cst_106 : f32 to vector<64x8xf32>
    %263 = arith.mulf %259, %262 : vector<64x8xf32>
    %cst_107 = arith.constant 0.000000e+00 : f32
    %264 = vector.broadcast %cst_107 : f32 to vector<64x8xf32>
    %265 = arith.cmpf oge, %263, %264 : vector<64x8xf32>
    %cst_108 = arith.constant 1.000000e+00 : f32
    %cst_109 = arith.constant -1.000000e+00 : f32
    %266 = vector.broadcast %cst_108 : f32 to vector<64x8xf32>
    %267 = vector.broadcast %cst_109 : f32 to vector<64x8xf32>
    %268 = arith.select %265, %266, %267 : vector<64x8xi1>, vector<64x8xf32>
    %269 = math.absf %263 : vector<64x8xf32>
    %cst_110 = arith.constant 0.327591091 : f32
    %270 = vector.broadcast %cst_110 : f32 to vector<64x8xf32>
    %271 = arith.mulf %270, %269 : vector<64x8xf32>
    %cst_111 = arith.constant 1.000000e+00 : f32
    %272 = vector.broadcast %cst_111 : f32 to vector<64x8xf32>
    %273 = arith.addf %272, %271 : vector<64x8xf32>
    %cst_112 = arith.constant 1.000000e+00 : f32
    %274 = vector.broadcast %cst_112 : f32 to vector<64x8xf32>
    %275 = arith.divf %274, %273 : vector<64x8xf32>
    %cst_113 = arith.constant 1.06140542 : f32
    %276 = vector.broadcast %cst_113 : f32 to vector<64x8xf32>
    %277 = arith.mulf %276, %275 : vector<64x8xf32>
    %cst_114 = arith.constant -1.45315206 : f32
    %278 = vector.broadcast %cst_114 : f32 to vector<64x8xf32>
    %279 = arith.addf %277, %278 : vector<64x8xf32>
    %280 = arith.mulf %279, %275 : vector<64x8xf32>
    %cst_115 = arith.constant 1.42141378 : f32
    %281 = vector.broadcast %cst_115 : f32 to vector<64x8xf32>
    %282 = arith.addf %280, %281 : vector<64x8xf32>
    %283 = arith.mulf %282, %275 : vector<64x8xf32>
    %cst_116 = arith.constant -0.284496725 : f32
    %284 = vector.broadcast %cst_116 : f32 to vector<64x8xf32>
    %285 = arith.addf %283, %284 : vector<64x8xf32>
    %286 = arith.mulf %285, %275 : vector<64x8xf32>
    %cst_117 = arith.constant 0.254829586 : f32
    %287 = vector.broadcast %cst_117 : f32 to vector<64x8xf32>
    %288 = arith.addf %286, %287 : vector<64x8xf32>
    %289 = arith.mulf %288, %275 : vector<64x8xf32>
    %cst_118 = arith.constant 0.000000e+00 : f32
    %290 = vector.broadcast %cst_118 : f32 to vector<64x8xf32>
    %291 = arith.subf %290, %269 : vector<64x8xf32>
    %292 = arith.mulf %291, %269 : vector<64x8xf32>
    %293 = math.exp %292 : vector<64x8xf32>
    %294 = arith.mulf %289, %293 : vector<64x8xf32>
    %cst_119 = arith.constant 1.000000e+00 : f32
    %295 = vector.broadcast %cst_119 : f32 to vector<64x8xf32>
    %296 = arith.subf %295, %294 : vector<64x8xf32>
    %297 = arith.mulf %268, %296 : vector<64x8xf32>
    %cst_120 = arith.constant 1.000000e+00 : f32
    %298 = vector.broadcast %cst_120 : f32 to vector<64x8xf32>
    %299 = arith.addf %298, %297 : vector<64x8xf32>
    %300 = arith.mulf %261, %299 : vector<64x8xf32>
    %cst_121 = arith.constant dense<0.000000e+00> : vector<64x16xf32>
    %301 = tpu.matmul %300, %9, %cst_121 {dimension_numbers = #tpu.dot_dimension_numbers<[1], [0], [0], [1], [0, 0, 1, 1], [], []>} : vector<64x8xf32>, vector<8x16xf32>, vector<64x16xf32> -> vector<64x16xf32>
    %302 = vector.broadcast %10 : vector<1x16xf32> to vector<64x16xf32>
    %303 = arith.addf %301, %302 : vector<64x16xf32>
    %cst_122 = arith.constant 5.000000e-01 : f32
    %304 = vector.broadcast %cst_122 : f32 to vector<64x16xf32>
    %305 = arith.mulf %304, %303 : vector<64x16xf32>
    %cst_123 = arith.constant 0.707106769 : f32
    %306 = vector.broadcast %cst_123 : f32 to vector<64x16xf32>
    %307 = arith.mulf %303, %306 : vector<64x16xf32>
    %cst_124 = arith.constant 0.000000e+00 : f32
    %308 = vector.broadcast %cst_124 : f32 to vector<64x16xf32>
    %309 = arith.cmpf oge, %307, %308 : vector<64x16xf32>
    %cst_125 = arith.constant 1.000000e+00 : f32
    %cst_126 = arith.constant -1.000000e+00 : f32
    %310 = vector.broadcast %cst_125 : f32 to vector<64x16xf32>
    %311 = vector.broadcast %cst_126 : f32 to vector<64x16xf32>
    %312 = arith.select %309, %310, %311 : vector<64x16xi1>, vector<64x16xf32>
    %313 = math.absf %307 : vector<64x16xf32>
    %cst_127 = arith.constant 0.327591091 : f32
    %314 = vector.broadcast %cst_127 : f32 to vector<64x16xf32>
    %315 = arith.mulf %314, %313 : vector<64x16xf32>
    %cst_128 = arith.constant 1.000000e+00 : f32
    %316 = vector.broadcast %cst_128 : f32 to vector<64x16xf32>
    %317 = arith.addf %316, %315 : vector<64x16xf32>
    %cst_129 = arith.constant 1.000000e+00 : f32
    %318 = vector.broadcast %cst_129 : f32 to vector<64x16xf32>
    %319 = arith.divf %318, %317 : vector<64x16xf32>
    %cst_130 = arith.constant 1.06140542 : f32
    %320 = vector.broadcast %cst_130 : f32 to vector<64x16xf32>
    %321 = arith.mulf %320, %319 : vector<64x16xf32>
    %cst_131 = arith.constant -1.45315206 : f32
    %322 = vector.broadcast %cst_131 : f32 to vector<64x16xf32>
    %323 = arith.addf %321, %322 : vector<64x16xf32>
    %324 = arith.mulf %323, %319 : vector<64x16xf32>
    %cst_132 = arith.constant 1.42141378 : f32
    %325 = vector.broadcast %cst_132 : f32 to vector<64x16xf32>
    %326 = arith.addf %324, %325 : vector<64x16xf32>
    %327 = arith.mulf %326, %319 : vector<64x16xf32>
    %cst_133 = arith.constant -0.284496725 : f32
    %328 = vector.broadcast %cst_133 : f32 to vector<64x16xf32>
    %329 = arith.addf %327, %328 : vector<64x16xf32>
    %330 = arith.mulf %329, %319 : vector<64x16xf32>
    %cst_134 = arith.constant 0.254829586 : f32
    %331 = vector.broadcast %cst_134 : f32 to vector<64x16xf32>
    %332 = arith.addf %330, %331 : vector<64x16xf32>
    %333 = arith.mulf %332, %319 : vector<64x16xf32>
    %cst_135 = arith.constant 0.000000e+00 : f32
    %334 = vector.broadcast %cst_135 : f32 to vector<64x16xf32>
    %335 = arith.subf %334, %313 : vector<64x16xf32>
    %336 = arith.mulf %335, %313 : vector<64x16xf32>
    %337 = math.exp %336 : vector<64x16xf32>
    %338 = arith.mulf %333, %337 : vector<64x16xf32>
    %cst_136 = arith.constant 1.000000e+00 : f32
    %339 = vector.broadcast %cst_136 : f32 to vector<64x16xf32>
    %340 = arith.subf %339, %338 : vector<64x16xf32>
    %341 = arith.mulf %312, %340 : vector<64x16xf32>
    %cst_137 = arith.constant 1.000000e+00 : f32
    %342 = vector.broadcast %cst_137 : f32 to vector<64x16xf32>
    %343 = arith.addf %342, %341 : vector<64x16xf32>
    %344 = arith.mulf %305, %343 : vector<64x16xf32>
    %cst_138 = arith.constant dense<0.000000e+00> : vector<64x16xf32>
    %345 = tpu.matmul %344, %12, %cst_138 {dimension_numbers = #tpu.dot_dimension_numbers<[1], [0], [0], [1], [0, 0, 1, 1], [], []>} : vector<64x16xf32>, vector<16x16xf32>, vector<64x16xf32> -> vector<64x16xf32>
    %c0_139 = arith.constant 0 : index
    %c0_140 = arith.constant 0 : index
    %c32 = arith.constant 32 : index
    %346 = vector.load %arg10[%c0_139, %c0_140, %c32] : memref<1x64x64xf32, #tpu.memory_space<vmem>>, vector<1x64x16xf32>
    %347 = vector.shape_cast %346 : vector<1x64x16xf32> to vector<64x16xf32>
    %348 = vector.shape_cast %345 : vector<64x16xf32> to vector<1x64x16xf32>
    tpu.vector_store %arg10[%c0_139, %c0_140, %c32], %348 {strides = array<i32>} : memref<1x64x64xf32, #tpu.memory_space<vmem>>, vector<1x64x16xf32>,
    %349 = vector.extract_strided_slice %6 {offsets = [0, 24], sizes = [64, 8], strides = [1, 1]} : vector<64x32xf32> to vector<64x8xf32>
    %cst_141 = arith.constant dense<0.000000e+00> : vector<64xf32>
    %350 = vector.multi_reduction <add>, %349, %cst_141 [1] : vector<64x8xf32> to vector<64xf32>
    %351 = vector.shape_cast %350 : vector<64xf32> to vector<64x1xf32>
    %cst_142 = arith.constant 8.000000e+00 : f32
    %352 = vector.broadcast %cst_142 : f32 to vector<64x1xf32>
    %353 = arith.divf %351, %352 : vector<64x1xf32>
    %354 = vector.broadcast %353 : vector<64x1xf32> to vector<64x8xf32>
    %355 = arith.subf %349, %354 : vector<64x8xf32>
    %356 = arith.mulf %355, %355 : vector<64x8xf32>
    %cst_143 = arith.constant dense<0.000000e+00> : vector<64xf32>
    %357 = vector.multi_reduction <add>, %356, %cst_143 [1] : vector<64x8xf32> to vector<64xf32>
    %358 = vector.shape_cast %357 : vector<64xf32> to vector<64x1xf32>
    %cst_144 = arith.constant 8.000000e+00 : f32
    %359 = vector.broadcast %cst_144 : f32 to vector<64x1xf32>
    %360 = arith.divf %358, %359 : vector<64x1xf32>
    %361 = vector.broadcast %353 : vector<64x1xf32> to vector<64x8xf32>
    %362 = arith.subf %349, %361 : vector<64x8xf32>
    %cst_145 = arith.constant 9.99999997E-7 : f32
    %363 = vector.broadcast %cst_145 : f32 to vector<64x1xf32>
    %364 = arith.addf %360, %363 : vector<64x1xf32>
    %365 = math.rsqrt %364 : vector<64x1xf32>
    %366 = vector.broadcast %365 : vector<64x1xf32> to vector<64x8xf32>
    %367 = arith.mulf %362, %366 : vector<64x8xf32>
    %368 = vector.broadcast %7 : vector<1x8xf32> to vector<64x8xf32>
    %369 = arith.mulf %367, %368 : vector<64x8xf32>
    %370 = vector.broadcast %8 : vector<1x8xf32> to vector<64x8xf32>
    %371 = arith.addf %369, %370 : vector<64x8xf32>
    %cst_146 = arith.constant 5.000000e-01 : f32
    %372 = vector.broadcast %cst_146 : f32 to vector<64x8xf32>
    %373 = arith.mulf %372, %371 : vector<64x8xf32>
    %cst_147 = arith.constant 0.707106769 : f32
    %374 = vector.broadcast %cst_147 : f32 to vector<64x8xf32>
    %375 = arith.mulf %371, %374 : vector<64x8xf32>
    %cst_148 = arith.constant 0.000000e+00 : f32
    %376 = vector.broadcast %cst_148 : f32 to vector<64x8xf32>
    %377 = arith.cmpf oge, %375, %376 : vector<64x8xf32>
    %cst_149 = arith.constant 1.000000e+00 : f32
    %cst_150 = arith.constant -1.000000e+00 : f32
    %378 = vector.broadcast %cst_149 : f32 to vector<64x8xf32>
    %379 = vector.broadcast %cst_150 : f32 to vector<64x8xf32>
    %380 = arith.select %377, %378, %379 : vector<64x8xi1>, vector<64x8xf32>
    %381 = math.absf %375 : vector<64x8xf32>
    %cst_151 = arith.constant 0.327591091 : f32
    %382 = vector.broadcast %cst_151 : f32 to vector<64x8xf32>
    %383 = arith.mulf %382, %381 : vector<64x8xf32>
    %cst_152 = arith.constant 1.000000e+00 : f32
    %384 = vector.broadcast %cst_152 : f32 to vector<64x8xf32>
    %385 = arith.addf %384, %383 : vector<64x8xf32>
    %cst_153 = arith.constant 1.000000e+00 : f32
    %386 = vector.broadcast %cst_153 : f32 to vector<64x8xf32>
    %387 = arith.divf %386, %385 : vector<64x8xf32>
    %cst_154 = arith.constant 1.06140542 : f32
    %388 = vector.broadcast %cst_154 : f32 to vector<64x8xf32>
    %389 = arith.mulf %388, %387 : vector<64x8xf32>
    %cst_155 = arith.constant -1.45315206 : f32
    %390 = vector.broadcast %cst_155 : f32 to vector<64x8xf32>
    %391 = arith.addf %389, %390 : vector<64x8xf32>
    %392 = arith.mulf %391, %387 : vector<64x8xf32>
    %cst_156 = arith.constant 1.42141378 : f32
    %393 = vector.broadcast %cst_156 : f32 to vector<64x8xf32>
    %394 = arith.addf %392, %393 : vector<64x8xf32>
    %395 = arith.mulf %394, %387 : vector<64x8xf32>
    %cst_157 = arith.constant -0.284496725 : f32
    %396 = vector.broadcast %cst_157 : f32 to vector<64x8xf32>
    %397 = arith.addf %395, %396 : vector<64x8xf32>
    %398 = arith.mulf %397, %387 : vector<64x8xf32>
    %cst_158 = arith.constant 0.254829586 : f32
    %399 = vector.broadcast %cst_158 : f32 to vector<64x8xf32>
    %400 = arith.addf %398, %399 : vector<64x8xf32>
    %401 = arith.mulf %400, %387 : vector<64x8xf32>
    %cst_159 = arith.constant 0.000000e+00 : f32
    %402 = vector.broadcast %cst_159 : f32 to vector<64x8xf32>
    %403 = arith.subf %402, %381 : vector<64x8xf32>
    %404 = arith.mulf %403, %381 : vector<64x8xf32>
    %405 = math.exp %404 : vector<64x8xf32>
    %406 = arith.mulf %401, %405 : vector<64x8xf32>
    %cst_160 = arith.constant 1.000000e+00 : f32
    %407 = vector.broadcast %cst_160 : f32 to vector<64x8xf32>
    %408 = arith.subf %407, %406 : vector<64x8xf32>
    %409 = arith.mulf %380, %408 : vector<64x8xf32>
    %cst_161 = arith.constant 1.000000e+00 : f32
    %410 = vector.broadcast %cst_161 : f32 to vector<64x8xf32>
    %411 = arith.addf %410, %409 : vector<64x8xf32>
    %412 = arith.mulf %373, %411 : vector<64x8xf32>
    %cst_162 = arith.constant dense<0.000000e+00> : vector<64x16xf32>
    %413 = tpu.matmul %412, %9, %cst_162 {dimension_numbers = #tpu.dot_dimension_numbers<[1], [0], [0], [1], [0, 0, 1, 1], [], []>} : vector<64x8xf32>, vector<8x16xf32>, vector<64x16xf32> -> vector<64x16xf32>
    %414 = vector.broadcast %10 : vector<1x16xf32> to vector<64x16xf32>
    %415 = arith.addf %413, %414 : vector<64x16xf32>
    %cst_163 = arith.constant 5.000000e-01 : f32
    %416 = vector.broadcast %cst_163 : f32 to vector<64x16xf32>
    %417 = arith.mulf %416, %415 : vector<64x16xf32>
    %cst_164 = arith.constant 0.707106769 : f32
    %418 = vector.broadcast %cst_164 : f32 to vector<64x16xf32>
    %419 = arith.mulf %415, %418 : vector<64x16xf32>
    %cst_165 = arith.constant 0.000000e+00 : f32
    %420 = vector.broadcast %cst_165 : f32 to vector<64x16xf32>
    %421 = arith.cmpf oge, %419, %420 : vector<64x16xf32>
    %cst_166 = arith.constant 1.000000e+00 : f32
    %cst_167 = arith.constant -1.000000e+00 : f32
    %422 = vector.broadcast %cst_166 : f32 to vector<64x16xf32>
    %423 = vector.broadcast %cst_167 : f32 to vector<64x16xf32>
    %424 = arith.select %421, %422, %423 : vector<64x16xi1>, vector<64x16xf32>
    %425 = math.absf %419 : vector<64x16xf32>
    %cst_168 = arith.constant 0.327591091 : f32
    %426 = vector.broadcast %cst_168 : f32 to vector<64x16xf32>
    %427 = arith.mulf %426, %425 : vector<64x16xf32>
    %cst_169 = arith.constant 1.000000e+00 : f32
    %428 = vector.broadcast %cst_169 : f32 to vector<64x16xf32>
    %429 = arith.addf %428, %427 : vector<64x16xf32>
    %cst_170 = arith.constant 1.000000e+00 : f32
    %430 = vector.broadcast %cst_170 : f32 to vector<64x16xf32>
    %431 = arith.divf %430, %429 : vector<64x16xf32>
    %cst_171 = arith.constant 1.06140542 : f32
    %432 = vector.broadcast %cst_171 : f32 to vector<64x16xf32>
    %433 = arith.mulf %432, %431 : vector<64x16xf32>
    %cst_172 = arith.constant -1.45315206 : f32
    %434 = vector.broadcast %cst_172 : f32 to vector<64x16xf32>
    %435 = arith.addf %433, %434 : vector<64x16xf32>
    %436 = arith.mulf %435, %431 : vector<64x16xf32>
    %cst_173 = arith.constant 1.42141378 : f32
    %437 = vector.broadcast %cst_173 : f32 to vector<64x16xf32>
    %438 = arith.addf %436, %437 : vector<64x16xf32>
    %439 = arith.mulf %438, %431 : vector<64x16xf32>
    %cst_174 = arith.constant -0.284496725 : f32
    %440 = vector.broadcast %cst_174 : f32 to vector<64x16xf32>
    %441 = arith.addf %439, %440 : vector<64x16xf32>
    %442 = arith.mulf %441, %431 : vector<64x16xf32>
    %cst_175 = arith.constant 0.254829586 : f32
    %443 = vector.broadcast %cst_175 : f32 to vector<64x16xf32>
    %444 = arith.addf %442, %443 : vector<64x16xf32>
    %445 = arith.mulf %444, %431 : vector<64x16xf32>
    %cst_176 = arith.constant 0.000000e+00 : f32
    %446 = vector.broadcast %cst_176 : f32 to vector<64x16xf32>
    %447 = arith.subf %446, %425 : vector<64x16xf32>
    %448 = arith.mulf %447, %425 : vector<64x16xf32>
    %449 = math.exp %448 : vector<64x16xf32>
    %450 = arith.mulf %445, %449 : vector<64x16xf32>
    %cst_177 = arith.constant 1.000000e+00 : f32
    %451 = vector.broadcast %cst_177 : f32 to vector<64x16xf32>
    %452 = arith.subf %451, %450 : vector<64x16xf32>
    %453 = arith.mulf %424, %452 : vector<64x16xf32>
    %cst_178 = arith.constant 1.000000e+00 : f32
    %454 = vector.broadcast %cst_178 : f32 to vector<64x16xf32>
    %455 = arith.addf %454, %453 : vector<64x16xf32>
    %456 = arith.mulf %417, %455 : vector<64x16xf32>
    %cst_179 = arith.constant dense<0.000000e+00> : vector<64x16xf32>
    %457 = tpu.matmul %456, %12, %cst_179 {dimension_numbers = #tpu.dot_dimension_numbers<[1], [0], [0], [1], [0, 0, 1, 1], [], []>} : vector<64x16xf32>, vector<16x16xf32>, vector<64x16xf32> -> vector<64x16xf32>
    %c0_180 = arith.constant 0 : index
    %c0_181 = arith.constant 0 : index
    %c48 = arith.constant 48 : index
    %458 = vector.load %arg10[%c0_180, %c0_181, %c48] : memref<1x64x64xf32, #tpu.memory_space<vmem>>, vector<1x64x16xf32>
    %459 = vector.shape_cast %458 : vector<1x64x16xf32> to vector<64x16xf32>
    %460 = vector.shape_cast %457 : vector<64x16xf32> to vector<1x64x16xf32>
    tpu.vector_store %arg10[%c0_180, %c0_181, %c48], %460 {strides = array<i32>} : memref<1x64x64xf32, #tpu.memory_space<vmem>>, vector<1x64x16xf32>,
    return
  }
  func.func @transform_0(%arg0: i32, %arg1: i32) -> (i32, i32, i32) {
    %c0_i32 = arith.constant 0 : i32
    %c0_i32_0 = arith.constant 0 : i32
    return %arg0, %arg1, %c0_i32 : i32, i32, i32
  }
  func.func @transform_1(%arg0: i32, %arg1: i32) -> (i32, i32) {
    %c0_i32 = arith.constant 0 : i32
    %c0_i32_0 = arith.constant 0 : i32
    %c0_i32_1 = arith.constant 0 : i32
    return %c0_i32, %c0_i32_0 : i32, i32
  }
  func.func @transform_2(%arg0: i32, %arg1: i32) -> (i32, i32) {
    %c0_i32 = arith.constant 0 : i32
    %c0_i32_0 = arith.constant 0 : i32
    %c0_i32_1 = arith.constant 0 : i32
    return %c0_i32, %c0_i32_0 : i32, i32
  }
  func.func @transform_3(%arg0: i32, %arg1: i32) -> (i32, i32) {
    %c0_i32 = arith.constant 0 : i32
    %c0_i32_0 = arith.constant 0 : i32
    %c0_i32_1 = arith.constant 0 : i32
    return %c0_i32, %c0_i32_0 : i32, i32
  }
  func.func @transform_4(%arg0: i32, %arg1: i32) -> (i32, i32) {
    %c0_i32 = arith.constant 0 : i32
    %c0_i32_0 = arith.constant 0 : i32
    %c0_i32_1 = arith.constant 0 : i32
    return %c0_i32, %c0_i32_0 : i32, i32
  }
  func.func @transform_5(%arg0: i32, %arg1: i32) -> (i32, i32) {
    %c0_i32 = arith.constant 0 : i32
    %c0_i32_0 = arith.constant 0 : i32
    %c0_i32_1 = arith.constant 0 : i32
    return %c0_i32, %c0_i32_0 : i32, i32
  }
  func.func @transform_6(%arg0: i32, %arg1: i32) -> (i32, i32) {
    %c0_i32 = arith.constant 0 : i32
    %c0_i32_0 = arith.constant 0 : i32
    %c0_i32_1 = arith.constant 0 : i32
    return %c0_i32, %c0_i32_0 : i32, i32
  }
  func.func @transform_7(%arg0: i32, %arg1: i32) -> (i32, i32, i32) {
    %c0_i32 = arith.constant 0 : i32
    %c0_i32_0 = arith.constant 0 : i32
    %c0_i32_1 = arith.constant 0 : i32
    return %arg0, %c0_i32, %c0_i32_0 : i32, i32, i32
  }
  func.func @transform_8(%arg0: i32, %arg1: i32) -> (i32, i32, i32) {
    %c0_i32 = arith.constant 0 : i32
    %c0_i32_0 = arith.constant 0 : i32
    return %arg0, %arg1, %c0_i32 : i32, i32, i32
  }
}

</mosaic_0001>

<llo_original>
// kernel: tile.13
$region0: #{tile.13}
  #allocation0 [shape = 's32[1]{0}', space=sflag, size = 0x4, scoped, tag = 'scoped memory for tile.13']
  %s0 = inlined_call_operand.vmem [shape: f32[8], index: 0, kind: input, shape index: {}]
  %s1 = inlined_call_operand.vmem [shape: f32[4,8], index: 1, kind: output, shape index: {}]
  // Predicated region
  $region2: #{tile.13} parent=0 // pred_check
    _
  $region3: #{tile.13} parent=0 // pred_check_branch
    %3 = sbr.rel (0) target = $region5
  $region4: #{tile.13} parent=0 // pred_region
    _
  $region5: #{tile.13} parent=0 // pred_fallthru
    _
  %v4 = vld [vmem:[%s0] ss:$0 sm:$0xff]
  %5 = vst [vmem:[%s1] sm:$0xf] %v4

// kernel: tile.18
$region0: #{tile.18}
  #allocation0 [shape = 's32[1]{0}', space=sflag, size = 0x4, scoped, tag = 'scoped memory for tile.18']
  %s0 = inlined_call_operand.vmem [shape: f32[4], index: 0, kind: input, shape index: {}]
  %s1 = inlined_call_operand.vmem [shape: f32[4,4], index: 1, kind: output, shape index: {}]
  // Predicated region
  $region2: #{tile.18} parent=0 // pred_check
    _
  $region3: #{tile.18} parent=0 // pred_check_branch
    %3 = sbr.rel (0) target = $region5
  $region4: #{tile.18} parent=0 // pred_region
    _
  $region5: #{tile.18} parent=0 // pred_fallthru
    _
  %v4 = vld [vmem:[%s0] ss:$0 sm:$0xff]
  %5 = vst [vmem:[%s1] sm:$0xf] %v4

// kernel: tile.14
$region0: #{tile.14}
  %s0 = inlined_call_operand.vmem [shape: f32[4,8], index: 0, kind: input, shape index: {}]
  %s1 = inlined_call_operand.vmem [shape: f32[1,32], index: 1, kind: output, shape index: {}]
  $region1: #{tile.14} parent=0
    #allocation0 [shape = 'u8[4096]{0}', space=vmem, size = 0x1000, scoped, tag = 'scoped mem for output reshape']
    #allocation1 [shape = 'u8[4096]{0}', space=vmem, size = 0x1000, scoped, tag = 'scoped mem for input reshape']
    %s3 = sshllo.u32 0, 4
    %v4 = vld [vmem:[%s0] sm:%s3]
    %5 = vst [vmem:[#allocation1] sm:%s3] %v4
    %v6 = vld [vmem:[#allocation1] sm:$0x1]
    %vm7 = vcmask 64512
    %8 = vst.msk [vmem:[#allocation0] sm:$0x1] %vm7, %v6
    %s9 = scalar_lea.vmem [#allocation1], 3
    %v10 = vld [vmem:[%s9] sm:$0x1]
    %11 = vrot.lane.b32.xlu0 %v10, 24
    %v12 = vpop.permute.xlu0 %11
    %vm13 = vcmask 261312
    %14 = vst.msk [vmem:[#allocation0] sm:$0x1] %vm13, %v12
    %s15 = scalar_lea.vmem [#allocation1], 2
    %v16 = vld [vmem:[%s15] sm:$0x1]
    %17 = vrot.lane.b32.xlu0 %v16, 16
    %v18 = vpop.permute.xlu0 %17
    %vm19 = vcmask 195712
    %20 = vst.msk [vmem:[#allocation0] sm:$0x1] %vm19, %v18
    %s21 = scalar_lea.vmem [#allocation1], 1
    %v22 = vld [vmem:[%s21] sm:$0x1]
    %23 = vrot.lane.b32.xlu0 %v22, 8
    %v24 = vpop.permute.xlu0 %23
    %vm25 = vcmask 130112
    %26 = vst.msk [vmem:[#allocation0] sm:$0x1] %vm25, %v24
    %s28 = sshllo.u32 0, 1
    %v30 = vld [vmem:[#allocation0] sm:%s28]
    %s31 = sshllo.u32 0, 1
    %32 = vst [vmem:[%s1] sm:%s31] %v30

// kernel: tile.19
$region0: #{tile.19}
  %s0 = inlined_call_operand.vmem [shape: f32[4,4], index: 0, kind: input, shape index: {}]
  %s1 = inlined_call_operand.vmem [shape: f32[1,16], index: 1, kind: output, shape index: {}]
  $region1: #{tile.19} parent=0
    #allocation0 [shape = 'u8[4096]{0}', space=vmem, size = 0x1000, scoped, tag = 'scoped mem for output reshape']
    #allocation1 [shape = 'u8[4096]{0}', space=vmem, size = 0x1000, scoped, tag = 'scoped mem for input reshape']
    %s3 = sshllo.u32 0, 4
    %v4 = vld [vmem:[%s0] sm:%s3]
    %5 = vst [vmem:[#allocation1] sm:%s3] %v4
    %v6 = vld [vmem:[#allocation1] sm:$0x1]
    %vm7 = vcmask 31744
    %8 = vst.msk [vmem:[#allocation0] sm:$0x1] %vm7, %v6
    %s9 = scalar_lea.vmem [#allocation1], 3
    %v10 = vld [vmem:[%s9] sm:$0x1]
    %11 = vrot.lane.b32.xlu0 %v10, 12
    %v12 = vpop.permute.xlu0 %11
    %vm13 = vcmask 130144
    %14 = vst.msk [vmem:[#allocation0] sm:$0x1] %vm13, %v12
    %s15 = scalar_lea.vmem [#allocation1], 2
    %v16 = vld [vmem:[%s15] sm:$0x1]
    %17 = vrot.lane.b32.xlu0 %v16, 8
    %v18 = vpop.permute.xlu0 %17
    %vm19 = vcmask 97344
    %20 = vst.msk [vmem:[#allocation0] sm:$0x1] %vm19, %v18
    %s21 = scalar_lea.vmem [#allocation1], 1
    %v22 = vld [vmem:[%s21] sm:$0x1]
    %23 = vrot.lane.b32.xlu0 %v22, 4
    %v24 = vpop.permute.xlu0 %23
    %vm25 = vcmask 64544
    %26 = vst.msk [vmem:[#allocation0] sm:$0x1] %vm25, %v24
    %s28 = sshllo.u32 0, 1
    %v30 = vld [vmem:[#allocation0] sm:%s28]
    %s31 = sshllo.u32 0, 1
    %32 = vst [vmem:[%s1] sm:%s31] %v30

// kernel: _mask_decoder_forward_impl.5
$region0: #{_mask_decoder_forward_impl.5}
  #allocation0 [shape = 'u32[]', space=smem, size = 0x4, offset = 0x4, fixed_abs, tag = 'smem constant byte address 0x4 - core index']
  #allocation1 [shape = 'u32[144,128]{1,0:T(1,128)}', space=vmem, size = 0x12000, scoped, tag = 'internal scratch']
  %s0 = inlined_call_operand.vmem [shape: f32[1,2,32], index: 0, kind: input, shape index: {}]
  %s1 = inlined_call_operand.vmem [shape: f32[1,32,64], index: 1, kind: input, shape index: {}]
  %s2 = inlined_call_operand.vmem [shape: f32[1,1,64], index: 2, kind: input, shape index: {}]
  %s3 = inlined_call_operand.vmem [shape: f32[1,64,64], index: 3, kind: input, shape index: {}]
  %s4 = inlined_call_operand.vmem [shape: f32[1,1,64], index: 4, kind: input, shape index: {}]
  %s5 = inlined_call_operand.vmem [shape: f32[1,64,4], index: 5, kind: input, shape index: {}]
  %s6 = inlined_call_operand.vmem [shape: f32[1,1,4], index: 6, kind: input, shape index: {}]
  %s7 = inlined_call_operand.vmem [shape: f32[1,2,4], index: 7, kind: output, shape index: {}]
  %s8 = sld [smem:[#allocation0]]
  $region38: #{_mask_decoder_forward_impl.5} parent=0
    _
  %s10 = ssub.s32 1, %s8
  %s11 = scalar_select 0, %s10, %s8
  // Predicated region
  $region2: #{_mask_decoder_forward_impl.5} parent=0 // pred_check
    _
  $region3: #{_mask_decoder_forward_impl.5} parent=0 // pred_check_branch
    %13 = sbr.rel (0) target = $region5
  $region4: #{_mask_decoder_forward_impl.5} parent=0 // pred_region
    _
  $region5: #{_mask_decoder_forward_impl.5} parent=0 // pred_fallthru
    _
  // Predicated region
  $region6: #{_mask_decoder_forward_impl.5} parent=0 // pred_check
    _
  $region7: #{_mask_decoder_forward_impl.5} parent=0 // pred_check_branch
    %15 = sbr.rel (0) target = $region9
  $region8: #{_mask_decoder_forward_impl.5} parent=0 // pred_region
    _
  $region9: #{_mask_decoder_forward_impl.5} parent=0 // pred_fallthru
    _
  // Predicated region
  $region10: #{_mask_decoder_forward_impl.5} parent=0 // pred_check
    _
  $region11: #{_mask_decoder_forward_impl.5} parent=0 // pred_check_branch
    %17 = sbr.rel (0) target = $region13
  $region12: #{_mask_decoder_forward_impl.5} parent=0 // pred_region
    _
  $region13: #{_mask_decoder_forward_impl.5} parent=0 // pred_fallthru
    _
  // Predicated region
  $region14: #{_mask_decoder_forward_impl.5} parent=0 // pred_check
    _
  $region15: #{_mask_decoder_forward_impl.5} parent=0 // pred_check_branch
    %19 = sbr.rel (0) target = $region17
  $region16: #{_mask_decoder_forward_impl.5} parent=0 // pred_region
    _
  $region17: #{_mask_decoder_forward_impl.5} parent=0 // pred_fallthru
    _
  // Predicated region
  $region18: #{_mask_decoder_forward_impl.5} parent=0 // pred_check
    _
  $region19: #{_mask_decoder_forward_impl.5} parent=0 // pred_check_branch
    %21 = sbr.rel (0) target = $region21
  $region20: #{_mask_decoder_forward_impl.5} parent=0 // pred_region
    _
  $region21: #{_mask_decoder_forward_impl.5} parent=0 // pred_fallthru
    _
  // Predicated region
  $region22: #{_mask_decoder_forward_impl.5} parent=0 // pred_check
    _
  $region23: #{_mask_decoder_forward_impl.5} parent=0 // pred_check_branch
    %23 = sbr.rel (0) target = $region25
  $region24: #{_mask_decoder_forward_impl.5} parent=0 // pred_region
    _
  $region25: #{_mask_decoder_forward_impl.5} parent=0 // pred_fallthru
    _
  // Predicated region
  $region26: #{_mask_decoder_forward_impl.5} parent=0 // pred_check
    _
  $region27: #{_mask_decoder_forward_impl.5} parent=0 // pred_check_branch
    %25 = sbr.rel (0) target = $region29
  $region28: #{_mask_decoder_forward_impl.5} parent=0 // pred_region
    _
  $region29: #{_mask_decoder_forward_impl.5} parent=0 // pred_fallthru
    _
  %v26 = vld [vmem:[%s0] sm:$0x3]
  %v27 = vld [vmem:[%s1] sm:$0xff]
  %v28 = vld [vmem:[%s1 + $0x8] sm:$0xff]
  %v29 = vld [vmem:[%s1 + $0x10] sm:$0xff]
  %v30 = vld [vmem:[%s1 + $0x18] sm:$0xff]
  %v31 = vld [vmem:[%s2] sm:$0x1]
  %v33 = vlaneseq
  %v34 = vshrl.u32 %v33, 7
  %v35 = vsub.s32 0, %v34
  %v36 = vrot.slane %v31, %v35
  %vm38 = vcmask 261120
  %v40 = vsel %vm38, %v26, 0
  %42 = vmatprep.subr.mxu0 0.0
  %43 = vmatpush1.msra.mxu0 %v27
  %44 = vmatprep.subr.mxu0 0.0
  %45 = vmatpush1.msra.mxu0 %v28
  %46 = vmatprep.subr.mxu0 0.0
  %47 = vmatpush1.msra.mxu0 %v29
  %48 = vmatprep.subr.mxu0 0.0
  %49 = vmatpush1.msra.mxu0 %v30
  %50 = vmatprep.subr.mxu0 0.0
  %51 = vmatpush1.msra.mxu0 0.0
  %52 = vmatprep.subr.mxu0 0.0
  %53 = vmatpush1.msra.mxu0 0.0
  %54 = vmatprep.subr.mxu0 0.0
  %55 = vmatpush1.msra.mxu0 0.0
  %56 = vmatprep.subr.mxu0 0.0
  %57 = vmatpush1.msra.mxu0 0.0
  %58 = vmatprep.subr.mxu0 0.0
  %59 = vmatpush1.msra.mxu0 0.0
  %60 = vmatprep.subr.mxu0 0.0
  %61 = vmatpush1.msra.mxu0 0.0
  %62 = vmatprep.subr.mxu0 0.0
  %63 = vmatpush1.msra.mxu0 0.0
  %64 = vmatprep.subr.mxu0 0.0
  %65 = vmatpush1.msra.mxu0 0.0
  %66 = vmatprep.subr.mxu0 0.0
  %67 = vmatpush1.msra.mxu0 0.0
  %68 = vmatprep.subr.mxu0 0.0
  %69 = vmatpush1.msra.mxu0 0.0
  %70 = vmatprep.subr.mxu0 0.0
  %71 = vmatpush1.msra.mxu0 0.0
  %72 = vmatprep.subr.mxu0 0.0
  %73 = vmatpush1.msra.mxu0 0.0
  %74 = vmatprep.subr.mxu0 0.0
  %75 = vmatpush1.msra.mxu0 0.0
  %76 = vmatprep.subr.mxu0 0.0
  %77 = vmatpush1.msra.mxu0 0.0
  %78 = vmatprep.subr.mxu0 0.0
  %79 = vmatpush1.msra.mxu0 0.0
  %80 = vmatprep.subr.mxu0 0.0
  %81 = vmatpush1.msra.mxu0 0.0
  %82 = vmatprep.subr.mxu0 0.0
  %83 = vmatpush1.msra.mxu0 0.0
  %84 = vmatprep.subr.mxu0 0.0
  %85 = vmatpush1.msra.mxu0 0.0
  %86 = vmatprep.subr.mxu0 0.0
  %87 = vmatpush1.msra.mxu0 0.0
  %88 = vmatprep.subr.mxu0 0.0
  %89 = vmatpush1.msra.mxu0 0.0
  %90 = vmatprep.subr.mxu0 0.0
  %91 = vmatpush1.msra.mxu0 0.0
  %92 = vmatprep.subr.mxu0 0.0
  %93 = vmatpush1.msra.mxu0 0.0
  %94 = vmatprep.subr.mxu0 0.0
  %95 = vmatpush1.msra.mxu0 0.0
  %96 = vmatprep.subr.mxu0 0.0
  %97 = vmatpush1.msra.mxu0 0.0
  %98 = vmatprep.subr.mxu0 0.0
  %99 = vmatpush1.msra.mxu0 0.0
  %100 = vmatprep.subr.mxu0 0.0
  %101 = vmatpush1.msra.mxu0 0.0
  %102 = vmatprep.subr.mxu0 0.0
  %103 = vmatpush1.msra.mxu0 0.0
  %104 = vmatprep.subr.mxu0 0.0
  %105 = vmatpush1.msra.mxu0 0.0
  %106 = vmatprep.mubr.f32.mxu0 0.0
  %107 = vmatmul.mubr.f32.gmra.mrb[0].mxu0 %v40
  %v108 = vpop.f32.mrb[0].mxu0
  %v109 = vadd.f32 %v36, %v108
  %v110 = vpop.f32.mrb[0].mxu0
  %111 = vdwg.mxu0
  %v112 = vmax.f32 %v109, 0.0
  %v113 = vld [vmem:[%s3] sm:$0xff]
  %v114 = vld [vmem:[%s3 + $0x8] sm:$0xff]
  %v115 = vld [vmem:[%s3 + $0x10] sm:$0xff]
  %v116 = vld [vmem:[%s3 + $0x18] sm:$0xff]
  %v117 = vld [vmem:[%s3 + $0x20] sm:$0xff]
  %v118 = vld [vmem:[%s3 + $0x28] sm:$0xff]
  %v119 = vld [vmem:[%s3 + $0x30] sm:$0xff]
  %v120 = vld [vmem:[%s3 + $0x38] sm:$0xff]
  %v121 = vld [vmem:[%s4] sm:$0x1]
  %v123 = vlaneseq
  %v124 = vshrl.u32 %v123, 7
  %v125 = vsub.s32 0, %v124
  %v126 = vrot.slane %v121, %v125
  %vm128 = vcmask 523264
  %v130 = vsel %vm128, %v112, 0
  %132 = vmatprep.subr.mxu0 0.0
  %133 = vmatpush1.msra.mxu0 %v113
  %134 = vmatprep.subr.mxu0 0.0
  %135 = vmatpush1.msra.mxu0 %v114
  %136 = vmatprep.subr.mxu0 0.0
  %137 = vmatpush1.msra.mxu0 %v115
  %138 = vmatprep.subr.mxu0 0.0
  %139 = vmatpush1.msra.mxu0 %v116
  %140 = vmatprep.subr.mxu0 0.0
  %141 = vmatpush1.msra.mxu0 %v117
  %142 = vmatprep.subr.mxu0 0.0
  %143 = vmatpush1.msra.mxu0 %v118
  %144 = vmatprep.subr.mxu0 0.0
  %145 = vmatpush1.msra.mxu0 %v119
  %146 = vmatprep.subr.mxu0 0.0
  %147 = vmatpush1.msra.mxu0 %v120
  %148 = vmatprep.subr.mxu0 0.0
  %149 = vmatpush1.msra.mxu0 0.0
  %150 = vmatprep.subr.mxu0 0.0
  %151 = vmatpush1.msra.mxu0 0.0
  %152 = vmatprep.subr.mxu0 0.0
  %153 = vmatpush1.msra.mxu0 0.0
  %154 = vmatprep.subr.mxu0 0.0
  %155 = vmatpush1.msra.mxu0 0.0
  %156 = vmatprep.subr.mxu0 0.0
  %157 = vmatpush1.msra.mxu0 0.0
  %158 = vmatprep.subr.mxu0 0.0
  %159 = vmatpush1.msra.mxu0 0.0
  %160 = vmatprep.subr.mxu0 0.0
  %161 = vmatpush1.msra.mxu0 0.0
  %162 = vmatprep.subr.mxu0 0.0
  %163 = vmatpush1.msra.mxu0 0.0
  %164 = vmatprep.subr.mxu0 0.0
  %165 = vmatpush1.msra.mxu0 0.0
  %166 = vmatprep.subr.mxu0 0.0
  %167 = vmatpush1.msra.mxu0 0.0
  %168 = vmatprep.subr.mxu0 0.0
  %169 = vmatpush1.msra.mxu0 0.0
  %170 = vmatprep.subr.mxu0 0.0
  %171 = vmatpush1.msra.mxu0 0.0
  %172 = vmatprep.subr.mxu0 0.0
  %173 = vmatpush1.msra.mxu0 0.0
  %174 = vmatprep.subr.mxu0 0.0
  %175 = vmatpush1.msra.mxu0 0.0
  %176 = vmatprep.subr.mxu0 0.0
  %177 = vmatpush1.msra.mxu0 0.0
  %178 = vmatprep.subr.mxu0 0.0
  %179 = vmatpush1.msra.mxu0 0.0
  %180 = vmatprep.subr.mxu0 0.0
  %181 = vmatpush1.msra.mxu0 0.0
  %182 = vmatprep.subr.mxu0 0.0
  %183 = vmatpush1.msra.mxu0 0.0
  %184 = vmatprep.subr.mxu0 0.0
  %185 = vmatpush1.msra.mxu0 0.0
  %186 = vmatprep.subr.mxu0 0.0
  %187 = vmatpush1.msra.mxu0 0.0
  %188 = vmatprep.subr.mxu0 0.0
  %189 = vmatpush1.msra.mxu0 0.0
  %190 = vmatprep.subr.mxu0 0.0
  %191 = vmatpush1.msra.mxu0 0.0
  %192 = vmatprep.subr.mxu0 0.0
  %193 = vmatpush1.msra.mxu0 0.0
  %194 = vmatprep.subr.mxu0 0.0
  %195 = vmatpush1.msra.mxu0 0.0
  %196 = vmatprep.mubr.f32.mxu0 0.0
  %197 = vmatmul.mubr.f32.gmra.mrb[0].mxu0 %v130
  %v198 = vpop.f32.mrb[0].mxu0
  %v199 = vadd.f32 %v126, %v198
  %v200 = vpop.f32.mrb[0].mxu0
  %201 = vdwg.mxu0
  %v202 = vmax.f32 %v199, 0.0
  %v203 = vld [vmem:[%s5] sm:$0xff]
  %v204 = vld [vmem:[%s5 + $0x8] sm:$0xff]
  %v205 = vld [vmem:[%s5 + $0x10] sm:$0xff]
  %v206 = vld [vmem:[%s5 + $0x18] sm:$0xff]
  %v207 = vld [vmem:[%s5 + $0x20] sm:$0xff]
  %v208 = vld [vmem:[%s5 + $0x28] sm:$0xff]
  %v209 = vld [vmem:[%s5 + $0x30] sm:$0xff]
  %v210 = vld [vmem:[%s5 + $0x38] sm:$0xff]
  %v211 = vld [vmem:[%s6] sm:$0x1]
  %v213 = vlaneseq
  %v214 = vshrl.u32 %v213, 7
  %v215 = vsub.s32 0, %v214
  %v216 = vrot.slane %v211, %v215
  %v219 = vsel %vm128, %v202, 0
  %221 = vmatprep.subr.mxu0 0.0
  %222 = vmatpush1.msra.mxu0 %v203
  %223 = vmatprep.subr.mxu0 0.0
  %224 = vmatpush1.msra.mxu0 %v204
  %225 = vmatprep.subr.mxu0 0.0
  %226 = vmatpush1.msra.mxu0 %v205
  %227 = vmatprep.subr.mxu0 0.0
  %228 = vmatpush1.msra.mxu0 %v206
  %229 = vmatprep.subr.mxu0 0.0
  %230 = vmatpush1.msra.mxu0 %v207
  %231 = vmatprep.subr.mxu0 0.0
  %232 = vmatpush1.msra.mxu0 %v208
  %233 = vmatprep.subr.mxu0 0.0
  %234 = vmatpush1.msra.mxu0 %v209
  %235 = vmatprep.subr.mxu0 0.0
  %236 = vmatpush1.msra.mxu0 %v210
  %237 = vmatprep.subr.mxu0 0.0
  %238 = vmatpush1.msra.mxu0 0.0
  %239 = vmatprep.subr.mxu0 0.0
  %240 = vmatpush1.msra.mxu0 0.0
  %241 = vmatprep.subr.mxu0 0.0
  %242 = vmatpush1.msra.mxu0 0.0
  %243 = vmatprep.subr.mxu0 0.0
  %244 = vmatpush1.msra.mxu0 0.0
  %245 = vmatprep.subr.mxu0 0.0
  %246 = vmatpush1.msra.mxu0 0.0
  %247 = vmatprep.subr.mxu0 0.0
  %248 = vmatpush1.msra.mxu0 0.0
  %249 = vmatprep.subr.mxu0 0.0
  %250 = vmatpush1.msra.mxu0 0.0
  %251 = vmatprep.subr.mxu0 0.0
  %252 = vmatpush1.msra.mxu0 0.0
  %253 = vmatprep.subr.mxu0 0.0
  %254 = vmatpush1.msra.mxu0 0.0
  %255 = vmatprep.subr.mxu0 0.0
  %256 = vmatpush1.msra.mxu0 0.0
  %257 = vmatprep.subr.mxu0 0.0
  %258 = vmatpush1.msra.mxu0 0.0
  %259 = vmatprep.subr.mxu0 0.0
  %260 = vmatpush1.msra.mxu0 0.0
  %261 = vmatprep.subr.mxu0 0.0
  %262 = vmatpush1.msra.mxu0 0.0
  %263 = vmatprep.subr.mxu0 0.0
  %264 = vmatpush1.msra.mxu0 0.0
  %265 = vmatprep.subr.mxu0 0.0
  %266 = vmatpush1.msra.mxu0 0.0
  %267 = vmatprep.subr.mxu0 0.0
  %268 = vmatpush1.msra.mxu0 0.0
  %269 = vmatprep.subr.mxu0 0.0
  %270 = vmatpush1.msra.mxu0 0.0
  %271 = vmatprep.subr.mxu0 0.0
  %272 = vmatpush1.msra.mxu0 0.0
  %273 = vmatprep.subr.mxu0 0.0
  %274 = vmatpush1.msra.mxu0 0.0
  %275 = vmatprep.subr.mxu0 0.0
  %276 = vmatpush1.msra.mxu0 0.0
  %277 = vmatprep.subr.mxu0 0.0
  %278 = vmatpush1.msra.mxu0 0.0
  %279 = vmatprep.subr.mxu0 0.0
  %280 = vmatpush1.msra.mxu0 0.0
  %281 = vmatprep.subr.mxu0 0.0
  %282 = vmatpush1.msra.mxu0 0.0
  %283 = vmatprep.subr.mxu0 0.0
  %284 = vmatpush1.msra.mxu0 0.0
  %285 = vmatprep.mubr.f32.mxu0 0.0
  %286 = vmatmul.mubr.f32.gmra.mrb[0].mxu0 %v219
  %v287 = vpop.f32.mrb[0].mxu0
  %v288 = vadd.f32 %v216, %v287
  %v289 = vpop.f32.mrb[0].mxu0
  %290 = vdwg.mxu0
  %vm291 = vcmask 25600
  %292 = vst.msk [vmem:[%s7] sm:$0x3] %vm291, %v288
  // Predicated region
  $region30: #{_mask_decoder_forward_impl.5} parent=0 // pred_check
    _
  $region31: #{_mask_decoder_forward_impl.5} parent=0 // pred_check_branch
    %294 = sbr.rel (0) target = $region33
  $region32: #{_mask_decoder_forward_impl.5} parent=0 // pred_region
    _
  $region33: #{_mask_decoder_forward_impl.5} parent=0 // pred_fallthru
    _
  // Predicated region
  $region34: #{_mask_decoder_forward_impl.5} parent=0 // pred_check
    _
  $region35: #{_mask_decoder_forward_impl.5} parent=0 // pred_check_branch
    %296 = sbr.rel (0) target = $region37
  $region36: #{_mask_decoder_forward_impl.5} parent=0 // pred_region
    _
  $region37: #{_mask_decoder_forward_impl.5} parent=0 // pred_fallthru
    _

// kernel: _mask_decoder_forward_impl.3
$region0: #{_mask_decoder_forward_impl.3}
  #allocation0 [shape = 'u32[]', space=smem, size = 0x4, offset = 0x4, fixed_abs, tag = 'smem constant byte address 0x4 - core index']
  #allocation1 [shape = 'u32[144,128]{1,0:T(1,128)}', space=vmem, size = 0x12000, scoped, tag = 'internal scratch']
  %s0 = inlined_call_operand.vmem [shape: f32[4,2,32], index: 0, kind: input, shape index: {}]
  %s1 = inlined_call_operand.vmem [shape: f32[4,32,32], index: 1, kind: input, shape index: {}]
  %s2 = inlined_call_operand.vmem [shape: f32[4,1,32], index: 2, kind: input, shape index: {}]
  %s3 = inlined_call_operand.vmem [shape: f32[4,32,32], index: 3, kind: input, shape index: {}]
  %s4 = inlined_call_operand.vmem [shape: f32[4,1,32], index: 4, kind: input, shape index: {}]
  %s5 = inlined_call_operand.vmem [shape: f32[4,32,4], index: 5, kind: input, shape index: {}]
  %s6 = inlined_call_operand.vmem [shape: f32[4,1,4], index: 6, kind: input, shape index: {}]
  %s7 = inlined_call_operand.vmem [shape: f32[4,2,4], index: 7, kind: output, shape index: {}]
  %s8 = sld [smem:[#allocation0]]
  $region61: #{_mask_decoder_forward_impl.3} parent=0
    _
  %s10 = ssub.s32 1, %s8
  %s11 = scalar_select 0, %s10, %s8
  loop: start=0, step=1, limit=6
  $region2: #{_mask_decoder_forward_impl.3} parent=0 // loop_pre_header
    _
  $region3: #{_mask_decoder_forward_impl.3} parent=0 // loop_header
    %s13 = sphi 0, %s17
    %p14 = scmp.ge.s32.totalorder %s13, 6
    %s23 = sphi 0, %s25
    %s26 = sphi 0, %s23
    %s27 = sphi 0, %s26
    %s43 = sphi 0, %s27
    %s49 = sphi 0, %s51
    %s52 = sphi 0, %s49
    %s53 = sphi 0, %s52
    %s69 = sphi 0, %s53
    %s75 = sphi 0, %s77
    %s78 = sphi 0, %s75
    %s79 = sphi 0, %s78
    %s95 = sphi 0, %s79
    %s101 = sphi 0, %s103
    %s104 = sphi 0, %s101
    %s105 = sphi 0, %s104
    %s121 = sphi 0, %s105
    %s127 = sphi 0, %s129
    %s130 = sphi 0, %s127
    %s131 = sphi 0, %s130
    %s147 = sphi 0, %s131
    %s153 = sphi 0, %s155
    %s156 = sphi 0, %s153
    %s157 = sphi 0, %s156
    %s173 = sphi 0, %s157
    %s179 = sphi 0, %s181
    %s182 = sphi 0, %s179
    %s183 = sphi 0, %s182
    %s199 = sphi 0, %s183
    %s205 = sphi 0, %s207
    %s208 = sphi 0, %s205
    %s209 = sphi 0, %s208
    %s225 = sphi 0, %s209
  $region4: #{_mask_decoder_forward_impl.3} parent=0 // loop_header_branch
    %16 = sbr.rel (%p14) target = $region8
  $region5: #{_mask_decoder_forward_impl.3} parent=0 // loop_body
    %s18 = ssub.s32 %s13, 1
    %s19 = ssub.s32 %s13, 2
    %s20 = sadd.s32 %s13, 1
    %s21 = ssub.s32 %s13, %s20
    %p22 = scmp.eq.s32.totalorder %s21, 0
    %s24 = sadd.s32 %s23, 1
    %s25 = scalar_select %p22, %s23, %s24
    %p28 = pneg %p22
    %p29 = scmp.eq.s32.totalorder %s13, 3
    %p30 = por %p28, %p29
    %p31 = scmp.ne.s32.totalorder %s23, %s26
    %p32 = scmp.eq.s32.totalorder %s13, 0
    %p33 = por %p31, %p32
    %p34 = scmp.ne.s32.totalorder %s23, %s26
    %p35 = scmp.eq.s32.totalorder %s18, 3
    %p36 = por %p34, %p35
    %p37 = scmp.ne.s32.totalorder %s26, %s27
    %p38 = scmp.eq.s32.totalorder %s18, 0
    %p39 = por %p37, %p38
    %p40 = scmp.ne.s32.totalorder %s26, %s27
    %p41 = scmp.eq.s32.totalorder %s19, 3
    %p42 = por %p40, %p41
    %p44 = scmp.ne.s32.totalorder %s27, %s43
    %p45 = scmp.eq.s32.totalorder %s19, 0
    %p46 = por %p44, %p45
    %s47 = ssub.s32 %s13, %s20
    %p48 = scmp.eq.s32.totalorder %s47, 0
    %s50 = sadd.s32 %s49, 1
    %s51 = scalar_select %p48, %s49, %s50
    %p54 = pneg %p48
    %p55 = scmp.eq.s32.totalorder %s13, 3
    %p56 = por %p54, %p55
    %p57 = scmp.ne.s32.totalorder %s49, %s52
    %p58 = scmp.eq.s32.totalorder %s13, 0
    %p59 = por %p57, %p58
    %p60 = scmp.ne.s32.totalorder %s49, %s52
    %p61 = scmp.eq.s32.totalorder %s18, 3
    %p62 = por %p60, %p61
    %p63 = scmp.ne.s32.totalorder %s52, %s53
    %p64 = scmp.eq.s32.totalorder %s18, 0
    %p65 = por %p63, %p64
    %p66 = scmp.ne.s32.totalorder %s52, %s53
    %p67 = scmp.eq.s32.totalorder %s19, 3
    %p68 = por %p66, %p67
    %p70 = scmp.ne.s32.totalorder %s53, %s69
    %p71 = scmp.eq.s32.totalorder %s19, 0
    %p72 = por %p70, %p71
    %s73 = ssub.s32 %s13, %s20
    %p74 = scmp.eq.s32.totalorder %s73, 0
    %s76 = sadd.s32 %s75, 1
    %s77 = scalar_select %p74, %s75, %s76
    %p80 = pneg %p74
    %p81 = scmp.eq.s32.totalorder %s13, 3
    %p82 = por %p80, %p81
    %p83 = scmp.ne.s32.totalorder %s75, %s78
    %p84 = scmp.eq.s32.totalorder %s13, 0
    %p85 = por %p83, %p84
    %p86 = scmp.ne.s32.totalorder %s75, %s78
    %p87 = scmp.eq.s32.totalorder %s18, 3
    %p88 = por %p86, %p87
    %p89 = scmp.ne.s32.totalorder %s78, %s79
    %p90 = scmp.eq.s32.totalorder %s18, 0
    %p91 = por %p89, %p90
    %p92 = scmp.ne.s32.totalorder %s78, %s79
    %p93 = scmp.eq.s32.totalorder %s19, 3
    %p94 = por %p92, %p93
    %p96 = scmp.ne.s32.totalorder %s79, %s95
    %p97 = scmp.eq.s32.totalorder %s19, 0
    %p98 = por %p96, %p97
    %s99 = ssub.s32 %s13, %s20
    %p100 = scmp.eq.s32.totalorder %s99, 0
    %s102 = sadd.s32 %s101, 1
    %s103 = scalar_select %p100, %s101, %s102
    %p106 = pneg %p100
    %p107 = scmp.eq.s32.totalorder %s13, 3
    %p108 = por %p106, %p107
    %p109 = scmp.ne.s32.totalorder %s101, %s104
    %p110 = scmp.eq.s32.totalorder %s13, 0
    %p111 = por %p109, %p110
    %p112 = scmp.ne.s32.totalorder %s101, %s104
    %p113 = scmp.eq.s32.totalorder %s18, 3
    %p114 = por %p112, %p113
    %p115 = scmp.ne.s32.totalorder %s104, %s105
    %p116 = scmp.eq.s32.totalorder %s18, 0
    %p117 = por %p115, %p116
    %p118 = scmp.ne.s32.totalorder %s104, %s105
    %p119 = scmp.eq.s32.totalorder %s19, 3
    %p120 = por %p118, %p119
    %p122 = scmp.ne.s32.totalorder %s105, %s121
    %p123 = scmp.eq.s32.totalorder %s19, 0
    %p124 = por %p122, %p123
    %s125 = ssub.s32 %s13, %s20
    %p126 = scmp.eq.s32.totalorder %s125, 0
    %s128 = sadd.s32 %s127, 1
    %s129 = scalar_select %p126, %s127, %s128
    %p132 = pneg %p126
    %p133 = scmp.eq.s32.totalorder %s13, 3
    %p134 = por %p132, %p133
    %p135 = scmp.ne.s32.totalorder %s127, %s130
    %p136 = scmp.eq.s32.totalorder %s13, 0
    %p137 = por %p135, %p136
    %p138 = scmp.ne.s32.totalorder %s127, %s130
    %p139 = scmp.eq.s32.totalorder %s18, 3
    %p140 = por %p138, %p139
    %p141 = scmp.ne.s32.totalorder %s130, %s131
    %p142 = scmp.eq.s32.totalorder %s18, 0
    %p143 = por %p141, %p142
    %p144 = scmp.ne.s32.totalorder %s130, %s131
    %p145 = scmp.eq.s32.totalorder %s19, 3
    %p146 = por %p144, %p145
    %p148 = scmp.ne.s32.totalorder %s131, %s147
    %p149 = scmp.eq.s32.totalorder %s19, 0
    %p150 = por %p148, %p149
    %s151 = ssub.s32 %s13, %s20
    %p152 = scmp.eq.s32.totalorder %s151, 0
    %s154 = sadd.s32 %s153, 1
    %s155 = scalar_select %p152, %s153, %s154
    %p158 = pneg %p152
    %p159 = scmp.eq.s32.totalorder %s13, 3
    %p160 = por %p158, %p159
    %p161 = scmp.ne.s32.totalorder %s153, %s156
    %p162 = scmp.eq.s32.totalorder %s13, 0
    %p163 = por %p161, %p162
    %p164 = scmp.ne.s32.totalorder %s153, %s156
    %p165 = scmp.eq.s32.totalorder %s18, 3
    %p166 = por %p164, %p165
    %p167 = scmp.ne.s32.totalorder %s156, %s157
    %p168 = scmp.eq.s32.totalorder %s18, 0
    %p169 = por %p167, %p168
    %p170 = scmp.ne.s32.totalorder %s156, %s157
    %p171 = scmp.eq.s32.totalorder %s19, 3
    %p172 = por %p170, %p171
    %p174 = scmp.ne.s32.totalorder %s157, %s173
    %p175 = scmp.eq.s32.totalorder %s19, 0
    %p176 = por %p174, %p175
    %s177 = ssub.s32 %s13, %s20
    %p178 = scmp.eq.s32.totalorder %s177, 0
    %s180 = sadd.s32 %s179, 1
    %s181 = scalar_select %p178, %s179, %s180
    %p184 = pneg %p178
    %p185 = scmp.eq.s32.totalorder %s13, 3
    %p186 = por %p184, %p185
    %p187 = scmp.ne.s32.totalorder %s179, %s182
    %p188 = scmp.eq.s32.totalorder %s13, 0
    %p189 = por %p187, %p188
    %p190 = scmp.ne.s32.totalorder %s179, %s182
    %p191 = scmp.eq.s32.totalorder %s18, 3
    %p192 = por %p190, %p191
    %p193 = scmp.ne.s32.totalorder %s182, %s183
    %p194 = scmp.eq.s32.totalorder %s18, 0
    %p195 = por %p193, %p194
    %p196 = scmp.ne.s32.totalorder %s182, %s183
    %p197 = scmp.eq.s32.totalorder %s19, 3
    %p198 = por %p196, %p197
    %p200 = scmp.ne.s32.totalorder %s183, %s199
    %p201 = scmp.eq.s32.totalorder %s19, 0
    %p202 = por %p200, %p201
    %s203 = ssub.s32 %s13, %s20
    %p204 = scmp.eq.s32.totalorder %s203, 0
    %s206 = sadd.s32 %s205, 1
    %s207 = scalar_select %p204, %s205, %s206
    %p210 = pneg %p204
    %p211 = scmp.eq.s32.totalorder %s13, 3
    %p212 = por %p210, %p211
    %p213 = scmp.ne.s32.totalorder %s205, %s208
    %p214 = scmp.eq.s32.totalorder %s13, 0
    %p215 = por %p213, %p214
    %p216 = scmp.ne.s32.totalorder %s205, %s208
    %p217 = scmp.eq.s32.totalorder %s18, 3
    %p218 = por %p216, %p217
    %p219 = scmp.ne.s32.totalorder %s208, %s209
    %p220 = scmp.eq.s32.totalorder %s18, 0
    %p221 = por %p219, %p220
    %p222 = scmp.ne.s32.totalorder %s208, %s209
    %p223 = scmp.eq.s32.totalorder %s19, 3
    %p224 = por %p222, %p223
    %p226 = scmp.ne.s32.totalorder %s209, %s225
    %p227 = scmp.eq.s32.totalorder %s19, 0
    %p228 = por %p226, %p227
    %p229 = scmp.le.s32.totalorder 1, %s13
    %p230 = scmp.lt.s32.totalorder %s13, 5
    %p231 = pnand %p229, %p230
    %p232 = pneg %p231
    // Predicated region
    $region9: #{_mask_decoder_forward_impl.3} parent=5 // pred_check
      _
    $region10: #{_mask_decoder_forward_impl.3} parent=5 // pred_check_branch
      %234 = sbr.rel (%p231) target = $region12
    $region11: #{_mask_decoder_forward_impl.3} parent=5 // pred_region
      %s235 = ssub.s32 %s13, 1
    $region12: #{_mask_decoder_forward_impl.3} parent=5 // pred_fallthru
      _
    %p236 = scmp.lt.s32.totalorder %s13, 4
    // Predicated region
    $region13: #{_mask_decoder_forward_impl.3} parent=5 // pred_check
      %p237 = pneg %p236
    $region14: #{_mask_decoder_forward_impl.3} parent=5 // pred_check_branch
      %239 = sbr.rel (%p237) target = $region16
    $region15: #{_mask_decoder_forward_impl.3} parent=5 // pred_region
      // Predicated region
      $region17: #{_mask_decoder_forward_impl.3} parent=15 // pred_check
        %p240 = pneg %p33
      $region18: #{_mask_decoder_forward_impl.3} parent=15 // pred_check_branch
        %242 = sbr.rel (%p240) target = $region20
      $region19: #{_mask_decoder_forward_impl.3} parent=15 // pred_region
        %p243 = scmp.lt.s32.totalorder %s13, 3
        %s244 = scalar_select %p243, %s13, 3
        %s245 = smul.addr %s244, 2
        %s246 = scalar_lea.vmem %s0, %s245
      $region20: #{_mask_decoder_forward_impl.3} parent=15 // pred_fallthru
        _
      // Predicated region
      $region21: #{_mask_decoder_forward_impl.3} parent=15 // pred_check
        %p247 = pneg %p59
      $region22: #{_mask_decoder_forward_impl.3} parent=15 // pred_check_branch
        %249 = sbr.rel (%p247) target = $region24
      $region23: #{_mask_decoder_forward_impl.3} parent=15 // pred_region
        %p250 = scmp.lt.s32.totalorder %s13, 3
        %s251 = scalar_select %p250, %s13, 3
        %s252 = smul.addr %s251, 4
        %s253 = smul.addr %s252, 8
        %s254 = scalar_lea.vmem %s1, %s253
      $region24: #{_mask_decoder_forward_impl.3} parent=15 // pred_fallthru
        _
      // Predicated region
      $region25: #{_mask_decoder_forward_impl.3} parent=15 // pred_check
        %p255 = pneg %p85
      $region26: #{_mask_decoder_forward_impl.3} parent=15 // pred_check_branch
        %257 = sbr.rel (%p255) target = $region28
      $region27: #{_mask_decoder_forward_impl.3} parent=15 // pred_region
        %p258 = scmp.lt.s32.totalorder %s13, 3
        %s259 = scalar_select %p258, %s13, 3
        %s260 = scalar_lea.vmem %s2, %s259
      $region28: #{_mask_decoder_forward_impl.3} parent=15 // pred_fallthru
        _
      // Predicated region
      $region29: #{_mask_decoder_forward_impl.3} parent=15 // pred_check
        %p261 = pneg %p111
      $region30: #{_mask_decoder_forward_impl.3} parent=15 // pred_check_branch
        %263 = sbr.rel (%p261) target = $region32
      $region31: #{_mask_decoder_forward_impl.3} parent=15 // pred_region
        %p264 = scmp.lt.s32.totalorder %s13, 3
        %s265 = scalar_select %p264, %s13, 3
        %s266 = smul.addr %s265, 4
        %s267 = smul.addr %s266, 8
        %s268 = scalar_lea.vmem %s3, %s267
      $region32: #{_mask_decoder_forward_impl.3} parent=15 // pred_fallthru
        _
      // Predicated region
      $region33: #{_mask_decoder_forward_impl.3} parent=15 // pred_check
        %p269 = pneg %p137
      $region34: #{_mask_decoder_forward_impl.3} parent=15 // pred_check_branch
        %271 = sbr.rel (%p269) target = $region36
      $region35: #{_mask_decoder_forward_impl.3} parent=15 // pred_region
        %p272 = scmp.lt.s32.totalorder %s13, 3
        %s273 = scalar_select %p272, %s13, 3
        %s274 = scalar_lea.vmem %s4, %s273
      $region36: #{_mask_decoder_forward_impl.3} parent=15 // pred_fallthru
        _
      // Predicated region
      $region37: #{_mask_decoder_forward_impl.3} parent=15 // pred_check
        %p275 = pneg %p163
      $region38: #{_mask_decoder_forward_impl.3} parent=15 // pred_check_branch
        %277 = sbr.rel (%p275) target = $region40
      $region39: #{_mask_decoder_forward_impl.3} parent=15 // pred_region
        %p278 = scmp.lt.s32.totalorder %s13, 3
        %s279 = scalar_select %p278, %s13, 3
        %s280 = smul.addr %s279, 4
        %s281 = smul.addr %s280, 8
        %s282 = scalar_lea.vmem %s5, %s281
      $region40: #{_mask_decoder_forward_impl.3} parent=15 // pred_fallthru
        _
      // Predicated region
      $region41: #{_mask_decoder_forward_impl.3} parent=15 // pred_check
        %p283 = pneg %p189
      $region42: #{_mask_decoder_forward_impl.3} parent=15 // pred_check_branch
        %285 = sbr.rel (%p283) target = $region44
      $region43: #{_mask_decoder_forward_impl.3} parent=15 // pred_region
        %p286 = scmp.lt.s32.totalorder %s13, 3
        %s287 = scalar_select %p286, %s13, 3
        %s288 = scalar_lea.vmem %s6, %s287
      $region44: #{_mask_decoder_forward_impl.3} parent=15 // pred_fallthru
        _
    $region16: #{_mask_decoder_forward_impl.3} parent=5 // pred_fallthru
      _
    %p289 = scmp.le.s32.totalorder 1, %s13
    %p290 = scmp.lt.s32.totalorder %s13, 5
    %p291 = pnand %p289, %p290
    %p292 = pneg %p291
    // Predicated region
    $region45: #{_mask_decoder_forward_impl.3} parent=5 // pred_check
      _
    $region46: #{_mask_decoder_forward_impl.3} parent=5 // pred_check_branch
      %294 = sbr.rel (%p291) target = $region48
    $region47: #{_mask_decoder_forward_impl.3} parent=5 // pred_region
      %s295 = ssub.s32 %s13, 1
      %p296 = scmp.lt.s32.totalorder %s18, 3
      %s297 = scalar_select %p296, %s18, 3
      %s298 = smul.addr %s297, 2
      %s299 = scalar_lea.vmem %s0, %s298
      %p300 = pneg %p39
      %p301 = pneg %p36
      %p302 = scmp.lt.s32.totalorder %s18, 3
      %s303 = scalar_select %p302, %s18, 3
      %s304 = smul.addr %s303, 4
      %s305 = smul.addr %s304, 8
      %s306 = scalar_lea.vmem %s1, %s305
      %p307 = pneg %p65
      %p308 = pneg %p62
      %p309 = scmp.lt.s32.totalorder %s18, 3
      %s310 = scalar_select %p309, %s18, 3
      %s311 = scalar_lea.vmem %s2, %s310
      %p312 = pneg %p91
      %p313 = pneg %p88
      %p314 = scmp.lt.s32.totalorder %s18, 3
      %s315 = scalar_select %p314, %s18, 3
      %s316 = smul.addr %s315, 4
      %s317 = smul.addr %s316, 8
      %s318 = scalar_lea.vmem %s3, %s317
      %p319 = pneg %p117
      %p320 = pneg %p114
      %p321 = scmp.lt.s32.totalorder %s18, 3
      %s322 = scalar_select %p321, %s18, 3
      %s323 = scalar_lea.vmem %s4, %s322
      %p324 = pneg %p143
      %p325 = pneg %p140
      %p326 = scmp.lt.s32.totalorder %s18, 3
      %s327 = scalar_select %p326, %s18, 3
      %s328 = smul.addr %s327, 4
      %s329 = smul.addr %s328, 8
      %s330 = scalar_lea.vmem %s5, %s329
      %p331 = pneg %p169
      %p332 = pneg %p166
      %p333 = scmp.lt.s32.totalorder %s18, 3
      %s334 = scalar_select %p333, %s18, 3
      %s335 = scalar_lea.vmem %s6, %s334
      %p336 = pneg %p195
      %p337 = pneg %p192
      %p338 = pneg %p221
      %p339 = pneg %p218
      %p340 = scmp.lt.s32.totalorder %s18, 3
      %s341 = scalar_select %p340, %s18, 3
      %s342 = smul.addr %s341, 2
      %s343 = scalar_lea.vmem %s7, %s342
      %p344 = scmp.lt.s32.totalorder %s18, 3
      %s345 = scalar_select %p344, %s18, 3
      %s346 = smul.addr %s345, 2
      %s347 = scalar_lea.vmem %s0, %s346
      %p348 = scmp.lt.s32.totalorder %s18, 3
      %s349 = scalar_select %p348, %s18, 3
      %s350 = smul.addr %s349, 4
      %s351 = smul.addr %s350, 8
      %s352 = scalar_lea.vmem %s1, %s351
      %p353 = scmp.lt.s32.totalorder %s18, 3
      %s354 = scalar_select %p353, %s18, 3
      %s355 = scalar_lea.vmem %s2, %s354
      %p356 = scmp.lt.s32.totalorder %s18, 3
      %s357 = scalar_select %p356, %s18, 3
      %s358 = smul.addr %s357, 4
      %s359 = smul.addr %s358, 8
      %s360 = scalar_lea.vmem %s3, %s359
      %p361 = scmp.lt.s32.totalorder %s18, 3
      %s362 = scalar_select %p361, %s18, 3
      %s363 = scalar_lea.vmem %s4, %s362
      %p364 = scmp.lt.s32.totalorder %s18, 3
      %s365 = scalar_select %p364, %s18, 3
      %s366 = smul.addr %s365, 4
      %s367 = smul.addr %s366, 8
      %s368 = scalar_lea.vmem %s5, %s367
      %p369 = scmp.lt.s32.totalorder %s18, 3
      %s370 = scalar_select %p369, %s18, 3
      %s371 = scalar_lea.vmem %s6, %s370
      %p372 = scmp.lt.s32.totalorder %s18, 3
      %s373 = scalar_select %p372, %s18, 3
      %s374 = smul.addr %s373, 2
      %s375 = scalar_lea.vmem %s7, %s374
      %v376 = vld [vmem:[%s347] sm:$0x3]
      %v377 = vld [vmem:[%s352] sm:$0xff]
      %v378 = vld [vmem:[%s352 + $0x8] sm:$0xff]
      %v379 = vld [vmem:[%s352 + $0x10] sm:$0xff]
      %v380 = vld [vmem:[%s352 + $0x18] sm:$0xff]
      %v381 = vld [vmem:[%s355] sm:$0x1]
      %v383 = vlaneseq
      %v384 = vshrl.u32 %v383, 7
      %v385 = vsub.s32 0, %v384
      %v386 = vrot.slane %v381, %v385
      %vm388 = vcmask 261120
      %v390 = vsel %vm388, %v376, 0
      %392 = vmatprep.subr.mxu0 0.0
      %393 = vmatpush1.msra.mxu0 %v377
      %394 = vmatprep.subr.mxu0 0.0
      %395 = vmatpush1.msra.mxu0 %v378
      %396 = vmatprep.subr.mxu0 0.0
      %397 = vmatpush1.msra.mxu0 %v379
      %398 = vmatprep.subr.mxu0 0.0
      %399 = vmatpush1.msra.mxu0 %v380
      %400 = vmatprep.subr.mxu0 0.0
      %401 = vmatpush1.msra.mxu0 0.0
      %402 = vmatprep.subr.mxu0 0.0
      %403 = vmatpush1.msra.mxu0 0.0
      %404 = vmatprep.subr.mxu0 0.0
      %405 = vmatpush1.msra.mxu0 0.0
      %406 = vmatprep.subr.mxu0 0.0
      %407 = vmatpush1.msra.mxu0 0.0
      %408 = vmatprep.subr.mxu0 0.0
      %409 = vmatpush1.msra.mxu0 0.0
      %410 = vmatprep.subr.mxu0 0.0
      %411 = vmatpush1.msra.mxu0 0.0
      %412 = vmatprep.subr.mxu0 0.0
      %413 = vmatpush1.msra.mxu0 0.0
      %414 = vmatprep.subr.mxu0 0.0
      %415 = vmatpush1.msra.mxu0 0.0
      %416 = vmatprep.subr.mxu0 0.0
      %417 = vmatpush1.msra.mxu0 0.0
      %418 = vmatprep.subr.mxu0 0.0
      %419 = vmatpush1.msra.mxu0 0.0
      %420 = vmatprep.subr.mxu0 0.0
      %421 = vmatpush1.msra.mxu0 0.0
      %422 = vmatprep.subr.mxu0 0.0
      %423 = vmatpush1.msra.mxu0 0.0
      %424 = vmatprep.subr.mxu0 0.0
      %425 = vmatpush1.msra.mxu0 0.0
      %426 = vmatprep.subr.mxu0 0.0
      %427 = vmatpush1.msra.mxu0 0.0
      %428 = vmatprep.subr.mxu0 0.0
      %429 = vmatpush1.msra.mxu0 0.0
      %430 = vmatprep.subr.mxu0 0.0
      %431 = vmatpush1.msra.mxu0 0.0
      %432 = vmatprep.subr.mxu0 0.0
      %433 = vmatpush1.msra.mxu0 0.0
      %434 = vmatprep.subr.mxu0 0.0
      %435 = vmatpush1.msra.mxu0 0.0
      %436 = vmatprep.subr.mxu0 0.0
      %437 = vmatpush1.msra.mxu0 0.0
      %438 = vmatprep.subr.mxu0 0.0
      %439 = vmatpush1.msra.mxu0 0.0
      %440 = vmatprep.subr.mxu0 0.0
      %441 = vmatpush1.msra.mxu0 0.0
      %442 = vmatprep.subr.mxu0 0.0
      %443 = vmatpush1.msra.mxu0 0.0
      %444 = vmatprep.subr.mxu0 0.0
      %445 = vmatpush1.msra.mxu0 0.0
      %446 = vmatprep.subr.mxu0 0.0
      %447 = vmatpush1.msra.mxu0 0.0
      %448 = vmatprep.subr.mxu0 0.0
      %449 = vmatpush1.msra.mxu0 0.0
      %450 = vmatprep.subr.mxu0 0.0
      %451 = vmatpush1.msra.mxu0 0.0
      %452 = vmatprep.subr.mxu0 0.0
      %453 = vmatpush1.msra.mxu0 0.0
      %454 = vmatprep.subr.mxu0 0.0
      %455 = vmatpush1.msra.mxu0 0.0
      %456 = vmatprep.mubr.f32.mxu0 0.0
      %457 = vmatmul.mubr.f32.gmra.mrb[0].mxu0 %v390
      %v458 = vpop.f32.mrb[0].mxu0
      %v459 = vadd.f32 %v386, %v458
      %v460 = vpop.f32.mrb[0].mxu0
      %461 = vdwg.mxu0
      %v462 = vmax.f32 %v459, 0.0
      %v463 = vld [vmem:[%s360] sm:$0xff]
      %v464 = vld [vmem:[%s360 + $0x8] sm:$0xff]
      %v465 = vld [vmem:[%s360 + $0x10] sm:$0xff]
      %v466 = vld [vmem:[%s360 + $0x18] sm:$0xff]
      %v467 = vld [vmem:[%s363] sm:$0x1]
      %v469 = vlaneseq
      %v470 = vshrl.u32 %v469, 7
      %v471 = vsub.s32 0, %v470
      %v472 = vrot.slane %v467, %v471
      %v475 = vsel %vm388, %v462, 0
      %477 = vmatprep.subr.mxu0 0.0
      %478 = vmatpush1.msra.mxu0 %v463
      %479 = vmatprep.subr.mxu0 0.0
      %480 = vmatpush1.msra.mxu0 %v464
      %481 = vmatprep.subr.mxu0 0.0
      %482 = vmatpush1.msra.mxu0 %v465
      %483 = vmatprep.subr.mxu0 0.0
      %484 = vmatpush1.msra.mxu0 %v466
      %485 = vmatprep.subr.mxu0 0.0
      %486 = vmatpush1.msra.mxu0 0.0
      %487 = vmatprep.subr.mxu0 0.0
      %488 = vmatpush1.msra.mxu0 0.0
      %489 = vmatprep.subr.mxu0 0.0
      %490 = vmatpush1.msra.mxu0 0.0
      %491 = vmatprep.subr.mxu0 0.0
      %492 = vmatpush1.msra.mxu0 0.0
      %493 = vmatprep.subr.mxu0 0.0
      %494 = vmatpush1.msra.mxu0 0.0
      %495 = vmatprep.subr.mxu0 0.0
      %496 = vmatpush1.msra.mxu0 0.0
      %497 = vmatprep.subr.mxu0 0.0
      %498 = vmatpush1.msra.mxu0 0.0
      %499 = vmatprep.subr.mxu0 0.0
      %500 = vmatpush1.msra.mxu0 0.0
      %501 = vmatprep.subr.mxu0 0.0
      %502 = vmatpush1.msra.mxu0 0.0
      %503 = vmatprep.subr.mxu0 0.0
      %504 = vmatpush1.msra.mxu0 0.0
      %505 = vmatprep.subr.mxu0 0.0
      %506 = vmatpush1.msra.mxu0 0.0
      %507 = vmatprep.subr.mxu0 0.0
      %508 = vmatpush1.msra.mxu0 0.0
      %509 = vmatprep.subr.mxu0 0.0
      %510 = vmatpush1.msra.mxu0 0.0
      %511 = vmatprep.subr.mxu0 0.0
      %512 = vmatpush1.msra.mxu0 0.0
      %513 = vmatprep.subr.mxu0 0.0
      %514 = vmatpush1.msra.mxu0 0.0
      %515 = vmatprep.subr.mxu0 0.0
      %516 = vmatpush1.msra.mxu0 0.0
      %517 = vmatprep.subr.mxu0 0.0
      %518 = vmatpush1.msra.mxu0 0.0
      %519 = vmatprep.subr.mxu0 0.0
      %520 = vmatpush1.msra.mxu0 0.0
      %521 = vmatprep.subr.mxu0 0.0
      %522 = vmatpush1.msra.mxu0 0.0
      %523 = vmatprep.subr.mxu0 0.0
      %524 = vmatpush1.msra.mxu0 0.0
      %525 = vmatprep.subr.mxu0 0.0
      %526 = vmatpush1.msra.mxu0 0.0
      %527 = vmatprep.subr.mxu0 0.0
      %528 = vmatpush1.msra.mxu0 0.0
      %529 = vmatprep.subr.mxu0 0.0
      %530 = vmatpush1.msra.mxu0 0.0
      %531 = vmatprep.subr.mxu0 0.0
      %532 = vmatpush1.msra.mxu0 0.0
      %533 = vmatprep.subr.mxu0 0.0
      %534 = vmatpush1.msra.mxu0 0.0
      %535 = vmatprep.subr.mxu0 0.0
      %536 = vmatpush1.msra.mxu0 0.0
      %537 = vmatprep.subr.mxu0 0.0
      %538 = vmatpush1.msra.mxu0 0.0
      %539 = vmatprep.subr.mxu0 0.0
      %540 = vmatpush1.msra.mxu0 0.0
      %541 = vmatprep.mubr.f32.mxu0 0.0
      %542 = vmatmul.mubr.f32.gmra.mrb[0].mxu0 %v475
      %v543 = vpop.f32.mrb[0].mxu0
      %v544 = vadd.f32 %v472, %v543
      %v545 = vpop.f32.mrb[0].mxu0
      %546 = vdwg.mxu0
      %v547 = vmax.f32 %v544, 0.0
      %v548 = vld [vmem:[%s368] sm:$0xff]
      %v549 = vld [vmem:[%s368 + $0x8] sm:$0xff]
      %v550 = vld [vmem:[%s368 + $0x10] sm:$0xff]
      %v551 = vld [vmem:[%s368 + $0x18] sm:$0xff]
      %v552 = vld [vmem:[%s371] sm:$0x1]
      %v554 = vlaneseq
      %v555 = vshrl.u32 %v554, 7
      %v556 = vsub.s32 0, %v555
      %v557 = vrot.slane %v552, %v556
      %v560 = vsel %vm388, %v547, 0
      %562 = vmatprep.subr.mxu0 0.0
      %563 = vmatpush1.msra.mxu0 %v548
      %564 = vmatprep.subr.mxu0 0.0
      %565 = vmatpush1.msra.mxu0 %v549
      %566 = vmatprep.subr.mxu0 0.0
      %567 = vmatpush1.msra.mxu0 %v550
      %568 = vmatprep.subr.mxu0 0.0
      %569 = vmatpush1.msra.mxu0 %v551
      %570 = vmatprep.subr.mxu0 0.0
      %571 = vmatpush1.msra.mxu0 0.0
      %572 = vmatprep.subr.mxu0 0.0
      %573 = vmatpush1.msra.mxu0 0.0
      %574 = vmatprep.subr.mxu0 0.0
      %575 = vmatpush1.msra.mxu0 0.0
      %576 = vmatprep.subr.mxu0 0.0
      %577 = vmatpush1.msra.mxu0 0.0
      %578 = vmatprep.subr.mxu0 0.0
      %579 = vmatpush1.msra.mxu0 0.0
      %580 = vmatprep.subr.mxu0 0.0
      %581 = vmatpush1.msra.mxu0 0.0
      %582 = vmatprep.subr.mxu0 0.0
      %583 = vmatpush1.msra.mxu0 0.0
      %584 = vmatprep.subr.mxu0 0.0
      %585 = vmatpush1.msra.mxu0 0.0
      %586 = vmatprep.subr.mxu0 0.0
      %587 = vmatpush1.msra.mxu0 0.0
      %588 = vmatprep.subr.mxu0 0.0
      %589 = vmatpush1.msra.mxu0 0.0
      %590 = vmatprep.subr.mxu0 0.0
      %591 = vmatpush1.msra.mxu0 0.0
      %592 = vmatprep.subr.mxu0 0.0
      %593 = vmatpush1.msra.mxu0 0.0
      %594 = vmatprep.subr.mxu0 0.0
      %595 = vmatpush1.msra.mxu0 0.0
      %596 = vmatprep.subr.mxu0 0.0
      %597 = vmatpush1.msra.mxu0 0.0
      %598 = vmatprep.subr.mxu0 0.0
      %599 = vmatpush1.msra.mxu0 0.0
      %600 = vmatprep.subr.mxu0 0.0
      %601 = vmatpush1.msra.mxu0 0.0
      %602 = vmatprep.subr.mxu0 0.0
      %603 = vmatpush1.msra.mxu0 0.0
      %604 = vmatprep.subr.mxu0 0.0
      %605 = vmatpush1.msra.mxu0 0.0
      %606 = vmatprep.subr.mxu0 0.0
      %607 = vmatpush1.msra.mxu0 0.0
      %608 = vmatprep.subr.mxu0 0.0
      %609 = vmatpush1.msra.mxu0 0.0
      %610 = vmatprep.subr.mxu0 0.0
      %611 = vmatpush1.msra.mxu0 0.0
      %612 = vmatprep.subr.mxu0 0.0
      %613 = vmatpush1.msra.mxu0 0.0
      %614 = vmatprep.subr.mxu0 0.0
      %615 = vmatpush1.msra.mxu0 0.0
      %616 = vmatprep.subr.mxu0 0.0
      %617 = vmatpush1.msra.mxu0 0.0
      %618 = vmatprep.subr.mxu0 0.0
      %619 = vmatpush1.msra.mxu0 0.0
      %620 = vmatprep.subr.mxu0 0.0
      %621 = vmatpush1.msra.mxu0 0.0
      %622 = vmatprep.subr.mxu0 0.0
      %623 = vmatpush1.msra.mxu0 0.0
      %624 = vmatprep.subr.mxu0 0.0
      %625 = vmatpush1.msra.mxu0 0.0
      %626 = vmatprep.mubr.f32.mxu0 0.0
      %627 = vmatmul.mubr.f32.gmra.mrb[0].mxu0 %v560
      %v628 = vpop.f32.mrb[0].mxu0
      %v629 = vadd.f32 %v557, %v628
      %v630 = vpop.f32.mrb[0].mxu0
      %631 = vdwg.mxu0
      %vm632 = vcmask 25600
      %633 = vst.msk [vmem:[%s375] sm:$0x3] %vm632, %v629
      %p634 = scmp.lt.s32.totalorder %s18, 3
      %s635 = scalar_select %p634, %s18, 3
      %s636 = smul.addr %s635, 2
      %s637 = scalar_lea.vmem %s7, %s636
      // Predicated region
      $region49: #{_mask_decoder_forward_impl.3} parent=47 // pred_check
        %p638 = pneg %p218
      $region50: #{_mask_decoder_forward_impl.3} parent=47 // pred_check_branch
        %640 = sbr.rel (%p638) target = $region52
      $region51: #{_mask_decoder_forward_impl.3} parent=47 // pred_region
        _
      $region52: #{_mask_decoder_forward_impl.3} parent=47 // pred_fallthru
        _
    $region48: #{_mask_decoder_forward_impl.3} parent=5 // pred_fallthru
      _
    %p641 = scmp.le.s32.totalorder 2, %s13
    // Predicated region
    $region53: #{_mask_decoder_forward_impl.3} parent=5 // pred_check
      %p642 = pneg %p641
    $region54: #{_mask_decoder_forward_impl.3} parent=5 // pred_check_branch
      %644 = sbr.rel (%p642) target = $region56
    $region55: #{_mask_decoder_forward_impl.3} parent=5 // pred_region
      %s645 = ssub.s32 %s13, 2
      // Predicated region
      $region57: #{_mask_decoder_forward_impl.3} parent=55 // pred_check
        %p646 = pneg %p224
      $region58: #{_mask_decoder_forward_impl.3} parent=55 // pred_check_branch
        %648 = sbr.rel (%p646) target = $region60
      $region59: #{_mask_decoder_forward_impl.3} parent=55 // pred_region
        %p649 = scmp.lt.s32.totalorder %s19, 3
        %s650 = scalar_select %p649, %s19, 3
        %s651 = smul.addr %s650, 2
        %s652 = scalar_lea.vmem %s7, %s651
      $region60: #{_mask_decoder_forward_impl.3} parent=55 // pred_fallthru
        _
    $region56: #{_mask_decoder_forward_impl.3} parent=5 // pred_fallthru
      _
  $region6: #{_mask_decoder_forward_impl.3} parent=0 // loop_footer
    %s17 = sadd.s32 1, %s13
  $region7: #{_mask_decoder_forward_impl.3} parent=0 // loop_footer_branch
    %12 = sbr.rel target = $region3
  $region8: #{_mask_decoder_forward_impl.3} parent=0 // loop_exit
    _

// kernel: _mask_decoder_forward_impl.4
$region0: #{_mask_decoder_forward_impl.4}
  #allocation0 [shape = 'u32[]', space=smem, size = 0x4, offset = 0x4, fixed_abs, tag = 'smem constant byte address 0x4 - core index']
  #allocation1 [shape = 'u32[144,128]{1,0:T(1,128)}', space=vmem, size = 0x12000, scoped, tag = 'internal scratch']
  %s0 = inlined_call_operand.vmem [shape: f32[2,64,32], index: 0, kind: input, shape index: {}]
  %s1 = inlined_call_operand.vmem [shape: f32[32,32], index: 1, kind: input, shape index: {}]
  %s2 = inlined_call_operand.vmem [shape: f32[1,32], index: 2, kind: input, shape index: {}]
  %s3 = inlined_call_operand.vmem [shape: f32[1,8], index: 3, kind: input, shape index: {}]
  %s4 = inlined_call_operand.vmem [shape: f32[1,8], index: 4, kind: input, shape index: {}]
  %s5 = inlined_call_operand.vmem [shape: f32[8,16], index: 5, kind: input, shape index: {}]
  %s6 = inlined_call_operand.vmem [shape: f32[1,16], index: 6, kind: input, shape index: {}]
  %s7 = inlined_call_operand.vmem [shape: f32[2,16,16], index: 7, kind: input, shape index: {}]
  %s8 = inlined_call_operand.vmem [shape: f32[2,64,64], index: 8, kind: output, shape index: {}]
  %s9 = sld [smem:[#allocation0]]
  $region65: #{_mask_decoder_forward_impl.4} parent=0
    _
  %s11 = ssub.s32 1, %s9
  %s12 = scalar_select 0, %s11, %s9
  loop: start=0, step=1, limit=4
  $region2: #{_mask_decoder_forward_impl.4} parent=0 // loop_pre_header
    _
  $region3: #{_mask_decoder_forward_impl.4} parent=0 // loop_header
    %s14 = sphi 0, %s18
    %p15 = scmp.ge.s32.totalorder %s14, 4
    %s21 = sphi 0, %s33
    %s22 = sphi 0, %s29
    %s23 = sphi 0, %s21
    %s24 = sphi 0, %s22
    %s25 = sphi 0, %s23
    %s26 = sphi 0, %s24
    %s38 = sphi 0, %s40
    %s41 = sphi 0, %s38
    %s42 = sphi 0, %s41
    %s58 = sphi 0, %s42
    %s62 = sphi 0, %s62
    %s64 = sphi 0, %s62
    %s65 = sphi 0, %s64
    %s79 = sphi 0, %s65
    %s83 = sphi 0, %s83
    %s85 = sphi 0, %s83
    %s86 = sphi 0, %s85
    %s100 = sphi 0, %s86
    %s104 = sphi 0, %s104
    %s106 = sphi 0, %s104
    %s107 = sphi 0, %s106
    %s121 = sphi 0, %s107
    %s125 = sphi 0, %s125
    %s127 = sphi 0, %s125
    %s128 = sphi 0, %s127
    %s142 = sphi 0, %s128
    %s146 = sphi 0, %s146
    %s148 = sphi 0, %s146
    %s149 = sphi 0, %s148
    %s163 = sphi 0, %s149
    %s167 = sphi 0, %s167
    %s169 = sphi 0, %s167
    %s170 = sphi 0, %s169
    %s184 = sphi 0, %s170
    %s190 = sphi 0, %s192
    %s193 = sphi 0, %s190
    %s194 = sphi 0, %s193
    %s210 = sphi 0, %s194
    %s218 = sphi 0, %s220
    %s221 = sphi 0, %s218
    %s222 = sphi 0, %s221
    %s238 = sphi 0, %s222
  $region4: #{_mask_decoder_forward_impl.4} parent=0 // loop_header_branch
    %17 = sbr.rel (%p15) target = $region8
  $region5: #{_mask_decoder_forward_impl.4} parent=0 // loop_body
    %s19 = ssub.s32 %s14, 1
    %s20 = ssub.s32 %s14, 2
    %s27 = sadd.s32 1, %s22
    %p28 = scmp.ge.s32.totalorder %s27, 1
    %s29 = scalar_select %p28, 0, %s27
    %s30 = sadd.s32 1, %s21
    %s31 = scalar_select %p28, %s30, %s21
    %p32 = scmp.ge.s32.totalorder %s31, 2
    %s33 = scalar_select %p32, 0, %s31
    %s34 = ssub.s32 %s21, %s33
    %s35 = ssub.s32 %s22, %s29
    %s36 = sor.u32 %s34, %s35
    %p37 = scmp.eq.s32.totalorder %s36, 0
    %s39 = sadd.s32 %s38, 1
    %s40 = scalar_select %p37, %s38, %s39
    %p43 = pneg %p37
    %p44 = scmp.eq.s32.totalorder %s14, 1
    %p45 = por %p43, %p44
    %p46 = scmp.ne.s32.totalorder %s38, %s41
    %p47 = scmp.eq.s32.totalorder %s14, 0
    %p48 = por %p46, %p47
    %p49 = scmp.ne.s32.totalorder %s38, %s41
    %p50 = scmp.eq.s32.totalorder %s19, 1
    %p51 = por %p49, %p50
    %p52 = scmp.ne.s32.totalorder %s41, %s42
    %p53 = scmp.eq.s32.totalorder %s19, 0
    %p54 = por %p52, %p53
    %p55 = scmp.ne.s32.totalorder %s41, %s42
    %p56 = scmp.eq.s32.totalorder %s20, 1
    %p57 = por %p55, %p56
    %p59 = scmp.ne.s32.totalorder %s42, %s58
    %p60 = scmp.eq.s32.totalorder %s20, 0
    %p61 = por %p59, %p60
    %s63 = sadd.s32 %s62, 1
    %p66 = scmp.eq.s32.totalorder %s14, 1
    %p67 = scmp.ne.s32.totalorder %s62, %s64
    %p68 = scmp.eq.s32.totalorder %s14, 0
    %p69 = por %p67, %p68
    %p70 = scmp.ne.s32.totalorder %s62, %s64
    %p71 = scmp.eq.s32.totalorder %s19, 1
    %p72 = por %p70, %p71
    %p73 = scmp.ne.s32.totalorder %s64, %s65
    %p74 = scmp.eq.s32.totalorder %s19, 0
    %p75 = por %p73, %p74
    %p76 = scmp.ne.s32.totalorder %s64, %s65
    %p77 = scmp.eq.s32.totalorder %s20, 1
    %p78 = por %p76, %p77
    %p80 = scmp.ne.s32.totalorder %s65, %s79
    %p81 = scmp.eq.s32.totalorder %s20, 0
    %p82 = por %p80, %p81
    %s84 = sadd.s32 %s83, 1
    %p87 = scmp.eq.s32.totalorder %s14, 1
    %p88 = scmp.ne.s32.totalorder %s83, %s85
    %p89 = scmp.eq.s32.totalorder %s14, 0
    %p90 = por %p88, %p89
    %p91 = scmp.ne.s32.totalorder %s83, %s85
    %p92 = scmp.eq.s32.totalorder %s19, 1
    %p93 = por %p91, %p92
    %p94 = scmp.ne.s32.totalorder %s85, %s86
    %p95 = scmp.eq.s32.totalorder %s19, 0
    %p96 = por %p94, %p95
    %p97 = scmp.ne.s32.totalorder %s85, %s86
    %p98 = scmp.eq.s32.totalorder %s20, 1
    %p99 = por %p97, %p98
    %p101 = scmp.ne.s32.totalorder %s86, %s100
    %p102 = scmp.eq.s32.totalorder %s20, 0
    %p103 = por %p101, %p102
    %s105 = sadd.s32 %s104, 1
    %p108 = scmp.eq.s32.totalorder %s14, 1
    %p109 = scmp.ne.s32.totalorder %s104, %s106
    %p110 = scmp.eq.s32.totalorder %s14, 0
    %p111 = por %p109, %p110
    %p112 = scmp.ne.s32.totalorder %s104, %s106
    %p113 = scmp.eq.s32.totalorder %s19, 1
    %p114 = por %p112, %p113
    %p115 = scmp.ne.s32.totalorder %s106, %s107
    %p116 = scmp.eq.s32.totalorder %s19, 0
    %p117 = por %p115, %p116
    %p118 = scmp.ne.s32.totalorder %s106, %s107
    %p119 = scmp.eq.s32.totalorder %s20, 1
    %p120 = por %p118, %p119
    %p122 = scmp.ne.s32.totalorder %s107, %s121
    %p123 = scmp.eq.s32.totalorder %s20, 0
    %p124 = por %p122, %p123
    %s126 = sadd.s32 %s125, 1
    %p129 = scmp.eq.s32.totalorder %s14, 1
    %p130 = scmp.ne.s32.totalorder %s125, %s127
    %p131 = scmp.eq.s32.totalorder %s14, 0
    %p132 = por %p130, %p131
    %p133 = scmp.ne.s32.totalorder %s125, %s127
    %p134 = scmp.eq.s32.totalorder %s19, 1
    %p135 = por %p133, %p134
    %p136 = scmp.ne.s32.totalorder %s127, %s128
    %p137 = scmp.eq.s32.totalorder %s19, 0
    %p138 = por %p136, %p137
    %p139 = scmp.ne.s32.totalorder %s127, %s128
    %p140 = scmp.eq.s32.totalorder %s20, 1
    %p141 = por %p139, %p140
    %p143 = scmp.ne.s32.totalorder %s128, %s142
    %p144 = scmp.eq.s32.totalorder %s20, 0
    %p145 = por %p143, %p144
    %s147 = sadd.s32 %s146, 1
    %p150 = scmp.eq.s32.totalorder %s14, 1
    %p151 = scmp.ne.s32.totalorder %s146, %s148
    %p152 = scmp.eq.s32.totalorder %s14, 0
    %p153 = por %p151, %p152
    %p154 = scmp.ne.s32.totalorder %s146, %s148
    %p155 = scmp.eq.s32.totalorder %s19, 1
    %p156 = por %p154, %p155
    %p157 = scmp.ne.s32.totalorder %s148, %s149
    %p158 = scmp.eq.s32.totalorder %s19, 0
    %p159 = por %p157, %p158
    %p160 = scmp.ne.s32.totalorder %s148, %s149
    %p161 = scmp.eq.s32.totalorder %s20, 1
    %p162 = por %p160, %p161
    %p164 = scmp.ne.s32.totalorder %s149, %s163
    %p165 = scmp.eq.s32.totalorder %s20, 0
    %p166 = por %p164, %p165
    %s168 = sadd.s32 %s167, 1
    %p171 = scmp.eq.s32.totalorder %s14, 1
    %p172 = scmp.ne.s32.totalorder %s167, %s169
    %p173 = scmp.eq.s32.totalorder %s14, 0
    %p174 = por %p172, %p173
    %p175 = scmp.ne.s32.totalorder %s167, %s169
    %p176 = scmp.eq.s32.totalorder %s19, 1
    %p177 = por %p175, %p176
    %p178 = scmp.ne.s32.totalorder %s169, %s170
    %p179 = scmp.eq.s32.totalorder %s19, 0
    %p180 = por %p178, %p179
    %p181 = scmp.ne.s32.totalorder %s169, %s170
    %p182 = scmp.eq.s32.totalorder %s20, 1
    %p183 = por %p181, %p182
    %p185 = scmp.ne.s32.totalorder %s170, %s184
    %p186 = scmp.eq.s32.totalorder %s20, 0
    %p187 = por %p185, %p186
    %s188 = ssub.s32 %s21, %s33
    %p189 = scmp.eq.s32.totalorder %s188, 0
    %s191 = sadd.s32 %s190, 1
    %s192 = scalar_select %p189, %s190, %s191
    %p195 = pneg %p189
    %p196 = scmp.eq.s32.totalorder %s14, 1
    %p197 = por %p195, %p196
    %p198 = scmp.ne.s32.totalorder %s190, %s193
    %p199 = scmp.eq.s32.totalorder %s14, 0
    %p200 = por %p198, %p199
    %p201 = scmp.ne.s32.totalorder %s190, %s193
    %p202 = scmp.eq.s32.totalorder %s19, 1
    %p203 = por %p201, %p202
    %p204 = scmp.ne.s32.totalorder %s193, %s194
    %p205 = scmp.eq.s32.totalorder %s19, 0
    %p206 = por %p204, %p205
    %p207 = scmp.ne.s32.totalorder %s193, %s194
    %p208 = scmp.eq.s32.totalorder %s20, 1
    %p209 = por %p207, %p208
    %p211 = scmp.ne.s32.totalorder %s194, %s210
    %p212 = scmp.eq.s32.totalorder %s20, 0
    %p213 = por %p211, %p212
    %s214 = ssub.s32 %s21, %s33
    %s215 = ssub.s32 %s22, %s29
    %s216 = sor.u32 %s214, %s215
    %p217 = scmp.eq.s32.totalorder %s216, 0
    %s219 = sadd.s32 %s218, 1
    %s220 = scalar_select %p217, %s218, %s219
    %p223 = pneg %p217
    %p224 = scmp.eq.s32.totalorder %s14, 1
    %p225 = por %p223, %p224
    %p226 = scmp.ne.s32.totalorder %s218, %s221
    %p227 = scmp.eq.s32.totalorder %s14, 0
    %p228 = por %p226, %p227
    %p229 = scmp.ne.s32.totalorder %s218, %s221
    %p230 = scmp.eq.s32.totalorder %s19, 1
    %p231 = por %p229, %p230
    %p232 = scmp.ne.s32.totalorder %s221, %s222
    %p233 = scmp.eq.s32.totalorder %s19, 0
    %p234 = por %p232, %p233
    %p235 = scmp.ne.s32.totalorder %s221, %s222
    %p236 = scmp.eq.s32.totalorder %s20, 1
    %p237 = por %p235, %p236
    %p239 = scmp.ne.s32.totalorder %s222, %s238
    %p240 = scmp.eq.s32.totalorder %s20, 0
    %p241 = por %p239, %p240
    %p242 = scmp.le.s32.totalorder 1, %s14
    %p243 = scmp.lt.s32.totalorder %s14, 3
    %p244 = pnand %p242, %p243
    %p245 = pneg %p244
    // Predicated region
    $region9: #{_mask_decoder_forward_impl.4} parent=5 // pred_check
      _
    $region10: #{_mask_decoder_forward_impl.4} parent=5 // pred_check_branch
      %247 = sbr.rel (%p244) target = $region12
    $region11: #{_mask_decoder_forward_impl.4} parent=5 // pred_region
      %s248 = ssub.s32 %s14, 1
      // Predicated region
      $region13: #{_mask_decoder_forward_impl.4} parent=11 // pred_check
        %p249 = pneg %p75
      $region14: #{_mask_decoder_forward_impl.4} parent=11 // pred_check_branch
        %251 = sbr.rel (%p249) target = $region16
      $region15: #{_mask_decoder_forward_impl.4} parent=11 // pred_region
        _
      $region16: #{_mask_decoder_forward_impl.4} parent=11 // pred_fallthru
        _
      // Predicated region
      $region17: #{_mask_decoder_forward_impl.4} parent=11 // pred_check
        %p252 = pneg %p96
      $region18: #{_mask_decoder_forward_impl.4} parent=11 // pred_check_branch
        %254 = sbr.rel (%p252) target = $region20
      $region19: #{_mask_decoder_forward_impl.4} parent=11 // pred_region
        _
      $region20: #{_mask_decoder_forward_impl.4} parent=11 // pred_fallthru
        _
      // Predicated region
      $region21: #{_mask_decoder_forward_impl.4} parent=11 // pred_check
        %p255 = pneg %p117
      $region22: #{_mask_decoder_forward_impl.4} parent=11 // pred_check_branch
        %257 = sbr.rel (%p255) target = $region24
      $region23: #{_mask_decoder_forward_impl.4} parent=11 // pred_region
        _
      $region24: #{_mask_decoder_forward_impl.4} parent=11 // pred_fallthru
        _
      // Predicated region
      $region25: #{_mask_decoder_forward_impl.4} parent=11 // pred_check
        %p258 = pneg %p138
      $region26: #{_mask_decoder_forward_impl.4} parent=11 // pred_check_branch
        %260 = sbr.rel (%p258) target = $region28
      $region27: #{_mask_decoder_forward_impl.4} parent=11 // pred_region
        _
      $region28: #{_mask_decoder_forward_impl.4} parent=11 // pred_fallthru
        _
      // Predicated region
      $region29: #{_mask_decoder_forward_impl.4} parent=11 // pred_check
        %p261 = pneg %p159
      $region30: #{_mask_decoder_forward_impl.4} parent=11 // pred_check_branch
        %263 = sbr.rel (%p261) target = $region32
      $region31: #{_mask_decoder_forward_impl.4} parent=11 // pred_region
        _
      $region32: #{_mask_decoder_forward_impl.4} parent=11 // pred_fallthru
        _
      // Predicated region
      $region33: #{_mask_decoder_forward_impl.4} parent=11 // pred_check
        %p264 = pneg %p180
      $region34: #{_mask_decoder_forward_impl.4} parent=11 // pred_check_branch
        %266 = sbr.rel (%p264) target = $region36
      $region35: #{_mask_decoder_forward_impl.4} parent=11 // pred_region
        _
      $region36: #{_mask_decoder_forward_impl.4} parent=11 // pred_fallthru
        _
    $region12: #{_mask_decoder_forward_impl.4} parent=5 // pred_fallthru
      _
    %p267 = scmp.lt.s32.totalorder %s14, 2
    // Predicated region
    $region37: #{_mask_decoder_forward_impl.4} parent=5 // pred_check
      %p268 = pneg %p267
    $region38: #{_mask_decoder_forward_impl.4} parent=5 // pred_check_branch
      %270 = sbr.rel (%p268) target = $region40
    $region39: #{_mask_decoder_forward_impl.4} parent=5 // pred_region
      // Predicated region
      $region41: #{_mask_decoder_forward_impl.4} parent=39 // pred_check
        %p271 = pneg %p48
      $region42: #{_mask_decoder_forward_impl.4} parent=39 // pred_check_branch
        %273 = sbr.rel (%p271) target = $region44
      $region43: #{_mask_decoder_forward_impl.4} parent=39 // pred_region
        %s274 = smul.u32 8, %s22
        %p275 = scmp.lt.s32.totalorder %s21, 1
        %s276 = scalar_select %p275, %s21, 1
        %p277 = scmp.lt.s32.totalorder %s274, 7
        %s278 = scalar_select %p277, %s274, 7
        %s279 = smul.addr %s276, 8
        %s280 = sadd.s32 %s278, %s279
        %s281 = smul.addr %s280, 8
        %s282 = scalar_lea.vmem %s0, %s281
        %s283 = smul.u32 8, %s22
      $region44: #{_mask_decoder_forward_impl.4} parent=39 // pred_fallthru
        _
      // Predicated region
      $region45: #{_mask_decoder_forward_impl.4} parent=39 // pred_check
        %p284 = pneg %p200
      $region46: #{_mask_decoder_forward_impl.4} parent=39 // pred_check_branch
        %286 = sbr.rel (%p284) target = $region48
      $region47: #{_mask_decoder_forward_impl.4} parent=39 // pred_region
        %p287 = scmp.lt.s32.totalorder %s21, 1
        %s288 = scalar_select %p287, %s21, 1
        %s289 = smul.addr %s288, 2
        %s290 = smul.addr %s289, 8
        %s291 = scalar_lea.vmem %s7, %s290
      $region48: #{_mask_decoder_forward_impl.4} parent=39 // pred_fallthru
        _
    $region40: #{_mask_decoder_forward_impl.4} parent=5 // pred_fallthru
      _
    %p292 = scmp.le.s32.totalorder 1, %s14
    %p293 = scmp.lt.s32.totalorder %s14, 3
    %p294 = pnand %p292, %p293
    %p295 = pneg %p294
    // Predicated region
    $region49: #{_mask_decoder_forward_impl.4} parent=5 // pred_check
      _
    $region50: #{_mask_decoder_forward_impl.4} parent=5 // pred_check_branch
      %297 = sbr.rel (%p294) target = $region52
    $region51: #{_mask_decoder_forward_impl.4} parent=5 // pred_region
      %s298 = ssub.s32 %s14, 1
      %s299 = smul.u32 8, %s24
      %p300 = scmp.lt.s32.totalorder %s23, 1
      %s301 = scalar_select %p300, %s23, 1
      %p302 = scmp.lt.s32.totalorder %s299, 7
      %s303 = scalar_select %p302, %s299, 7
      %s304 = smul.addr %s301, 8
      %s305 = sadd.s32 %s303, %s304
      %s306 = smul.addr %s305, 8
      %s307 = scalar_lea.vmem %s0, %s306
      %p308 = pneg %p54
      %p309 = pneg %p51
      %p310 = pneg %p75
      %p311 = pneg %p72
      %p312 = pneg %p96
      %p313 = pneg %p93
      %p314 = pneg %p117
      %p315 = pneg %p114
      %p316 = pneg %p138
      %p317 = pneg %p135
      %p318 = pneg %p159
      %p319 = pneg %p156
      %p320 = pneg %p180
      %p321 = pneg %p177
      %p322 = scmp.lt.s32.totalorder %s23, 1
      %s323 = scalar_select %p322, %s23, 1
      %s324 = smul.addr %s323, 2
      %s325 = smul.addr %s324, 8
      %s326 = scalar_lea.vmem %s7, %s325
      %p327 = pneg %p206
      %p328 = pneg %p203
      %p329 = pneg %p234
      %p330 = pneg %p231
      %s331 = smul.u32 8, %s24
      %p332 = scmp.lt.s32.totalorder %s23, 1
      %s333 = scalar_select %p332, %s23, 1
      %p334 = scmp.lt.s32.totalorder %s331, 7
      %s335 = scalar_select %p334, %s331, 7
      %s336 = smul.addr %s333, 8
      %s337 = sadd.s32 %s335, %s336
      %s338 = smul.addr %s337, 8
      %s339 = scalar_lea.vmem %s8, %s338
      %s340 = smul.u32 8, %s24
      %p341 = scmp.lt.s32.totalorder %s23, 1
      %s342 = scalar_select %p341, %s23, 1
      %p343 = scmp.lt.s32.totalorder %s340, 7
      %s344 = scalar_select %p343, %s340, 7
      %s345 = smul.addr %s342, 8
      %s346 = sadd.s32 %s344, %s345
      %s347 = smul.addr %s346, 8
      %s348 = scalar_lea.vmem %s0, %s347
      %s349 = smul.u32 8, %s24
      %p350 = scmp.lt.s32.totalorder %s23, 1
      %s351 = scalar_select %p350, %s23, 1
      %s352 = smul.addr %s351, 2
      %s353 = smul.addr %s352, 8
      %s354 = scalar_lea.vmem %s7, %s353
      %s355 = smul.u32 8, %s24
      %p356 = scmp.lt.s32.totalorder %s23, 1
      %s357 = scalar_select %p356, %s23, 1
      %p358 = scmp.lt.s32.totalorder %s355, 7
      %s359 = scalar_select %p358, %s355, 7
      %s360 = smul.addr %s357, 8
      %s361 = sadd.s32 %s359, %s360
      %s362 = smul.addr %s361, 8
      %s363 = scalar_lea.vmem %s8, %s362
      %s364 = smul.u32 8, %s24
      %v365 = vld [vmem:[%s348] sm:$0xff]
      %v366 = vld [vmem:[%s348 + $0x8] sm:$0xff]
      %v367 = vld [vmem:[%s348 + $0x10] sm:$0xff]
      %v368 = vld [vmem:[%s348 + $0x18] sm:$0xff]
      %v369 = vld [vmem:[%s348 + $0x20] sm:$0xff]
      %v370 = vld [vmem:[%s348 + $0x28] sm:$0xff]
      %v371 = vld [vmem:[%s348 + $0x30] sm:$0xff]
      %v372 = vld [vmem:[%s348 + $0x38] sm:$0xff]
      %v373 = vld [vmem:[%s1] sm:$0xff]
      %v374 = vld [vmem:[%s1 + $0x8] sm:$0xff]
      %v375 = vld [vmem:[%s1 + $0x10] sm:$0xff]
      %v376 = vld [vmem:[%s1 + $0x18] sm:$0xff]
      %v377 = vld [vmem:[%s2] sm:$0x1]
      %v379 = vlaneseq
      %v380 = vshrl.u32 %v379, 7
      %v381 = vsub.s32 0, %v380
      %v382 = vrot.slane %v377, %v381
      %vm384 = vcmask 261120
      %v386 = vsel %vm384, %v365, 0
      %v389 = vsel %vm384, %v366, 0
      %v392 = vsel %vm384, %v367, 0
      %v395 = vsel %vm384, %v368, 0
      %v398 = vsel %vm384, %v369, 0
      %v401 = vsel %vm384, %v370, 0
      %v404 = vsel %vm384, %v371, 0
      %v407 = vsel %vm384, %v372, 0
      %409 = vmatprep.subr.mxu0 0.0
      %410 = vmatpush1.msra.mxu0 %v373
      %411 = vmatprep.subr.mxu0 0.0
      %412 = vmatpush1.msra.mxu0 %v374
      %413 = vmatprep.subr.mxu0 0.0
      %414 = vmatpush1.msra.mxu0 %v375
      %415 = vmatprep.subr.mxu0 0.0
      %416 = vmatpush1.msra.mxu0 %v376
      %417 = vmatprep.subr.mxu0 0.0
      %418 = vmatpush1.msra.mxu0 0.0
      %419 = vmatprep.subr.mxu0 0.0
      %420 = vmatpush1.msra.mxu0 0.0
      %421 = vmatprep.subr.mxu0 0.0
      %422 = vmatpush1.msra.mxu0 0.0
      %423 = vmatprep.subr.mxu0 0.0
      %424 = vmatpush1.msra.mxu0 0.0
      %425 = vmatprep.subr.mxu0 0.0
      %426 = vmatpush1.msra.mxu0 0.0
      %427 = vmatprep.subr.mxu0 0.0
      %428 = vmatpush1.msra.mxu0 0.0
      %429 = vmatprep.subr.mxu0 0.0
      %430 = vmatpush1.msra.mxu0 0.0
      %431 = vmatprep.subr.mxu0 0.0
      %432 = vmatpush1.msra.mxu0 0.0
      %433 = vmatprep.subr.mxu0 0.0
      %434 = vmatpush1.msra.mxu0 0.0
      %435 = vmatprep.subr.mxu0 0.0
      %436 = vmatpush1.msra.mxu0 0.0
      %437 = vmatprep.subr.mxu0 0.0
      %438 = vmatpush1.msra.mxu0 0.0
      %439 = vmatprep.subr.mxu0 0.0
      %440 = vmatpush1.msra.mxu0 0.0
      %441 = vmatprep.subr.mxu0 0.0
      %442 = vmatpush1.msra.mxu0 0.0
      %443 = vmatprep.subr.mxu0 0.0
      %444 = vmatpush1.msra.mxu0 0.0
      %445 = vmatprep.subr.mxu0 0.0
      %446 = vmatpush1.msra.mxu0 0.0
      %447 = vmatprep.subr.mxu0 0.0
      %448 = vmatpush1.msra.mxu0 0.0
      %449 = vmatprep.subr.mxu0 0.0
      %450 = vmatpush1.msra.mxu0 0.0
      %451 = vmatprep.subr.mxu0 0.0
      %452 = vmatpush1.msra.mxu0 0.0
      %453 = vmatprep.subr.mxu0 0.0
      %454 = vmatpush1.msra.mxu0 0.0
      %455 = vmatprep.subr.mxu0 0.0
      %456 = vmatpush1.msra.mxu0 0.0
      %457 = vmatprep.subr.mxu0 0.0
      %458 = vmatpush1.msra.mxu0 0.0
      %459 = vmatprep.subr.mxu0 0.0
      %460 = vmatpush1.msra.mxu0 0.0
      %461 = vmatprep.subr.mxu0 0.0
      %462 = vmatpush1.msra.mxu0 0.0
      %463 = vmatprep.subr.mxu0 0.0
      %464 = vmatpush1.msra.mxu0 0.0
      %465 = vmatprep.subr.mxu0 0.0
      %466 = vmatpush1.msra.mxu0 0.0
      %467 = vmatprep.subr.mxu0 0.0
      %468 = vmatpush1.msra.mxu0 0.0
      %469 = vmatprep.subr.mxu0 0.0
      %470 = vmatpush1.msra.mxu0 0.0
      %471 = vmatprep.subr.mxu0 0.0
      %472 = vmatpush1.msra.mxu0 0.0
      %473 = vmatprep.mubr.f32.mxu0 0.0
      %474 = vmatmul.mubr.f32.gmra.mrb[0].mxu0 %v386
      %v475 = vpop.f32.mrb[0].mxu0
      %v476 = vadd.f32 %v382, %v475
      %v477 = vpop.f32.mrb[0].mxu0
      %478 = vmatprep.mubr.f32.mxu0 0.0
      %479 = vmatmul.mubr.f32.gmra.mrb[0].mxu0 %v389
      %v480 = vpop.f32.mrb[0].mxu0
      %v481 = vadd.f32 %v382, %v480
      %v482 = vpop.f32.mrb[0].mxu0
      %483 = vmatprep.mubr.f32.mxu0 0.0
      %484 = vmatmul.mubr.f32.gmra.mrb[0].mxu0 %v392
      %v485 = vpop.f32.mrb[0].mxu0
      %v486 = vadd.f32 %v382, %v485
      %v487 = vpop.f32.mrb[0].mxu0
      %488 = vmatprep.mubr.f32.mxu0 0.0
      %489 = vmatmul.mubr.f32.gmra.mrb[0].mxu0 %v395
      %v490 = vpop.f32.mrb[0].mxu0
      %v491 = vadd.f32 %v382, %v490
      %v492 = vpop.f32.mrb[0].mxu0
      %493 = vmatprep.mubr.f32.mxu0 0.0
      %494 = vmatmul.mubr.f32.gmra.mrb[0].mxu0 %v398
      %v495 = vpop.f32.mrb[0].mxu0
      %v496 = vadd.f32 %v382, %v495
      %v497 = vpop.f32.mrb[0].mxu0
      %498 = vmatprep.mubr.f32.mxu0 0.0
      %499 = vmatmul.mubr.f32.gmra.mrb[0].mxu0 %v401
      %v500 = vpop.f32.mrb[0].mxu0
      %v501 = vadd.f32 %v382, %v500
      %v502 = vpop.f32.mrb[0].mxu0
      %503 = vmatprep.mubr.f32.mxu0 0.0
      %504 = vmatmul.mubr.f32.gmra.mrb[0].mxu0 %v404
      %v505 = vpop.f32.mrb[0].mxu0
      %v506 = vadd.f32 %v382, %v505
      %v507 = vpop.f32.mrb[0].mxu0
      %508 = vmatprep.mubr.f32.mxu0 0.0
      %509 = vmatmul.mubr.f32.gmra.mrb[0].mxu0 %v407
      %v510 = vpop.f32.mrb[0].mxu0
      %v511 = vadd.f32 %v382, %v510
      %v512 = vpop.f32.mrb[0].mxu0
      %513 = vdwg.mxu0
      %v514 = vld [vmem:[%s3] sm:$0x1]
      %v515 = vld [vmem:[%s4] sm:$0x1]
      %v516 = vld [vmem:[%s5] sm:$0xff]
      %v517 = vld [vmem:[%s6] sm:$0x1]
      %v518 = vld [vmem:[%s354] sm:$0xff]
      %v519 = vld [vmem:[%s354 + $0x8] sm:$0xff]
      %vm520 = vcmask 64512
      %v521 = vsel %vm520, %v476, 0.0
      %522 = vadd.xlane.f32.xlu0 %v521
      %v523 = vpop.xlane.xlu0 %522
      %v524 = vsel %vm520, %v481, 0.0
      %525 = vadd.xlane.f32.xlu0 %v524
      %v526 = vpop.xlane.xlu0 %525
      %v527 = vsel %vm520, %v486, 0.0
      %528 = vadd.xlane.f32.xlu0 %v527
      %v529 = vpop.xlane.xlu0 %528
      %v530 = vsel %vm520, %v491, 0.0
      %531 = vadd.xlane.f32.xlu0 %v530
      %v532 = vpop.xlane.xlu0 %531
      %v533 = vsel %vm520, %v496, 0.0
      %534 = vadd.xlane.f32.xlu0 %v533
      %v535 = vpop.xlane.xlu0 %534
      %v536 = vsel %vm520, %v501, 0.0
      %537 = vadd.xlane.f32.xlu0 %v536
      %v538 = vpop.xlane.xlu0 %537
      %v539 = vsel %vm520, %v506, 0.0
      %540 = vadd.xlane.f32.xlu0 %v539
      %v541 = vpop.xlane.xlu0 %540
      %v542 = vsel %vm520, %v511, 0.0
      %543 = vadd.xlane.f32.xlu0 %v542
      %v544 = vpop.xlane.xlu0 %543
      %v545 = vrcp.pop 8.0
      %v546 = vmul.f32 %v523, %v545
      %v547 = vmul.f32 %v526, %v545
      %v548 = vmul.f32 %v529, %v545
      %v549 = vmul.f32 %v532, %v545
      %v550 = vmul.f32 %v535, %v545
      %v551 = vmul.f32 %v538, %v545
      %v552 = vmul.f32 %v541, %v545
      %v553 = vmul.f32 %v544, %v545
      %v554 = vsub.f32 %v476, %v546
      %v555 = vsub.f32 %v481, %v547
      %v556 = vsub.f32 %v486, %v548
      %v557 = vsub.f32 %v491, %v549
      %v558 = vsub.f32 %v496, %v550
      %v559 = vsub.f32 %v501, %v551
      %v560 = vsub.f32 %v506, %v552
      %v561 = vsub.f32 %v511, %v553
      %v562 = vmul.f32 %v554, %v554
      %v563 = vmul.f32 %v555, %v555
      %v564 = vmul.f32 %v556, %v556
      %v565 = vmul.f32 %v557, %v557
      %v566 = vmul.f32 %v558, %v558
      %v567 = vmul.f32 %v559, %v559
      %v568 = vmul.f32 %v560, %v560
      %v569 = vmul.f32 %v561, %v561
      %v570 = vsel %vm520, %v562, 0.0
      %571 = vadd.xlane.f32.xlu0 %v570
      %v572 = vpop.xlane.xlu0 %571
      %v573 = vsel %vm520, %v563, 0.0
      %574 = vadd.xlane.f32.xlu0 %v573
      %v575 = vpop.xlane.xlu0 %574
      %v576 = vsel %vm520, %v564, 0.0
      %577 = vadd.xlane.f32.xlu0 %v576
      %v578 = vpop.xlane.xlu0 %577
      %v579 = vsel %vm520, %v565, 0.0
      %580 = vadd.xlane.f32.xlu0 %v579
      %v581 = vpop.xlane.xlu0 %580
      %v582 = vsel %vm520, %v566, 0.0
      %583 = vadd.xlane.f32.xlu0 %v582
      %v584 = vpop.xlane.xlu0 %583
      %v585 = vsel %vm520, %v567, 0.0
      %586 = vadd.xlane.f32.xlu0 %v585
      %v587 = vpop.xlane.xlu0 %586
      %v588 = vsel %vm520, %v568, 0.0
      %589 = vadd.xlane.f32.xlu0 %v588
      %v590 = vpop.xlane.xlu0 %589
      %v591 = vsel %vm520, %v569, 0.0
      %592 = vadd.xlane.f32.xlu0 %v591
      %v593 = vpop.xlane.xlu0 %592
      %v594 = vmul.f32 %v572, %v545
      %v595 = vmul.f32 %v575, %v545
      %v596 = vmul.f32 %v578, %v545
      %v597 = vmul.f32 %v581, %v545
      %v598 = vmul.f32 %v584, %v545
      %v599 = vmul.f32 %v587, %v545
      %v600 = vmul.f32 %v590, %v545
      %v601 = vmul.f32 %v593, %v545
      %v602 = vadd.f32 %v594, 1e-06
      %v603 = vadd.f32 %v595, 1e-06
      %v604 = vadd.f32 %v596, 1e-06
      %v605 = vadd.f32 %v597, 1e-06
      %v606 = vadd.f32 %v598, 1e-06
      %v607 = vadd.f32 %v599, 1e-06
      %v608 = vadd.f32 %v600, 1e-06
      %v609 = vadd.f32 %v601, 1e-06
      %v610 = vrsqrt.pop %v602
      %v611 = vrsqrt.pop %v603
      %v612 = vrsqrt.pop %v604
      %v613 = vrsqrt.pop %v605
      %v614 = vrsqrt.pop %v606
      %v615 = vrsqrt.pop %v607
      %v616 = vrsqrt.pop %v608
      %v617 = vrsqrt.pop %v609
      %v618 = vmul.f32 %v554, %v610
      %v619 = vmul.f32 %v555, %v611
      %v620 = vmul.f32 %v556, %v612
      %v621 = vmul.f32 %v557, %v613
      %v622 = vmul.f32 %v558, %v614
      %v623 = vmul.f32 %v559, %v615
      %v624 = vmul.f32 %v560, %v616
      %v625 = vmul.f32 %v561, %v617
      %v627 = vlaneseq
      %v628 = vshrl.u32 %v627, 7
      %v629 = vsub.s32 0, %v628
      %v630 = vrot.slane %v514, %v629
      %v632 = vmul.f32 %v618, %v630
      %v633 = vmul.f32 %v619, %v630
      %v634 = vmul.f32 %v620, %v630
      %v635 = vmul.f32 %v621, %v630
      %v636 = vmul.f32 %v622, %v630
      %v637 = vmul.f32 %v623, %v630
      %v638 = vmul.f32 %v624, %v630
      %v639 = vmul.f32 %v625, %v630
      %v641 = vlaneseq
      %v642 = vshrl.u32 %v641, 7
      %v643 = vsub.s32 0, %v642
      %v644 = vrot.slane %v515, %v643
      %v646 = vadd.f32 %v632, %v644
      %v647 = vadd.f32 %v633, %v644
      %v648 = vadd.f32 %v634, %v644
      %v649 = vadd.f32 %v635, %v644
      %v650 = vadd.f32 %v636, %v644
      %v651 = vadd.f32 %v637, %v644
      %v652 = vadd.f32 %v638, %v644
      %v653 = vadd.f32 %v639, %v644
      %v654 = vmul.f32 %v646, 0.5
      %v655 = vmul.f32 %v647, 0.5
      %v656 = vmul.f32 %v648, 0.5
      %v657 = vmul.f32 %v649, 0.5
      %v658 = vmul.f32 %v650, 0.5
      %v659 = vmul.f32 %v651, 0.5
      %v660 = vmul.f32 %v652, 0.5
      %v661 = vmul.f32 %v653, 0.5
      %v662 = vmul.f32 %v646, 0.70710677
      %v663 = vmul.f32 %v647, 0.70710677
      %v664 = vmul.f32 %v648, 0.70710677
      %v665 = vmul.f32 %v649, 0.70710677
      %v666 = vmul.f32 %v650, 0.70710677
      %v667 = vmul.f32 %v651, 0.70710677
      %v668 = vmul.f32 %v652, 0.70710677
      %v669 = vmul.f32 %v653, 0.70710677
      %vm670 = vcmp.ge.f32.partialorder %v662, 0.0
      %vm671 = vcmp.ge.f32.partialorder %v663, 0.0
      %vm672 = vcmp.ge.f32.partialorder %v664, 0.0
      %vm673 = vcmp.ge.f32.partialorder %v665, 0.0
      %vm674 = vcmp.ge.f32.partialorder %v666, 0.0
      %vm675 = vcmp.ge.f32.partialorder %v667, 0.0
      %vm676 = vcmp.ge.f32.partialorder %v668, 0.0
      %vm677 = vcmp.ge.f32.partialorder %v669, 0.0
      %v678 = vsel %vm670, 1.0, -1.0
      %v679 = vsel %vm671, 1.0, -1.0
      %v680 = vsel %vm672, 1.0, -1.0
      %v681 = vsel %vm673, 1.0, -1.0
      %v682 = vsel %vm674, 1.0, -1.0
      %v683 = vsel %vm675, 1.0, -1.0
      %v684 = vsel %vm676, 1.0, -1.0
      %v685 = vsel %vm677, 1.0, -1.0
      %v686 = vand.u32 2147483647, %v662
      %v687 = vand.u32 2147483647, %v663
      %v688 = vand.u32 2147483647, %v664
      %v689 = vand.u32 2147483647, %v665
      %v690 = vand.u32 2147483647, %v666
      %v691 = vand.u32 2147483647, %v667
      %v692 = vand.u32 2147483647, %v668
      %v693 = vand.u32 2147483647, %v669
      %v694 = vmul.f32 %v686, 0.3275911
      %v695 = vmul.f32 %v687, 0.3275911
      %v696 = vmul.f32 %v688, 0.3275911
      %v697 = vmul.f32 %v689, 0.3275911
      %v698 = vmul.f32 %v690, 0.3275911
      %v699 = vmul.f32 %v691, 0.3275911
      %v700 = vmul.f32 %v692, 0.3275911
      %v701 = vmul.f32 %v693, 0.3275911
      %v702 = vadd.f32 %v694, 1.0
      %v703 = vadd.f32 %v695, 1.0
      %v704 = vadd.f32 %v696, 1.0
      %v705 = vadd.f32 %v697, 1.0
      %v706 = vadd.f32 %v698, 1.0
      %v707 = vadd.f32 %v699, 1.0
      %v708 = vadd.f32 %v700, 1.0
      %v709 = vadd.f32 %v701, 1.0
      %v710 = vrcp.pop %v702
      %v711 = vmul.f32 1.0, %v710
      %v712 = vrcp.pop %v703
      %v713 = vmul.f32 1.0, %v712
      %v714 = vrcp.pop %v704
      %v715 = vmul.f32 1.0, %v714
      %v716 = vrcp.pop %v705
      %v717 = vmul.f32 1.0, %v716
      %v718 = vrcp.pop %v706
      %v719 = vmul.f32 1.0, %v718
      %v720 = vrcp.pop %v707
      %v721 = vmul.f32 1.0, %v720
      %v722 = vrcp.pop %v708
      %v723 = vmul.f32 1.0, %v722
      %v724 = vrcp.pop %v709
      %v725 = vmul.f32 1.0, %v724
      %v726 = vmul.f32 %v711, 1.0614054
      %v727 = vmul.f32 %v713, 1.0614054
      %v728 = vmul.f32 %v715, 1.0614054
      %v729 = vmul.f32 %v717, 1.0614054
      %v730 = vmul.f32 %v719, 1.0614054
      %v731 = vmul.f32 %v721, 1.0614054
      %v732 = vmul.f32 %v723, 1.0614054
      %v733 = vmul.f32 %v725, 1.0614054
      %v734 = vadd.f32 %v726, -1.4531521
      %v735 = vadd.f32 %v727, -1.4531521
      %v736 = vadd.f32 %v728, -1.4531521
      %v737 = vadd.f32 %v729, -1.4531521
      %v738 = vadd.f32 %v730, -1.4531521
      %v739 = vadd.f32 %v731, -1.4531521
      %v740 = vadd.f32 %v732, -1.4531521
      %v741 = vadd.f32 %v733, -1.4531521
      %v742 = vmul.f32 %v734, %v711
      %v743 = vmul.f32 %v735, %v713
      %v744 = vmul.f32 %v736, %v715
      %v745 = vmul.f32 %v737, %v717
      %v746 = vmul.f32 %v738, %v719
      %v747 = vmul.f32 %v739, %v721
      %v748 = vmul.f32 %v740, %v723
      %v749 = vmul.f32 %v741, %v725
      %v750 = vadd.f32 %v742, 1.4214138
      %v751 = vadd.f32 %v743, 1.4214138
      %v752 = vadd.f32 %v744, 1.4214138
      %v753 = vadd.f32 %v745, 1.4214138
      %v754 = vadd.f32 %v746, 1.4214138
      %v755 = vadd.f32 %v747, 1.4214138
      %v756 = vadd.f32 %v748, 1.4214138
      %v757 = vadd.f32 %v749, 1.4214138
      %v758 = vmul.f32 %v750, %v711
      %v759 = vmul.f32 %v751, %v713
      %v760 = vmul.f32 %v752, %v715
      %v761 = vmul.f32 %v753, %v717
      %v762 = vmul.f32 %v754, %v719
      %v763 = vmul.f32 %v755, %v721
      %v764 = vmul.f32 %v756, %v723
      %v765 = vmul.f32 %v757, %v725
      %v766 = vadd.f32 %v758, -0.28449672
      %v767 = vadd.f32 %v759, -0.28449672
      %v768 = vadd.f32 %v760, -0.28449672
      %v769 = vadd.f32 %v761, -0.28449672
      %v770 = vadd.f32 %v762, -0.28449672
      %v771 = vadd.f32 %v763, -0.28449672
      %v772 = vadd.f32 %v764, -0.28449672
      %v773 = vadd.f32 %v765, -0.28449672
      %v774 = vmul.f32 %v766, %v711
      %v775 = vmul.f32 %v767, %v713
      %v776 = vmul.f32 %v768, %v715
      %v777 = vmul.f32 %v769, %v717
      %v778 = vmul.f32 %v770, %v719
      %v779 = vmul.f32 %v771, %v721
      %v780 = vmul.f32 %v772, %v723
      %v781 = vmul.f32 %v773, %v725
      %v782 = vadd.f32 %v774, 0.2548296
      %v783 = vadd.f32 %v775, 0.2548296
      %v784 = vadd.f32 %v776, 0.2548296
      %v785 = vadd.f32 %v777, 0.2548296
      %v786 = vadd.f32 %v778, 0.2548296
      %v787 = vadd.f32 %v779, 0.2548296
      %v788 = vadd.f32 %v780, 0.2548296
      %v789 = vadd.f32 %v781, 0.2548296
      %v790 = vmul.f32 %v782, %v711
      %v791 = vmul.f32 %v783, %v713
      %v792 = vmul.f32 %v784, %v715
      %v793 = vmul.f32 %v785, %v717
      %v794 = vmul.f32 %v786, %v719
      %v795 = vmul.f32 %v787, %v721
      %v796 = vmul.f32 %v788, %v723
      %v797 = vmul.f32 %v789, %v725
      %v798 = vsub.f32 0.0, %v686
      %v799 = vsub.f32 0.0, %v687
      %v800 = vsub.f32 0.0, %v688
      %v801 = vsub.f32 0.0, %v689
      %v802 = vsub.f32 0.0, %v690
      %v803 = vsub.f32 0.0, %v691
      %v804 = vsub.f32 0.0, %v692
      %v805 = vsub.f32 0.0, %v693
      %v806 = vmul.f32 %v798, %v686
      %v807 = vmul.f32 %v799, %v687
      %v808 = vmul.f32 %v800, %v688
      %v809 = vmul.f32 %v801, %v689
      %v810 = vmul.f32 %v802, %v690
      %v811 = vmul.f32 %v803, %v691
      %v812 = vmul.f32 %v804, %v692
      %v813 = vmul.f32 %v805, %v693
      %v814 = vmul.f32 %v806, 1.442695
      %v815 = vpow.pop %v814
      %v816 = vmul.f32 %v807, 1.442695
      %v817 = vpow.pop %v816
      %v818 = vmul.f32 %v808, 1.442695
      %v819 = vpow.pop %v818
      %v820 = vmul.f32 %v809, 1.442695
      %v821 = vpow.pop %v820
      %v822 = vmul.f32 %v810, 1.442695
      %v823 = vpow.pop %v822
      %v824 = vmul.f32 %v811, 1.442695
      %v825 = vpow.pop %v824
      %v826 = vmul.f32 %v812, 1.442695
      %v827 = vpow.pop %v826
      %v828 = vmul.f32 %v813, 1.442695
      %v829 = vpow.pop %v828
      %v830 = vmul.f32 %v790, %v815
      %v831 = vmul.f32 %v791, %v817
      %v832 = vmul.f32 %v792, %v819
      %v833 = vmul.f32 %v793, %v821
      %v834 = vmul.f32 %v794, %v823
      %v835 = vmul.f32 %v795, %v825
      %v836 = vmul.f32 %v796, %v827
      %v837 = vmul.f32 %v797, %v829
      %v838 = vsub.f32 1.0, %v830
      %v839 = vsub.f32 1.0, %v831
      %v840 = vsub.f32 1.0, %v832
      %v841 = vsub.f32 1.0, %v833
      %v842 = vsub.f32 1.0, %v834
      %v843 = vsub.f32 1.0, %v835
      %v844 = vsub.f32 1.0, %v836
      %v845 = vsub.f32 1.0, %v837
      %v846 = vmul.f32 %v678, %v838
      %v847 = vmul.f32 %v679, %v839
      %v848 = vmul.f32 %v680, %v840
      %v849 = vmul.f32 %v681, %v841
      %v850 = vmul.f32 %v682, %v842
      %v851 = vmul.f32 %v683, %v843
      %v852 = vmul.f32 %v684, %v844
      %v853 = vmul.f32 %v685, %v845
      %v854 = vadd.f32 %v846, 1.0
      %v855 = vadd.f32 %v847, 1.0
      %v856 = vadd.f32 %v848, 1.0
      %v857 = vadd.f32 %v849, 1.0
      %v858 = vadd.f32 %v850, 1.0
      %v859 = vadd.f32 %v851, 1.0
      %v860 = vadd.f32 %v852, 1.0
      %v861 = vadd.f32 %v853, 1.0
      %v862 = vmul.f32 %v654, %v854
      %v863 = vmul.f32 %v655, %v855
      %v864 = vmul.f32 %v656, %v856
      %v865 = vmul.f32 %v657, %v857
      %v866 = vmul.f32 %v658, %v858
      %v867 = vmul.f32 %v659, %v859
      %v868 = vmul.f32 %v660, %v860
      %v869 = vmul.f32 %v661, %v861
      %v871 = vlaneseq
      %v872 = vshrl.u32 %v871, 7
      %v873 = vsub.s32 0, %v872
      %v874 = vrot.slane %v517, %v873
      %v877 = vsel %vm520, %v862, 0
      %v880 = vsel %vm520, %v863, 0
      %v883 = vsel %vm520, %v864, 0
      %v886 = vsel %vm520, %v865, 0
      %v889 = vsel %vm520, %v866, 0
      %v892 = vsel %vm520, %v867, 0
      %v895 = vsel %vm520, %v868, 0
      %v898 = vsel %vm520, %v869, 0
      %900 = vmatprep.subr.mxu0 0.0
      %901 = vmatpush1.msra.mxu0 %v516
      %902 = vmatprep.subr.mxu0 0.0
      %903 = vmatpush1.msra.mxu0 0.0
      %904 = vmatprep.subr.mxu0 0.0
      %905 = vmatpush1.msra.mxu0 0.0
      %906 = vmatprep.subr.mxu0 0.0
      %907 = vmatpush1.msra.mxu0 0.0
      %908 = vmatprep.subr.mxu0 0.0
      %909 = vmatpush1.msra.mxu0 0.0
      %910 = vmatprep.subr.mxu0 0.0
      %911 = vmatpush1.msra.mxu0 0.0
      %912 = vmatprep.subr.mxu0 0.0
      %913 = vmatpush1.msra.mxu0 0.0
      %914 = vmatprep.subr.mxu0 0.0
      %915 = vmatpush1.msra.mxu0 0.0
      %916 = vmatprep.subr.mxu0 0.0
      %917 = vmatpush1.msra.mxu0 0.0
      %918 = vmatprep.subr.mxu0 0.0
      %919 = vmatpush1.msra.mxu0 0.0
      %920 = vmatprep.subr.mxu0 0.0
      %921 = vmatpush1.msra.mxu0 0.0
      %922 = vmatprep.subr.mxu0 0.0
      %923 = vmatpush1.msra.mxu0 0.0
      %924 = vmatprep.subr.mxu0 0.0
      %925 = vmatpush1.msra.mxu0 0.0
      %926 = vmatprep.subr.mxu0 0.0
      %927 = vmatpush1.msra.mxu0 0.0
      %928 = vmatprep.subr.mxu0 0.0
      %929 = vmatpush1.msra.mxu0 0.0
      %930 = vmatprep.subr.mxu0 0.0
      %931 = vmatpush1.msra.mxu0 0.0
      %932 = vmatprep.subr.mxu0 0.0
      %933 = vmatpush1.msra.mxu0 0.0
      %934 = vmatprep.subr.mxu0 0.0
      %935 = vmatpush1.msra.mxu0 0.0
      %936 = vmatprep.subr.mxu0 0.0
      %937 = vmatpush1.msra.mxu0 0.0
      %938 = vmatprep.subr.mxu0 0.0
      %939 = vmatpush1.msra.mxu0 0.0
      %940 = vmatprep.subr.mxu0 0.0
      %941 = vmatpush1.msra.mxu0 0.0
      %942 = vmatprep.subr.mxu0 0.0
      %943 = vmatpush1.msra.mxu0 0.0
      %944 = vmatprep.subr.mxu0 0.0
      %945 = vmatpush1.msra.mxu0 0.0
      %946 = vmatprep.subr.mxu0 0.0
      %947 = vmatpush1.msra.mxu0 0.0
      %948 = vmatprep.subr.mxu0 0.0
      %949 = vmatpush1.msra.mxu0 0.0
      %950 = vmatprep.subr.mxu0 0.0
      %951 = vmatpush1.msra.mxu0 0.0
      %952 = vmatprep.subr.mxu0 0.0
      %953 = vmatpush1.msra.mxu0 0.0
      %954 = vmatprep.subr.mxu0 0.0
      %955 = vmatpush1.msra.mxu0 0.0
      %956 = vmatprep.subr.mxu0 0.0
      %957 = vmatpush1.msra.mxu0 0.0
      %958 = vmatprep.subr.mxu0 0.0
      %959 = vmatpush1.msra.mxu0 0.0
      %960 = vmatprep.subr.mxu0 0.0
      %961 = vmatpush1.msra.mxu0 0.0
      %962 = vmatprep.subr.mxu0 0.0
      %963 = vmatpush1.msra.mxu0 0.0
      %964 = vmatprep.mubr.f32.mxu0 0.0
      %965 = vmatmul.mubr.f32.gmra.mrb[0].mxu0 %v877
      %v966 = vpop.f32.mrb[0].mxu0
      %v967 = vadd.f32 %v874, %v966
      %v968 = vpop.f32.mrb[0].mxu0
      %969 = vmatprep.mubr.f32.mxu0 0.0
      %970 = vmatmul.mubr.f32.gmra.mrb[0].mxu0 %v880
      %v971 = vpop.f32.mrb[0].mxu0
      %v972 = vadd.f32 %v874, %v971
      %v973 = vpop.f32.mrb[0].mxu0
      %974 = vmatprep.mubr.f32.mxu0 0.0
      %975 = vmatmul.mubr.f32.gmra.mrb[0].mxu0 %v883
      %v976 = vpop.f32.mrb[0].mxu0
      %v977 = vadd.f32 %v874, %v976
      %v978 = vpop.f32.mrb[0].mxu0
      %979 = vmatprep.mubr.f32.mxu0 0.0
      %980 = vmatmul.mubr.f32.gmra.mrb[0].mxu0 %v886
      %v981 = vpop.f32.mrb[0].mxu0
      %v982 = vadd.f32 %v874, %v981
      %v983 = vpop.f32.mrb[0].mxu0
      %984 = vmatprep.mubr.f32.mxu0 0.0
      %985 = vmatmul.mubr.f32.gmra.mrb[0].mxu0 %v889
      %v986 = vpop.f32.mrb[0].mxu0
      %v987 = vadd.f32 %v874, %v986
      %v988 = vpop.f32.mrb[0].mxu0
      %989 = vmatprep.mubr.f32.mxu0 0.0
      %990 = vmatmul.mubr.f32.gmra.mrb[0].mxu0 %v892
      %v991 = vpop.f32.mrb[0].mxu0
      %v992 = vadd.f32 %v874, %v991
      %v993 = vpop.f32.mrb[0].mxu0
      %994 = vmatprep.mubr.f32.mxu0 0.0
      %995 = vmatmul.mubr.f32.gmra.mrb[0].mxu0 %v895
      %v996 = vpop.f32.mrb[0].mxu0
      %v997 = vadd.f32 %v874, %v996
      %v998 = vpop.f32.mrb[0].mxu0
      %999 = vmatprep.mubr.f32.mxu0 0.0
      %1000 = vmatmul.mubr.f32.gmra.mrb[0].mxu0 %v898
      %v1001 = vpop.f32.mrb[0].mxu0
      %v1002 = vadd.f32 %v874, %v1001
      %v1003 = vpop.f32.mrb[0].mxu0
      %1004 = vdwg.mxu0
      %v1005 = vmul.f32 %v967, 0.5
      %v1006 = vmul.f32 %v972, 0.5
      %v1007 = vmul.f32 %v977, 0.5
      %v1008 = vmul.f32 %v982, 0.5
      %v1009 = vmul.f32 %v987, 0.5
      %v1010 = vmul.f32 %v992, 0.5
      %v1011 = vmul.f32 %v997, 0.5
      %v1012 = vmul.f32 %v1002, 0.5
      %v1013 = vmul.f32 %v967, 0.70710677
      %v1014 = vmul.f32 %v972, 0.70710677
      %v1015 = vmul.f32 %v977, 0.70710677
      %v1016 = vmul.f32 %v982, 0.70710677
      %v1017 = vmul.f32 %v987, 0.70710677
      %v1018 = vmul.f32 %v992, 0.70710677
      %v1019 = vmul.f32 %v997, 0.70710677
      %v1020 = vmul.f32 %v1002, 0.70710677
      %vm1021 = vcmp.ge.f32.partialorder %v1013, 0.0
      %vm1022 = vcmp.ge.f32.partialorder %v1014, 0.0
      %vm1023 = vcmp.ge.f32.partialorder %v1015, 0.0
      %vm1024 = vcmp.ge.f32.partialorder %v1016, 0.0
      %vm1025 = vcmp.ge.f32.partialorder %v1017, 0.0
      %vm1026 = vcmp.ge.f32.partialorder %v1018, 0.0
      %vm1027 = vcmp.ge.f32.partialorder %v1019, 0.0
      %vm1028 = vcmp.ge.f32.partialorder %v1020, 0.0
      %v1029 = vsel %vm1021, 1.0, -1.0
      %v1030 = vsel %vm1022, 1.0, -1.0
      %v1031 = vsel %vm1023, 1.0, -1.0
      %v1032 = vsel %vm1024, 1.0, -1.0
      %v1033 = vsel %vm1025, 1.0, -1.0
      %v1034 = vsel %vm1026, 1.0, -1.0
      %v1035 = vsel %vm1027, 1.0, -1.0
      %v1036 = vsel %vm1028, 1.0, -1.0
      %v1037 = vand.u32 2147483647, %v1013
      %v1038 = vand.u32 2147483647, %v1014
      %v1039 = vand.u32 2147483647, %v1015
      %v1040 = vand.u32 2147483647, %v1016
      %v1041 = vand.u32 2147483647, %v1017
      %v1042 = vand.u32 2147483647, %v1018
      %v1043 = vand.u32 2147483647, %v1019
      %v1044 = vand.u32 2147483647, %v1020
      %v1045 = vmul.f32 %v1037, 0.3275911
      %v1046 = vmul.f32 %v1038, 0.3275911
      %v1047 = vmul.f32 %v1039, 0.3275911
      %v1048 = vmul.f32 %v1040, 0.3275911
      %v1049 = vmul.f32 %v1041, 0.3275911
      %v1050 = vmul.f32 %v1042, 0.3275911
      %v1051 = vmul.f32 %v1043, 0.3275911
      %v1052 = vmul.f32 %v1044, 0.3275911
      %v1053 = vadd.f32 %v1045, 1.0
      %v1054 = vadd.f32 %v1046, 1.0
      %v1055 = vadd.f32 %v1047, 1.0
      %v1056 = vadd.f32 %v1048, 1.0
      %v1057 = vadd.f32 %v1049, 1.0
      %v1058 = vadd.f32 %v1050, 1.0
      %v1059 = vadd.f32 %v1051, 1.0
      %v1060 = vadd.f32 %v1052, 1.0
      %v1061 = vrcp.pop %v1053
      %v1062 = vmul.f32 1.0, %v1061
      %v1063 = vrcp.pop %v1054
      %v1064 = vmul.f32 1.0, %v1063
      %v1065 = vrcp.pop %v1055
      %v1066 = vmul.f32 1.0, %v1065
      %v1067 = vrcp.pop %v1056
      %v1068 = vmul.f32 1.0, %v1067
      %v1069 = vrcp.pop %v1057
      %v1070 = vmul.f32 1.0, %v1069
      %v1071 = vrcp.pop %v1058
      %v1072 = vmul.f32 1.0, %v1071
      %v1073 = vrcp.pop %v1059
      %v1074 = vmul.f32 1.0, %v1073
      %v1075 = vrcp.pop %v1060
      %v1076 = vmul.f32 1.0, %v1075
      %v1077 = vmul.f32 %v1062, 1.0614054
      %v1078 = vmul.f32 %v1064, 1.0614054
      %v1079 = vmul.f32 %v1066, 1.0614054
      %v1080 = vmul.f32 %v1068, 1.0614054
      %v1081 = vmul.f32 %v1070, 1.0614054
      %v1082 = vmul.f32 %v1072, 1.0614054
      %v1083 = vmul.f32 %v1074, 1.0614054
      %v1084 = vmul.f32 %v1076, 1.0614054
      %v1085 = vadd.f32 %v1077, -1.4531521
      %v1086 = vadd.f32 %v1078, -1.4531521
      %v1087 = vadd.f32 %v1079, -1.4531521
      %v1088 = vadd.f32 %v1080, -1.4531521
      %v1089 = vadd.f32 %v1081, -1.4531521
      %v1090 = vadd.f32 %v1082, -1.4531521
      %v1091 = vadd.f32 %v1083, -1.4531521
      %v1092 = vadd.f32 %v1084, -1.4531521
      %v1093 = vmul.f32 %v1085, %v1062
      %v1094 = vmul.f32 %v1086, %v1064
      %v1095 = vmul.f32 %v1087, %v1066
      %v1096 = vmul.f32 %v1088, %v1068
      %v1097 = vmul.f32 %v1089, %v1070
      %v1098 = vmul.f32 %v1090, %v1072
      %v1099 = vmul.f32 %v1091, %v1074
      %v1100 = vmul.f32 %v1092, %v1076
      %v1101 = vadd.f32 %v1093, 1.4214138
      %v1102 = vadd.f32 %v1094, 1.4214138
      %v1103 = vadd.f32 %v1095, 1.4214138
      %v1104 = vadd.f32 %v1096, 1.4214138
      %v1105 = vadd.f32 %v1097, 1.4214138
      %v1106 = vadd.f32 %v1098, 1.4214138
      %v1107 = vadd.f32 %v1099, 1.4214138
      %v1108 = vadd.f32 %v1100, 1.4214138
      %v1109 = vmul.f32 %v1101, %v1062
      %v1110 = vmul.f32 %v1102, %v1064
      %v1111 = vmul.f32 %v1103, %v1066
      %v1112 = vmul.f32 %v1104, %v1068
      %v1113 = vmul.f32 %v1105, %v1070
      %v1114 = vmul.f32 %v1106, %v1072
      %v1115 = vmul.f32 %v1107, %v1074
      %v1116 = vmul.f32 %v1108, %v1076
      %v1117 = vadd.f32 %v1109, -0.28449672
      %v1118 = vadd.f32 %v1110, -0.28449672
      %v1119 = vadd.f32 %v1111, -0.28449672
      %v1120 = vadd.f32 %v1112, -0.28449672
      %v1121 = vadd.f32 %v1113, -0.28449672
      %v1122 = vadd.f32 %v1114, -0.28449672
      %v1123 = vadd.f32 %v1115, -0.28449672
      %v1124 = vadd.f32 %v1116, -0.28449672
      %v1125 = vmul.f32 %v1117, %v1062
      %v1126 = vmul.f32 %v1118, %v1064
      %v1127 = vmul.f32 %v1119, %v1066
      %v1128 = vmul.f32 %v1120, %v1068
      %v1129 = vmul.f32 %v1121, %v1070
      %v1130 = vmul.f32 %v1122, %v1072
      %v1131 = vmul.f32 %v1123, %v1074
      %v1132 = vmul.f32 %v1124, %v1076
      %v1133 = vadd.f32 %v1125, 0.2548296
      %v1134 = vadd.f32 %v1126, 0.2548296
      %v1135 = vadd.f32 %v1127, 0.2548296
      %v1136 = vadd.f32 %v1128, 0.2548296
      %v1137 = vadd.f32 %v1129, 0.2548296
      %v1138 = vadd.f32 %v1130, 0.2548296
      %v1139 = vadd.f32 %v1131, 0.2548296
      %v1140 = vadd.f32 %v1132, 0.2548296
      %v1141 = vmul.f32 %v1133, %v1062
      %v1142 = vmul.f32 %v1134, %v1064
      %v1143 = vmul.f32 %v1135, %v1066
      %v1144 = vmul.f32 %v1136, %v1068
      %v1145 = vmul.f32 %v1137, %v1070
      %v1146 = vmul.f32 %v1138, %v1072
      %v1147 = vmul.f32 %v1139, %v1074
      %v1148 = vmul.f32 %v1140, %v1076
      %v1149 = vsub.f32 0.0, %v1037
      %v1150 = vsub.f32 0.0, %v1038
      %v1151 = vsub.f32 0.0, %v1039
      %v1152 = vsub.f32 0.0, %v1040
      %v1153 = vsub.f32 0.0, %v1041
      %v1154 = vsub.f32 0.0, %v1042
      %v1155 = vsub.f32 0.0, %v1043
      %v1156 = vsub.f32 0.0, %v1044
      %v1157 = vmul.f32 %v1149, %v1037
      %v1158 = vmul.f32 %v1150, %v1038
      %v1159 = vmul.f32 %v1151, %v1039
      %v1160 = vmul.f32 %v1152, %v1040
      %v1161 = vmul.f32 %v1153, %v1041
      %v1162 = vmul.f32 %v1154, %v1042
      %v1163 = vmul.f32 %v1155, %v1043
      %v1164 = vmul.f32 %v1156, %v1044
      %v1165 = vmul.f32 %v1157, 1.442695
      %v1166 = vpow.pop %v1165
      %v1167 = vmul.f32 %v1158, 1.442695
      %v1168 = vpow.pop %v1167
      %v1169 = vmul.f32 %v1159, 1.442695
      %v1170 = vpow.pop %v1169
      %v1171 = vmul.f32 %v1160, 1.442695
      %v1172 = vpow.pop %v1171
      %v1173 = vmul.f32 %v1161, 1.442695
      %v1174 = vpow.pop %v1173
      %v1175 = vmul.f32 %v1162, 1.442695
      %v1176 = vpow.pop %v1175
      %v1177 = vmul.f32 %v1163, 1.442695
      %v1178 = vpow.pop %v1177
      %v1179 = vmul.f32 %v1164, 1.442695
      %v1180 = vpow.pop %v1179
      %v1181 = vmul.f32 %v1141, %v1166
      %v1182 = vmul.f32 %v1142, %v1168
      %v1183 = vmul.f32 %v1143, %v1170
      %v1184 = vmul.f32 %v1144, %v1172
      %v1185 = vmul.f32 %v1145, %v1174
      %v1186 = vmul.f32 %v1146, %v1176
      %v1187 = vmul.f32 %v1147, %v1178
      %v1188 = vmul.f32 %v1148, %v1180
      %v1189 = vsub.f32 1.0, %v1181
      %v1190 = vsub.f32 1.0, %v1182
      %v1191 = vsub.f32 1.0, %v1183
      %v1192 = vsub.f32 1.0, %v1184
      %v1193 = vsub.f32 1.0, %v1185
      %v1194 = vsub.f32 1.0, %v1186
      %v1195 = vsub.f32 1.0, %v1187
      %v1196 = vsub.f32 1.0, %v1188
      %v1197 = vmul.f32 %v1029, %v1189
      %v1198 = vmul.f32 %v1030, %v1190
      %v1199 = vmul.f32 %v1031, %v1191
      %v1200 = vmul.f32 %v1032, %v1192
      %v1201 = vmul.f32 %v1033, %v1193
      %v1202 = vmul.f32 %v1034, %v1194
      %v1203 = vmul.f32 %v1035, %v1195
      %v1204 = vmul.f32 %v1036, %v1196
      %v1205 = vadd.f32 %v1197, 1.0
      %v1206 = vadd.f32 %v1198, 1.0
      %v1207 = vadd.f32 %v1199, 1.0
      %v1208 = vadd.f32 %v1200, 1.0
      %v1209 = vadd.f32 %v1201, 1.0
      %v1210 = vadd.f32 %v1202, 1.0
      %v1211 = vadd.f32 %v1203, 1.0
      %v1212 = vadd.f32 %v1204, 1.0
      %v1213 = vmul.f32 %v1005, %v1205
      %v1214 = vmul.f32 %v1006, %v1206
      %v1215 = vmul.f32 %v1007, %v1207
      %v1216 = vmul.f32 %v1008, %v1208
      %v1217 = vmul.f32 %v1009, %v1209
      %v1218 = vmul.f32 %v1010, %v1210
      %v1219 = vmul.f32 %v1011, %v1211
      %v1220 = vmul.f32 %v1012, %v1212
      %vm1221 = vcmask 130048
      %v1223 = vsel %vm1221, %v1213, 0
      %v1226 = vsel %vm1221, %v1214, 0
      %v1229 = vsel %vm1221, %v1215, 0
      %v1232 = vsel %vm1221, %v1216, 0
      %v1235 = vsel %vm1221, %v1217, 0
      %v1238 = vsel %vm1221, %v1218, 0
      %v1241 = vsel %vm1221, %v1219, 0
      %v1244 = vsel %vm1221, %v1220, 0
      %1246 = vmatprep.subr.mxu0 0.0
      %1247 = vmatpush1.msra.mxu0 %v518
      %1248 = vmatprep.subr.mxu0 0.0
      %1249 = vmatpush1.msra.mxu0 %v519
      %1250 = vmatprep.subr.mxu0 0.0
      %1251 = vmatpush1.msra.mxu0 0.0
      %1252 = vmatprep.subr.mxu0 0.0
      %1253 = vmatpush1.msra.mxu0 0.0
      %1254 = vmatprep.subr.mxu0 0.0
      %1255 = vmatpush1.msra.mxu0 0.0
      %1256 = vmatprep.subr.mxu0 0.0
      %1257 = vmatpush1.msra.mxu0 0.0
      %1258 = vmatprep.subr.mxu0 0.0
      %1259 = vmatpush1.msra.mxu0 0.0
      %1260 = vmatprep.subr.mxu0 0.0
      %1261 = vmatpush1.msra.mxu0 0.0
      %1262 = vmatprep.subr.mxu0 0.0
      %1263 = vmatpush1.msra.mxu0 0.0
      %1264 = vmatprep.subr.mxu0 0.0
      %1265 = vmatpush1.msra.mxu0 0.0
      %1266 = vmatprep.subr.mxu0 0.0
      %1267 = vmatpush1.msra.mxu0 0.0
      %1268 = vmatprep.subr.mxu0 0.0
      %1269 = vmatpush1.msra.mxu0 0.0
      %1270 = vmatprep.subr.mxu0 0.0
      %1271 = vmatpush1.msra.mxu0 0.0
      %1272 = vmatprep.subr.mxu0 0.0
      %1273 = vmatpush1.msra.mxu0 0.0
      %1274 = vmatprep.subr.mxu0 0.0
      %1275 = vmatpush1.msra.mxu0 0.0
      %1276 = vmatprep.subr.mxu0 0.0
      %1277 = vmatpush1.msra.mxu0 0.0
      %1278 = vmatprep.subr.mxu0 0.0
      %1279 = vmatpush1.msra.mxu0 0.0
      %1280 = vmatprep.subr.mxu0 0.0
      %1281 = vmatpush1.msra.mxu0 0.0
      %1282 = vmatprep.subr.mxu0 0.0
      %1283 = vmatpush1.msra.mxu0 0.0
      %1284 = vmatprep.subr.mxu0 0.0
      %1285 = vmatpush1.msra.mxu0 0.0
      %1286 = vmatprep.subr.mxu0 0.0
      %1287 = vmatpush1.msra.mxu0 0.0
      %1288 = vmatprep.subr.mxu0 0.0
      %1289 = vmatpush1.msra.mxu0 0.0
      %1290 = vmatprep.subr.mxu0 0.0
      %1291 = vmatpush1.msra.mxu0 0.0
      %1292 = vmatprep.subr.mxu0 0.0
      %1293 = vmatpush1.msra.mxu0 0.0
      %1294 = vmatprep.subr.mxu0 0.0
      %1295 = vmatpush1.msra.mxu0 0.0
      %1296 = vmatprep.subr.mxu0 0.0
      %1297 = vmatpush1.msra.mxu0 0.0
      %1298 = vmatprep.subr.mxu0 0.0
      %1299 = vmatpush1.msra.mxu0 0.0
      %1300 = vmatprep.subr.mxu0 0.0
      %1301 = vmatpush1.msra.mxu0 0.0
      %1302 = vmatprep.subr.mxu0 0.0
      %1303 = vmatpush1.msra.mxu0 0.0
      %1304 = vmatprep.subr.mxu0 0.0
      %1305 = vmatpush1.msra.mxu0 0.0
      %1306 = vmatprep.subr.mxu0 0.0
      %1307 = vmatpush1.msra.mxu0 0.0
      %1308 = vmatprep.subr.mxu0 0.0
      %1309 = vmatpush1.msra.mxu0 0.0
      %1310 = vmatprep.mubr.f32.mxu0 0.0
      %1311 = vmatmul.mubr.f32.gmra.mrb[0].mxu0 %v1223
      %v1312 = vpop.f32.mrb[0].mxu0
      %v1313 = vadd.f32 0.0, %v1312
      %v1314 = vpop.f32.mrb[0].mxu0
      %1315 = vmatprep.mubr.f32.mxu0 0.0
      %1316 = vmatmul.mubr.f32.gmra.mrb[0].mxu0 %v1226
      %v1317 = vpop.f32.mrb[0].mxu0
      %v1318 = vadd.f32 0.0, %v1317
      %v1319 = vpop.f32.mrb[0].mxu0
      %1320 = vmatprep.mubr.f32.mxu0 0.0
      %1321 = vmatmul.mubr.f32.gmra.mrb[0].mxu0 %v1229
      %v1322 = vpop.f32.mrb[0].mxu0
      %v1323 = vadd.f32 0.0, %v1322
      %v1324 = vpop.f32.mrb[0].mxu0
      %1325 = vmatprep.mubr.f32.mxu0 0.0
      %1326 = vmatmul.mubr.f32.gmra.mrb[0].mxu0 %v1232
      %v1327 = vpop.f32.mrb[0].mxu0
      %v1328 = vadd.f32 0.0, %v1327
      %v1329 = vpop.f32.mrb[0].mxu0
      %1330 = vmatprep.mubr.f32.mxu0 0.0
      %1331 = vmatmul.mubr.f32.gmra.mrb[0].mxu0 %v1235
      %v1332 = vpop.f32.mrb[0].mxu0
      %v1333 = vadd.f32 0.0, %v1332
      %v1334 = vpop.f32.mrb[0].mxu0
      %1335 = vmatprep.mubr.f32.mxu0 0.0
      %1336 = vmatmul.mubr.f32.gmra.mrb[0].mxu0 %v1238
      %v1337 = vpop.f32.mrb[0].mxu0
      %v1338 = vadd.f32 0.0, %v1337
      %v1339 = vpop.f32.mrb[0].mxu0
      %1340 = vmatprep.mubr.f32.mxu0 0.0
      %1341 = vmatmul.mubr.f32.gmra.mrb[0].mxu0 %v1241
      %v1342 = vpop.f32.mrb[0].mxu0
      %v1343 = vadd.f32 0.0, %v1342
      %v1344 = vpop.f32.mrb[0].mxu0
      %1345 = vmatprep.mubr.f32.mxu0 0.0
      %1346 = vmatmul.mubr.f32.gmra.mrb[0].mxu0 %v1244
      %v1347 = vpop.f32.mrb[0].mxu0
      %v1348 = vadd.f32 0.0, %v1347
      %v1349 = vpop.f32.mrb[0].mxu0
      %1350 = vdwg.mxu0
      %1351 = vst.msk [vmem:[%s363] sm:$0xff] %vm1221, %v1313
      %1352 = vst.msk [vmem:[%s363 + $0x8] sm:$0xff] %vm1221, %v1318
      %1353 = vst.msk [vmem:[%s363 + $0x10] sm:$0xff] %vm1221, %v1323
      %1354 = vst.msk [vmem:[%s363 + $0x18] sm:$0xff] %vm1221, %v1328
      %1355 = vst.msk [vmem:[%s363 + $0x20] sm:$0xff] %vm1221, %v1333
      %1356 = vst.msk [vmem:[%s363 + $0x28] sm:$0xff] %vm1221, %v1338
      %1357 = vst.msk [vmem:[%s363 + $0x30] sm:$0xff] %vm1221, %v1343
      %1358 = vst.msk [vmem:[%s363 + $0x38] sm:$0xff] %vm1221, %v1348
      %1367 = vrot.lane.b32.xlu0 %v476, 120
      %v1368 = vpop.permute.xlu0 %1367
      %1369 = vrot.lane.b32.xlu0 %v481, 120
      %v1370 = vpop.permute.xlu0 %1369
      %1371 = vrot.lane.b32.xlu0 %v486, 120
      %v1372 = vpop.permute.xlu0 %1371
      %1373 = vrot.lane.b32.xlu0 %v491, 120
      %v1374 = vpop.permute.xlu0 %1373
      %1375 = vrot.lane.b32.xlu0 %v496, 120
      %v1376 = vpop.permute.xlu0 %1375
      %1377 = vrot.lane.b32.xlu0 %v501, 120
      %v1378 = vpop.permute.xlu0 %1377
      %1379 = vrot.lane.b32.xlu0 %v506, 120
      %v1380 = vpop.permute.xlu0 %1379
      %1381 = vrot.lane.b32.xlu0 %v511, 120
      %v1382 = vpop.permute.xlu0 %1381
      %v1391 = vsel %vm520, %v1368, 0.0
      %1392 = vadd.xlane.f32.xlu0 %v1391
      %v1393 = vpop.xlane.xlu0 %1392
      %v1394 = vsel %vm520, %v1370, 0.0
      %1395 = vadd.xlane.f32.xlu0 %v1394
      %v1396 = vpop.xlane.xlu0 %1395
      %v1397 = vsel %vm520, %v1372, 0.0
      %1398 = vadd.xlane.f32.xlu0 %v1397
      %v1399 = vpop.xlane.xlu0 %1398
      %v1400 = vsel %vm520, %v1374, 0.0
      %1401 = vadd.xlane.f32.xlu0 %v1400
      %v1402 = vpop.xlane.xlu0 %1401
      %v1403 = vsel %vm520, %v1376, 0.0
      %1404 = vadd.xlane.f32.xlu0 %v1403
      %v1405 = vpop.xlane.xlu0 %1404
      %v1406 = vsel %vm520, %v1378, 0.0
      %1407 = vadd.xlane.f32.xlu0 %v1406
      %v1408 = vpop.xlane.xlu0 %1407
      %v1409 = vsel %vm520, %v1380, 0.0
      %1410 = vadd.xlane.f32.xlu0 %v1409
      %v1411 = vpop.xlane.xlu0 %1410
      %v1412 = vsel %vm520, %v1382, 0.0
      %1413 = vadd.xlane.f32.xlu0 %v1412
      %v1414 = vpop.xlane.xlu0 %1413
      %v1415 = vmul.f32 %v1393, %v545
      %v1416 = vmul.f32 %v1396, %v545
      %v1417 = vmul.f32 %v1399, %v545
      %v1418 = vmul.f32 %v1402, %v545
      %v1419 = vmul.f32 %v1405, %v545
      %v1420 = vmul.f32 %v1408, %v545
      %v1421 = vmul.f32 %v1411, %v545
      %v1422 = vmul.f32 %v1414, %v545
      %v1423 = vsub.f32 %v476, %v1415
      %v1424 = vsub.f32 %v481, %v1416
      %v1425 = vsub.f32 %v486, %v1417
      %v1426 = vsub.f32 %v491, %v1418
      %v1427 = vsub.f32 %v496, %v1419
      %v1428 = vsub.f32 %v501, %v1420
      %v1429 = vsub.f32 %v506, %v1421
      %v1430 = vsub.f32 %v511, %v1422
      %v1431 = vmul.f32 %v1423, %v1423
      %v1432 = vmul.f32 %v1424, %v1424
      %v1433 = vmul.f32 %v1425, %v1425
      %v1434 = vmul.f32 %v1426, %v1426
      %v1435 = vmul.f32 %v1427, %v1427
      %v1436 = vmul.f32 %v1428, %v1428
      %v1437 = vmul.f32 %v1429, %v1429
      %v1438 = vmul.f32 %v1430, %v1430
      %1447 = vrot.lane.b32.xlu0 %v1431, 120
      %v1448 = vpop.permute.xlu0 %1447
      %1449 = vrot.lane.b32.xlu0 %v1432, 120
      %v1450 = vpop.permute.xlu0 %1449
      %1451 = vrot.lane.b32.xlu0 %v1433, 120
      %v1452 = vpop.permute.xlu0 %1451
      %1453 = vrot.lane.b32.xlu0 %v1434, 120
      %v1454 = vpop.permute.xlu0 %1453
      %1455 = vrot.lane.b32.xlu0 %v1435, 120
      %v1456 = vpop.permute.xlu0 %1455
      %1457 = vrot.lane.b32.xlu0 %v1436, 120
      %v1458 = vpop.permute.xlu0 %1457
      %1459 = vrot.lane.b32.xlu0 %v1437, 120
      %v1460 = vpop.permute.xlu0 %1459
      %1461 = vrot.lane.b32.xlu0 %v1438, 120
      %v1462 = vpop.permute.xlu0 %1461
      %v1471 = vsel %vm520, %v1448, 0.0
      %1472 = vadd.xlane.f32.xlu0 %v1471
      %v1473 = vpop.xlane.xlu0 %1472
      %v1474 = vsel %vm520, %v1450, 0.0
      %1475 = vadd.xlane.f32.xlu0 %v1474
      %v1476 = vpop.xlane.xlu0 %1475
      %v1477 = vsel %vm520, %v1452, 0.0
      %1478 = vadd.xlane.f32.xlu0 %v1477
      %v1479 = vpop.xlane.xlu0 %1478
      %v1480 = vsel %vm520, %v1454, 0.0
      %1481 = vadd.xlane.f32.xlu0 %v1480
      %v1482 = vpop.xlane.xlu0 %1481
      %v1483 = vsel %vm520, %v1456, 0.0
      %1484 = vadd.xlane.f32.xlu0 %v1483
      %v1485 = vpop.xlane.xlu0 %1484
      %v1486 = vsel %vm520, %v1458, 0.0
      %1487 = vadd.xlane.f32.xlu0 %v1486
      %v1488 = vpop.xlane.xlu0 %1487
      %v1489 = vsel %vm520, %v1460, 0.0
      %1490 = vadd.xlane.f32.xlu0 %v1489
      %v1491 = vpop.xlane.xlu0 %1490
      %v1492 = vsel %vm520, %v1462, 0.0
      %1493 = vadd.xlane.f32.xlu0 %v1492
      %v1494 = vpop.xlane.xlu0 %1493
      %v1495 = vmul.f32 %v1473, %v545
      %v1496 = vmul.f32 %v1476, %v545
      %v1497 = vmul.f32 %v1479, %v545
      %v1498 = vmul.f32 %v1482, %v545
      %v1499 = vmul.f32 %v1485, %v545
      %v1500 = vmul.f32 %v1488, %v545
      %v1501 = vmul.f32 %v1491, %v545
      %v1502 = vmul.f32 %v1494, %v545
      %v1503 = vadd.f32 %v1495, 1e-06
      %v1504 = vadd.f32 %v1496, 1e-06
      %v1505 = vadd.f32 %v1497, 1e-06
      %v1506 = vadd.f32 %v1498, 1e-06
      %v1507 = vadd.f32 %v1499, 1e-06
      %v1508 = vadd.f32 %v1500, 1e-06
      %v1509 = vadd.f32 %v1501, 1e-06
      %v1510 = vadd.f32 %v1502, 1e-06
      %v1511 = vrsqrt.pop %v1503
      %v1512 = vrsqrt.pop %v1504
      %v1513 = vrsqrt.pop %v1505
      %v1514 = vrsqrt.pop %v1506
      %v1515 = vrsqrt.pop %v1507
      %v1516 = vrsqrt.pop %v1508
      %v1517 = vrsqrt.pop %v1509
      %v1518 = vrsqrt.pop %v1510
      %v1519 = vmul.f32 %v1423, %v1511
      %v1520 = vmul.f32 %v1424, %v1512
      %v1521 = vmul.f32 %v1425, %v1513
      %v1522 = vmul.f32 %v1426, %v1514
      %v1523 = vmul.f32 %v1427, %v1515
      %v1524 = vmul.f32 %v1428, %v1516
      %v1525 = vmul.f32 %v1429, %v1517
      %v1526 = vmul.f32 %v1430, %v1518
      %1527 = vrot.lane.b32.xlu0 %v630, 8
      %v1528 = vpop.permute.xlu0 %1527
      %v1530 = vmul.f32 %v1519, %v1528
      %v1531 = vmul.f32 %v1520, %v1528
      %v1532 = vmul.f32 %v1521, %v1528
      %v1533 = vmul.f32 %v1522, %v1528
      %v1534 = vmul.f32 %v1523, %v1528
      %v1535 = vmul.f32 %v1524, %v1528
      %v1536 = vmul.f32 %v1525, %v1528
      %v1537 = vmul.f32 %v1526, %v1528
      %1538 = vrot.lane.b32.xlu0 %v644, 8
      %v1539 = vpop.permute.xlu0 %1538
      %v1541 = vadd.f32 %v1530, %v1539
      %v1542 = vadd.f32 %v1531, %v1539
      %v1543 = vadd.f32 %v1532, %v1539
      %v1544 = vadd.f32 %v1533, %v1539
      %v1545 = vadd.f32 %v1534, %v1539
      %v1546 = vadd.f32 %v1535, %v1539
      %v1547 = vadd.f32 %v1536, %v1539
      %v1548 = vadd.f32 %v1537, %v1539
      %v1549 = vmul.f32 %v1541, 0.5
      %v1550 = vmul.f32 %v1542, 0.5
      %v1551 = vmul.f32 %v1543, 0.5
      %v1552 = vmul.f32 %v1544, 0.5
      %v1553 = vmul.f32 %v1545, 0.5
      %v1554 = vmul.f32 %v1546, 0.5
      %v1555 = vmul.f32 %v1547, 0.5
      %v1556 = vmul.f32 %v1548, 0.5
      %v1557 = vmul.f32 %v1541, 0.70710677
      %v1558 = vmul.f32 %v1542, 0.70710677
      %v1559 = vmul.f32 %v1543, 0.70710677
      %v1560 = vmul.f32 %v1544, 0.70710677
      %v1561 = vmul.f32 %v1545, 0.70710677
      %v1562 = vmul.f32 %v1546, 0.70710677
      %v1563 = vmul.f32 %v1547, 0.70710677
      %v1564 = vmul.f32 %v1548, 0.70710677
      %vm1565 = vcmp.ge.f32.partialorder %v1557, 0.0
      %vm1566 = vcmp.ge.f32.partialorder %v1558, 0.0
      %vm1567 = vcmp.ge.f32.partialorder %v1559, 0.0
      %vm1568 = vcmp.ge.f32.partialorder %v1560, 0.0
      %vm1569 = vcmp.ge.f32.partialorder %v1561, 0.0
      %vm1570 = vcmp.ge.f32.partialorder %v1562, 0.0
      %vm1571 = vcmp.ge.f32.partialorder %v1563, 0.0
      %vm1572 = vcmp.ge.f32.partialorder %v1564, 0.0
      %v1573 = vsel %vm1565, 1.0, -1.0
      %v1574 = vsel %vm1566, 1.0, -1.0
      %v1575 = vsel %vm1567, 1.0, -1.0
      %v1576 = vsel %vm1568, 1.0, -1.0
      %v1577 = vsel %vm1569, 1.0, -1.0
      %v1578 = vsel %vm1570, 1.0, -1.0
      %v1579 = vsel %vm1571, 1.0, -1.0
      %v1580 = vsel %vm1572, 1.0, -1.0
      %v1581 = vand.u32 2147483647, %v1557
      %v1582 = vand.u32 2147483647, %v1558
      %v1583 = vand.u32 2147483647, %v1559
      %v1584 = vand.u32 2147483647, %v1560
      %v1585 = vand.u32 2147483647, %v1561
      %v1586 = vand.u32 2147483647, %v1562
      %v1587 = vand.u32 2147483647, %v1563
      %v1588 = vand.u32 2147483647, %v1564
      %v1589 = vmul.f32 %v1581, 0.3275911
      %v1590 = vmul.f32 %v1582, 0.3275911
      %v1591 = vmul.f32 %v1583, 0.3275911
      %v1592 = vmul.f32 %v1584, 0.3275911
      %v1593 = vmul.f32 %v1585, 0.3275911
      %v1594 = vmul.f32 %v1586, 0.3275911
      %v1595 = vmul.f32 %v1587, 0.3275911
      %v1596 = vmul.f32 %v1588, 0.3275911
      %v1597 = vadd.f32 %v1589, 1.0
      %v1598 = vadd.f32 %v1590, 1.0
      %v1599 = vadd.f32 %v1591, 1.0
      %v1600 = vadd.f32 %v1592, 1.0
      %v1601 = vadd.f32 %v1593, 1.0
      %v1602 = vadd.f32 %v1594, 1.0
      %v1603 = vadd.f32 %v1595, 1.0
      %v1604 = vadd.f32 %v1596, 1.0
      %v1605 = vrcp.pop %v1597
      %v1606 = vmul.f32 1.0, %v1605
      %v1607 = vrcp.pop %v1598
      %v1608 = vmul.f32 1.0, %v1607
      %v1609 = vrcp.pop %v1599
      %v1610 = vmul.f32 1.0, %v1609
      %v1611 = vrcp.pop %v1600
      %v1612 = vmul.f32 1.0, %v1611
      %v1613 = vrcp.pop %v1601
      %v1614 = vmul.f32 1.0, %v1613
      %v1615 = vrcp.pop %v1602
      %v1616 = vmul.f32 1.0, %v1615
      %v1617 = vrcp.pop %v1603
      %v1618 = vmul.f32 1.0, %v1617
      %v1619 = vrcp.pop %v1604
      %v1620 = vmul.f32 1.0, %v1619
      %v1621 = vmul.f32 %v1606, 1.0614054
      %v1622 = vmul.f32 %v1608, 1.0614054
      %v1623 = vmul.f32 %v1610, 1.0614054
      %v1624 = vmul.f32 %v1612, 1.0614054
      %v1625 = vmul.f32 %v1614, 1.0614054
      %v1626 = vmul.f32 %v1616, 1.0614054
      %v1627 = vmul.f32 %v1618, 1.0614054
      %v1628 = vmul.f32 %v1620, 1.0614054
      %v1629 = vadd.f32 %v1621, -1.4531521
      %v1630 = vadd.f32 %v1622, -1.4531521
      %v1631 = vadd.f32 %v1623, -1.4531521
      %v1632 = vadd.f32 %v1624, -1.4531521
      %v1633 = vadd.f32 %v1625, -1.4531521
      %v1634 = vadd.f32 %v1626, -1.4531521
      %v1635 = vadd.f32 %v1627, -1.4531521
      %v1636 = vadd.f32 %v1628, -1.4531521
      %v1637 = vmul.f32 %v1629, %v1606
      %v1638 = vmul.f32 %v1630, %v1608
      %v1639 = vmul.f32 %v1631, %v1610
      %v1640 = vmul.f32 %v1632, %v1612
      %v1641 = vmul.f32 %v1633, %v1614
      %v1642 = vmul.f32 %v1634, %v1616
      %v1643 = vmul.f32 %v1635, %v1618
      %v1644 = vmul.f32 %v1636, %v1620
      %v1645 = vadd.f32 %v1637, 1.4214138
      %v1646 = vadd.f32 %v1638, 1.4214138
      %v1647 = vadd.f32 %v1639, 1.4214138
      %v1648 = vadd.f32 %v1640, 1.4214138
      %v1649 = vadd.f32 %v1641, 1.4214138
      %v1650 = vadd.f32 %v1642, 1.4214138
      %v1651 = vadd.f32 %v1643, 1.4214138
      %v1652 = vadd.f32 %v1644, 1.4214138
      %v1653 = vmul.f32 %v1645, %v1606
      %v1654 = vmul.f32 %v1646, %v1608
      %v1655 = vmul.f32 %v1647, %v1610
      %v1656 = vmul.f32 %v1648, %v1612
      %v1657 = vmul.f32 %v1649, %v1614
      %v1658 = vmul.f32 %v1650, %v1616
      %v1659 = vmul.f32 %v1651, %v1618
      %v1660 = vmul.f32 %v1652, %v1620
      %v1661 = vadd.f32 %v1653, -0.28449672
      %v1662 = vadd.f32 %v1654, -0.28449672
      %v1663 = vadd.f32 %v1655, -0.28449672
      %v1664 = vadd.f32 %v1656, -0.28449672
      %v1665 = vadd.f32 %v1657, -0.28449672
      %v1666 = vadd.f32 %v1658, -0.28449672
      %v1667 = vadd.f32 %v1659, -0.28449672
      %v1668 = vadd.f32 %v1660, -0.28449672
      %v1669 = vmul.f32 %v1661, %v1606
      %v1670 = vmul.f32 %v1662, %v1608
      %v1671 = vmul.f32 %v1663, %v1610
      %v1672 = vmul.f32 %v1664, %v1612
      %v1673 = vmul.f32 %v1665, %v1614
      %v1674 = vmul.f32 %v1666, %v1616
      %v1675 = vmul.f32 %v1667, %v1618
      %v1676 = vmul.f32 %v1668, %v1620
      %v1677 = vadd.f32 %v1669, 0.2548296
      %v1678 = vadd.f32 %v1670, 0.2548296
      %v1679 = vadd.f32 %v1671, 0.2548296
      %v1680 = vadd.f32 %v1672, 0.2548296
      %v1681 = vadd.f32 %v1673, 0.2548296
      %v1682 = vadd.f32 %v1674, 0.2548296
      %v1683 = vadd.f32 %v1675, 0.2548296
      %v1684 = vadd.f32 %v1676, 0.2548296
      %v1685 = vmul.f32 %v1677, %v1606
      %v1686 = vmul.f32 %v1678, %v1608
      %v1687 = vmul.f32 %v1679, %v1610
      %v1688 = vmul.f32 %v1680, %v1612
      %v1689 = vmul.f32 %v1681, %v1614
      %v1690 = vmul.f32 %v1682, %v1616
      %v1691 = vmul.f32 %v1683, %v1618
      %v1692 = vmul.f32 %v1684, %v1620
      %v1693 = vsub.f32 0.0, %v1581
      %v1694 = vsub.f32 0.0, %v1582
      %v1695 = vsub.f32 0.0, %v1583
      %v1696 = vsub.f32 0.0, %v1584
      %v1697 = vsub.f32 0.0, %v1585
      %v1698 = vsub.f32 0.0, %v1586
      %v1699 = vsub.f32 0.0, %v1587
      %v1700 = vsub.f32 0.0, %v1588
      %v1701 = vmul.f32 %v1693, %v1581
      %v1702 = vmul.f32 %v1694, %v1582
      %v1703 = vmul.f32 %v1695, %v1583
      %v1704 = vmul.f32 %v1696, %v1584
      %v1705 = vmul.f32 %v1697, %v1585
      %v1706 = vmul.f32 %v1698, %v1586
      %v1707 = vmul.f32 %v1699, %v1587
      %v1708 = vmul.f32 %v1700, %v1588
      %v1709 = vmul.f32 %v1701, 1.442695
      %v1710 = vpow.pop %v1709
      %v1711 = vmul.f32 %v1702, 1.442695
      %v1712 = vpow.pop %v1711
      %v1713 = vmul.f32 %v1703, 1.442695
      %v1714 = vpow.pop %v1713
      %v1715 = vmul.f32 %v1704, 1.442695
      %v1716 = vpow.pop %v1715
      %v1717 = vmul.f32 %v1705, 1.442695
      %v1718 = vpow.pop %v1717
      %v1719 = vmul.f32 %v1706, 1.442695
      %v1720 = vpow.pop %v1719
      %v1721 = vmul.f32 %v1707, 1.442695
      %v1722 = vpow.pop %v1721
      %v1723 = vmul.f32 %v1708, 1.442695
      %v1724 = vpow.pop %v1723
      %v1725 = vmul.f32 %v1685, %v1710
      %v1726 = vmul.f32 %v1686, %v1712
      %v1727 = vmul.f32 %v1687, %v1714
      %v1728 = vmul.f32 %v1688, %v1716
      %v1729 = vmul.f32 %v1689, %v1718
      %v1730 = vmul.f32 %v1690, %v1720
      %v1731 = vmul.f32 %v1691, %v1722
      %v1732 = vmul.f32 %v1692, %v1724
      %v1733 = vsub.f32 1.0, %v1725
      %v1734 = vsub.f32 1.0, %v1726
      %v1735 = vsub.f32 1.0, %v1727
      %v1736 = vsub.f32 1.0, %v1728
      %v1737 = vsub.f32 1.0, %v1729
      %v1738 = vsub.f32 1.0, %v1730
      %v1739 = vsub.f32 1.0, %v1731
      %v1740 = vsub.f32 1.0, %v1732
      %v1741 = vmul.f32 %v1573, %v1733
      %v1742 = vmul.f32 %v1574, %v1734
      %v1743 = vmul.f32 %v1575, %v1735
      %v1744 = vmul.f32 %v1576, %v1736
      %v1745 = vmul.f32 %v1577, %v1737
      %v1746 = vmul.f32 %v1578, %v1738
      %v1747 = vmul.f32 %v1579, %v1739
      %v1748 = vmul.f32 %v1580, %v1740
      %v1749 = vadd.f32 %v1741, 1.0
      %v1750 = vadd.f32 %v1742, 1.0
      %v1751 = vadd.f32 %v1743, 1.0
      %v1752 = vadd.f32 %v1744, 1.0
      %v1753 = vadd.f32 %v1745, 1.0
      %v1754 = vadd.f32 %v1746, 1.0
      %v1755 = vadd.f32 %v1747, 1.0
      %v1756 = vadd.f32 %v1748, 1.0
      %v1757 = vmul.f32 %v1549, %v1749
      %v1758 = vmul.f32 %v1550, %v1750
      %v1759 = vmul.f32 %v1551, %v1751
      %v1760 = vmul.f32 %v1552, %v1752
      %v1761 = vmul.f32 %v1553, %v1753
      %v1762 = vmul.f32 %v1554, %v1754
      %v1763 = vmul.f32 %v1555, %v1755
      %v1764 = vmul.f32 %v1556, %v1756
      %1773 = vrot.lane.b32.xlu0 %v1757, 120
      %v1774 = vpop.permute.xlu0 %1773
      %1775 = vrot.lane.b32.xlu0 %v1758, 120
      %v1776 = vpop.permute.xlu0 %1775
      %1777 = vrot.lane.b32.xlu0 %v1759, 120
      %v1778 = vpop.permute.xlu0 %1777
      %1779 = vrot.lane.b32.xlu0 %v1760, 120
      %v1780 = vpop.permute.xlu0 %1779
      %1781 = vrot.lane.b32.xlu0 %v1761, 120
      %v1782 = vpop.permute.xlu0 %1781
      %1783 = vrot.lane.b32.xlu0 %v1762, 120
      %v1784 = vpop.permute.xlu0 %1783
      %1785 = vrot.lane.b32.xlu0 %v1763, 120
      %v1786 = vpop.permute.xlu0 %1785
      %1787 = vrot.lane.b32.xlu0 %v1764, 120
      %v1788 = vpop.permute.xlu0 %1787
      %v1789 = vsel %vm520, %v1774, 0
      %v1791 = vsel %vm520, %v1776, 0
      %v1793 = vsel %vm520, %v1778, 0
      %v1795 = vsel %vm520, %v1780, 0
      %v1797 = vsel %vm520, %v1782, 0
      %v1799 = vsel %vm520, %v1784, 0
      %v1801 = vsel %vm520, %v1786, 0
      %v1803 = vsel %vm520, %v1788, 0
      %1805 = vmatprep.subr.mxu0 0.0
      %1806 = vmatpush1.msra.mxu0 %v516
      %1807 = vmatprep.subr.mxu0 0.0
      %1808 = vmatpush1.msra.mxu0 0.0
      %1809 = vmatprep.subr.mxu0 0.0
      %1810 = vmatpush1.msra.mxu0 0.0
      %1811 = vmatprep.subr.mxu0 0.0
      %1812 = vmatpush1.msra.mxu0 0.0
      %1813 = vmatprep.subr.mxu0 0.0
      %1814 = vmatpush1.msra.mxu0 0.0
      %1815 = vmatprep.subr.mxu0 0.0
      %1816 = vmatpush1.msra.mxu0 0.0
      %1817 = vmatprep.subr.mxu0 0.0
      %1818 = vmatpush1.msra.mxu0 0.0
      %1819 = vmatprep.subr.mxu0 0.0
      %1820 = vmatpush1.msra.mxu0 0.0
      %1821 = vmatprep.subr.mxu0 0.0
      %1822 = vmatpush1.msra.mxu0 0.0
      %1823 = vmatprep.subr.mxu0 0.0
      %1824 = vmatpush1.msra.mxu0 0.0
      %1825 = vmatprep.subr.mxu0 0.0
      %1826 = vmatpush1.msra.mxu0 0.0
      %1827 = vmatprep.subr.mxu0 0.0
      %1828 = vmatpush1.msra.mxu0 0.0
      %1829 = vmatprep.subr.mxu0 0.0
      %1830 = vmatpush1.msra.mxu0 0.0
      %1831 = vmatprep.subr.mxu0 0.0
      %1832 = vmatpush1.msra.mxu0 0.0
      %1833 = vmatprep.subr.mxu0 0.0
      %1834 = vmatpush1.msra.mxu0 0.0
      %1835 = vmatprep.subr.mxu0 0.0
      %1836 = vmatpush1.msra.mxu0 0.0
      %1837 = vmatprep.subr.mxu0 0.0
      %1838 = vmatpush1.msra.mxu0 0.0
      %1839 = vmatprep.subr.mxu0 0.0
      %1840 = vmatpush1.msra.mxu0 0.0
      %1841 = vmatprep.subr.mxu0 0.0
      %1842 = vmatpush1.msra.mxu0 0.0
      %1843 = vmatprep.subr.mxu0 0.0
      %1844 = vmatpush1.msra.mxu0 0.0
      %1845 = vmatprep.subr.mxu0 0.0
      %1846 = vmatpush1.msra.mxu0 0.0
      %1847 = vmatprep.subr.mxu0 0.0
      %1848 = vmatpush1.msra.mxu0 0.0
      %1849 = vmatprep.subr.mxu0 0.0
      %1850 = vmatpush1.msra.mxu0 0.0
      %1851 = vmatprep.subr.mxu0 0.0
      %1852 = vmatpush1.msra.mxu0 0.0
      %1853 = vmatprep.subr.mxu0 0.0
      %1854 = vmatpush1.msra.mxu0 0.0
      %1855 = vmatprep.subr.mxu0 0.0
      %1856 = vmatpush1.msra.mxu0 0.0
      %1857 = vmatprep.subr.mxu0 0.0
      %1858 = vmatpush1.msra.mxu0 0.0
      %1859 = vmatprep.subr.mxu0 0.0
      %1860 = vmatpush1.msra.mxu0 0.0
      %1861 = vmatprep.subr.mxu0 0.0
      %1862 = vmatpush1.msra.mxu0 0.0
      %1863 = vmatprep.subr.mxu0 0.0
      %1864 = vmatpush1.msra.mxu0 0.0
      %1865 = vmatprep.subr.mxu0 0.0
      %1866 = vmatpush1.msra.mxu0 0.0
      %1867 = vmatprep.subr.mxu0 0.0
      %1868 = vmatpush1.msra.mxu0 0.0
      %1869 = vmatprep.mubr.f32.mxu0 0.0
      %1870 = vmatmul.mubr.f32.gmra.mrb[0].mxu0 %v1789
      %v1871 = vpop.f32.mrb[0].mxu0
      %v1872 = vadd.f32 %v874, %v1871
      %v1873 = vpop.f32.mrb[0].mxu0
      %1874 = vmatprep.mubr.f32.mxu0 0.0
      %1875 = vmatmul.mubr.f32.gmra.mrb[0].mxu0 %v1791
      %v1876 = vpop.f32.mrb[0].mxu0
      %v1877 = vadd.f32 %v874, %v1876
      %v1878 = vpop.f32.mrb[0].mxu0
      %1879 = vmatprep.mubr.f32.mxu0 0.0
      %1880 = vmatmul.mubr.f32.gmra.mrb[0].mxu0 %v1793
      %v1881 = vpop.f32.mrb[0].mxu0
      %v1882 = vadd.f32 %v874, %v1881
      %v1883 = vpop.f32.mrb[0].mxu0
      %1884 = vmatprep.mubr.f32.mxu0 0.0
      %1885 = vmatmul.mubr.f32.gmra.mrb[0].mxu0 %v1795
      %v1886 = vpop.f32.mrb[0].mxu0
      %v1887 = vadd.f32 %v874, %v1886
      %v1888 = vpop.f32.mrb[0].mxu0
      %1889 = vmatprep.mubr.f32.mxu0 0.0
      %1890 = vmatmul.mubr.f32.gmra.mrb[0].mxu0 %v1797
      %v1891 = vpop.f32.mrb[0].mxu0
      %v1892 = vadd.f32 %v874, %v1891
      %v1893 = vpop.f32.mrb[0].mxu0
      %1894 = vmatprep.mubr.f32.mxu0 0.0
      %1895 = vmatmul.mubr.f32.gmra.mrb[0].mxu0 %v1799
      %v1896 = vpop.f32.mrb[0].mxu0
      %v1897 = vadd.f32 %v874, %v1896
      %v1898 = vpop.f32.mrb[0].mxu0
      %1899 = vmatprep.mubr.f32.mxu0 0.0
      %1900 = vmatmul.mubr.f32.gmra.mrb[0].mxu0 %v1801
      %v1901 = vpop.f32.mrb[0].mxu0
      %v1902 = vadd.f32 %v874, %v1901
      %v1903 = vpop.f32.mrb[0].mxu0
      %1904 = vmatprep.mubr.f32.mxu0 0.0
      %1905 = vmatmul.mubr.f32.gmra.mrb[0].mxu0 %v1803
      %v1906 = vpop.f32.mrb[0].mxu0
      %v1907 = vadd.f32 %v874, %v1906
      %v1908 = vpop.f32.mrb[0].mxu0
      %1909 = vdwg.mxu0
      %v1910 = vmul.f32 %v1872, 0.5
      %v1911 = vmul.f32 %v1877, 0.5
      %v1912 = vmul.f32 %v1882, 0.5
      %v1913 = vmul.f32 %v1887, 0.5
      %v1914 = vmul.f32 %v1892, 0.5
      %v1915 = vmul.f32 %v1897, 0.5
      %v1916 = vmul.f32 %v1902, 0.5
      %v1917 = vmul.f32 %v1907, 0.5
      %v1918 = vmul.f32 %v1872, 0.70710677
      %v1919 = vmul.f32 %v1877, 0.70710677
      %v1920 = vmul.f32 %v1882, 0.70710677
      %v1921 = vmul.f32 %v1887, 0.70710677
      %v1922 = vmul.f32 %v1892, 0.70710677
      %v1923 = vmul.f32 %v1897, 0.70710677
      %v1924 = vmul.f32 %v1902, 0.70710677
      %v1925 = vmul.f32 %v1907, 0.70710677
      %vm1926 = vcmp.ge.f32.partialorder %v1918, 0.0
      %vm1927 = vcmp.ge.f32.partialorder %v1919, 0.0
      %vm1928 = vcmp.ge.f32.partialorder %v1920, 0.0
      %vm1929 = vcmp.ge.f32.partialorder %v1921, 0.0
      %vm1930 = vcmp.ge.f32.partialorder %v1922, 0.0
      %vm1931 = vcmp.ge.f32.partialorder %v1923, 0.0
      %vm1932 = vcmp.ge.f32.partialorder %v1924, 0.0
      %vm1933 = vcmp.ge.f32.partialorder %v1925, 0.0
      %v1934 = vsel %vm1926, 1.0, -1.0
      %v1935 = vsel %vm1927, 1.0, -1.0
      %v1936 = vsel %vm1928, 1.0, -1.0
      %v1937 = vsel %vm1929, 1.0, -1.0
      %v1938 = vsel %vm1930, 1.0, -1.0
      %v1939 = vsel %vm1931, 1.0, -1.0
      %v1940 = vsel %vm1932, 1.0, -1.0
      %v1941 = vsel %vm1933, 1.0, -1.0
      %v1942 = vand.u32 2147483647, %v1918
      %v1943 = vand.u32 2147483647, %v1919
      %v1944 = vand.u32 2147483647, %v1920
      %v1945 = vand.u32 2147483647, %v1921
      %v1946 = vand.u32 2147483647, %v1922
      %v1947 = vand.u32 2147483647, %v1923
      %v1948 = vand.u32 2147483647, %v1924
      %v1949 = vand.u32 2147483647, %v1925
      %v1950 = vmul.f32 %v1942, 0.3275911
      %v1951 = vmul.f32 %v1943, 0.3275911
      %v1952 = vmul.f32 %v1944, 0.3275911
      %v1953 = vmul.f32 %v1945, 0.3275911
      %v1954 = vmul.f32 %v1946, 0.3275911
      %v1955 = vmul.f32 %v1947, 0.3275911
      %v1956 = vmul.f32 %v1948, 0.3275911
      %v1957 = vmul.f32 %v1949, 0.3275911
      %v1958 = vadd.f32 %v1950, 1.0
      %v1959 = vadd.f32 %v1951, 1.0
      %v1960 = vadd.f32 %v1952, 1.0
      %v1961 = vadd.f32 %v1953, 1.0
      %v1962 = vadd.f32 %v1954, 1.0
      %v1963 = vadd.f32 %v1955, 1.0
      %v1964 = vadd.f32 %v1956, 1.0
      %v1965 = vadd.f32 %v1957, 1.0
      %v1966 = vrcp.pop %v1958
      %v1967 = vmul.f32 1.0, %v1966
      %v1968 = vrcp.pop %v1959
      %v1969 = vmul.f32 1.0, %v1968
      %v1970 = vrcp.pop %v1960
      %v1971 = vmul.f32 1.0, %v1970
      %v1972 = vrcp.pop %v1961
      %v1973 = vmul.f32 1.0, %v1972
      %v1974 = vrcp.pop %v1962
      %v1975 = vmul.f32 1.0, %v1974
      %v1976 = vrcp.pop %v1963
      %v1977 = vmul.f32 1.0, %v1976
      %v1978 = vrcp.pop %v1964
      %v1979 = vmul.f32 1.0, %v1978
      %v1980 = vrcp.pop %v1965
      %v1981 = vmul.f32 1.0, %v1980
      %v1982 = vmul.f32 %v1967, 1.0614054
      %v1983 = vmul.f32 %v1969, 1.0614054
      %v1984 = vmul.f32 %v1971, 1.0614054
      %v1985 = vmul.f32 %v1973, 1.0614054
      %v1986 = vmul.f32 %v1975, 1.0614054
      %v1987 = vmul.f32 %v1977, 1.0614054
      %v1988 = vmul.f32 %v1979, 1.0614054
      %v1989 = vmul.f32 %v1981, 1.0614054
      %v1990 = vadd.f32 %v1982, -1.4531521
      %v1991 = vadd.f32 %v1983, -1.4531521
      %v1992 = vadd.f32 %v1984, -1.4531521
      %v1993 = vadd.f32 %v1985, -1.4531521
      %v1994 = vadd.f32 %v1986, -1.4531521
      %v1995 = vadd.f32 %v1987, -1.4531521
      %v1996 = vadd.f32 %v1988, -1.4531521
      %v1997 = vadd.f32 %v1989, -1.4531521
      %v1998 = vmul.f32 %v1990, %v1967
      %v1999 = vmul.f32 %v1991, %v1969
      %v2000 = vmul.f32 %v1992, %v1971
      %v2001 = vmul.f32 %v1993, %v1973
      %v2002 = vmul.f32 %v1994, %v1975
      %v2003 = vmul.f32 %v1995, %v1977
      %v2004 = vmul.f32 %v1996, %v1979
      %v2005 = vmul.f32 %v1997, %v1981
      %v2006 = vadd.f32 %v1998, 1.4214138
      %v2007 = vadd.f32 %v1999, 1.4214138
      %v2008 = vadd.f32 %v2000, 1.4214138
      %v2009 = vadd.f32 %v2001, 1.4214138
      %v2010 = vadd.f32 %v2002, 1.4214138
      %v2011 = vadd.f32 %v2003, 1.4214138
      %v2012 = vadd.f32 %v2004, 1.4214138
      %v2013 = vadd.f32 %v2005, 1.4214138
      %v2014 = vmul.f32 %v2006, %v1967
      %v2015 = vmul.f32 %v2007, %v1969
      %v2016 = vmul.f32 %v2008, %v1971
      %v2017 = vmul.f32 %v2009, %v1973
      %v2018 = vmul.f32 %v2010, %v1975
      %v2019 = vmul.f32 %v2011, %v1977
      %v2020 = vmul.f32 %v2012, %v1979
      %v2021 = vmul.f32 %v2013, %v1981
      %v2022 = vadd.f32 %v2014, -0.28449672
      %v2023 = vadd.f32 %v2015, -0.28449672
      %v2024 = vadd.f32 %v2016, -0.28449672
      %v2025 = vadd.f32 %v2017, -0.28449672
      %v2026 = vadd.f32 %v2018, -0.28449672
      %v2027 = vadd.f32 %v2019, -0.28449672
      %v2028 = vadd.f32 %v2020, -0.28449672
      %v2029 = vadd.f32 %v2021, -0.28449672
      %v2030 = vmul.f32 %v2022, %v1967
      %v2031 = vmul.f32 %v2023, %v1969
      %v2032 = vmul.f32 %v2024, %v1971
      %v2033 = vmul.f32 %v2025, %v1973
      %v2034 = vmul.f32 %v2026, %v1975
      %v2035 = vmul.f32 %v2027, %v1977
      %v2036 = vmul.f32 %v2028, %v1979
      %v2037 = vmul.f32 %v2029, %v1981
      %v2038 = vadd.f32 %v2030, 0.2548296
      %v2039 = vadd.f32 %v2031, 0.2548296
      %v2040 = vadd.f32 %v2032, 0.2548296
      %v2041 = vadd.f32 %v2033, 0.2548296
      %v2042 = vadd.f32 %v2034, 0.2548296
      %v2043 = vadd.f32 %v2035, 0.2548296
      %v2044 = vadd.f32 %v2036, 0.2548296
      %v2045 = vadd.f32 %v2037, 0.2548296
      %v2046 = vmul.f32 %v2038, %v1967
      %v2047 = vmul.f32 %v2039, %v1969
      %v2048 = vmul.f32 %v2040, %v1971
      %v2049 = vmul.f32 %v2041, %v1973
      %v2050 = vmul.f32 %v2042, %v1975
      %v2051 = vmul.f32 %v2043, %v1977
      %v2052 = vmul.f32 %v2044, %v1979
      %v2053 = vmul.f32 %v2045, %v1981
      %v2054 = vsub.f32 0.0, %v1942
      %v2055 = vsub.f32 0.0, %v1943
      %v2056 = vsub.f32 0.0, %v1944
      %v2057 = vsub.f32 0.0, %v1945
      %v2058 = vsub.f32 0.0, %v1946
      %v2059 = vsub.f32 0.0, %v1947
      %v2060 = vsub.f32 0.0, %v1948
      %v2061 = vsub.f32 0.0, %v1949
      %v2062 = vmul.f32 %v2054, %v1942
      %v2063 = vmul.f32 %v2055, %v1943
      %v2064 = vmul.f32 %v2056, %v1944
      %v2065 = vmul.f32 %v2057, %v1945
      %v2066 = vmul.f32 %v2058, %v1946
      %v2067 = vmul.f32 %v2059, %v1947
      %v2068 = vmul.f32 %v2060, %v1948
      %v2069 = vmul.f32 %v2061, %v1949
      %v2070 = vmul.f32 %v2062, 1.442695
      %v2071 = vpow.pop %v2070
      %v2072 = vmul.f32 %v2063, 1.442695
      %v2073 = vpow.pop %v2072
      %v2074 = vmul.f32 %v2064, 1.442695
      %v2075 = vpow.pop %v2074
      %v2076 = vmul.f32 %v2065, 1.442695
      %v2077 = vpow.pop %v2076
      %v2078 = vmul.f32 %v2066, 1.442695
      %v2079 = vpow.pop %v2078
      %v2080 = vmul.f32 %v2067, 1.442695
      %v2081 = vpow.pop %v2080
      %v2082 = vmul.f32 %v2068, 1.442695
      %v2083 = vpow.pop %v2082
      %v2084 = vmul.f32 %v2069, 1.442695
      %v2085 = vpow.pop %v2084
      %v2086 = vmul.f32 %v2046, %v2071
      %v2087 = vmul.f32 %v2047, %v2073
      %v2088 = vmul.f32 %v2048, %v2075
      %v2089 = vmul.f32 %v2049, %v2077
      %v2090 = vmul.f32 %v2050, %v2079
      %v2091 = vmul.f32 %v2051, %v2081
      %v2092 = vmul.f32 %v2052, %v2083
      %v2093 = vmul.f32 %v2053, %v2085
      %v2094 = vsub.f32 1.0, %v2086
      %v2095 = vsub.f32 1.0, %v2087
      %v2096 = vsub.f32 1.0, %v2088
      %v2097 = vsub.f32 1.0, %v2089
      %v2098 = vsub.f32 1.0, %v2090
      %v2099 = vsub.f32 1.0, %v2091
      %v2100 = vsub.f32 1.0, %v2092
      %v2101 = vsub.f32 1.0, %v2093
      %v2102 = vmul.f32 %v1934, %v2094
      %v2103 = vmul.f32 %v1935, %v2095
      %v2104 = vmul.f32 %v1936, %v2096
      %v2105 = vmul.f32 %v1937, %v2097
      %v2106 = vmul.f32 %v1938, %v2098
      %v2107 = vmul.f32 %v1939, %v2099
      %v2108 = vmul.f32 %v1940, %v2100
      %v2109 = vmul.f32 %v1941, %v2101
      %v2110 = vadd.f32 %v2102, 1.0
      %v2111 = vadd.f32 %v2103, 1.0
      %v2112 = vadd.f32 %v2104, 1.0
      %v2113 = vadd.f32 %v2105, 1.0
      %v2114 = vadd.f32 %v2106, 1.0
      %v2115 = vadd.f32 %v2107, 1.0
      %v2116 = vadd.f32 %v2108, 1.0
      %v2117 = vadd.f32 %v2109, 1.0
      %v2118 = vmul.f32 %v1910, %v2110
      %v2119 = vmul.f32 %v1911, %v2111
      %v2120 = vmul.f32 %v1912, %v2112
      %v2121 = vmul.f32 %v1913, %v2113
      %v2122 = vmul.f32 %v1914, %v2114
      %v2123 = vmul.f32 %v1915, %v2115
      %v2124 = vmul.f32 %v1916, %v2116
      %v2125 = vmul.f32 %v1917, %v2117
      %v2127 = vsel %vm1221, %v2118, 0
      %v2130 = vsel %vm1221, %v2119, 0
      %v2133 = vsel %vm1221, %v2120, 0
      %v2136 = vsel %vm1221, %v2121, 0
      %v2139 = vsel %vm1221, %v2122, 0
      %v2142 = vsel %vm1221, %v2123, 0
      %v2145 = vsel %vm1221, %v2124, 0
      %v2148 = vsel %vm1221, %v2125, 0
      %2150 = vmatprep.subr.mxu0 0.0
      %2151 = vmatpush1.msra.mxu0 %v518
      %2152 = vmatprep.subr.mxu0 0.0
      %2153 = vmatpush1.msra.mxu0 %v519
      %2154 = vmatprep.subr.mxu0 0.0
      %2155 = vmatpush1.msra.mxu0 0.0
      %2156 = vmatprep.subr.mxu0 0.0
      %2157 = vmatpush1.msra.mxu0 0.0
      %2158 = vmatprep.subr.mxu0 0.0
      %2159 = vmatpush1.msra.mxu0 0.0
      %2160 = vmatprep.subr.mxu0 0.0
      %2161 = vmatpush1.msra.mxu0 0.0
      %2162 = vmatprep.subr.mxu0 0.0
      %2163 = vmatpush1.msra.mxu0 0.0
      %2164 = vmatprep.subr.mxu0 0.0
      %2165 = vmatpush1.msra.mxu0 0.0
      %2166 = vmatprep.subr.mxu0 0.0
      %2167 = vmatpush1.msra.mxu0 0.0
      %2168 = vmatprep.subr.mxu0 0.0
      %2169 = vmatpush1.msra.mxu0 0.0
      %2170 = vmatprep.subr.mxu0 0.0
      %2171 = vmatpush1.msra.mxu0 0.0
      %2172 = vmatprep.subr.mxu0 0.0
      %2173 = vmatpush1.msra.mxu0 0.0
      %2174 = vmatprep.subr.mxu0 0.0
      %2175 = vmatpush1.msra.mxu0 0.0
      %2176 = vmatprep.subr.mxu0 0.0
      %2177 = vmatpush1.msra.mxu0 0.0
      %2178 = vmatprep.subr.mxu0 0.0
      %2179 = vmatpush1.msra.mxu0 0.0
      %2180 = vmatprep.subr.mxu0 0.0
      %2181 = vmatpush1.msra.mxu0 0.0
      %2182 = vmatprep.subr.mxu0 0.0
      %2183 = vmatpush1.msra.mxu0 0.0
      %2184 = vmatprep.subr.mxu0 0.0
      %2185 = vmatpush1.msra.mxu0 0.0
      %2186 = vmatprep.subr.mxu0 0.0
      %2187 = vmatpush1.msra.mxu0 0.0
      %2188 = vmatprep.subr.mxu0 0.0
      %2189 = vmatpush1.msra.mxu0 0.0
      %2190 = vmatprep.subr.mxu0 0.0
      %2191 = vmatpush1.msra.mxu0 0.0
      %2192 = vmatprep.subr.mxu0 0.0
      %2193 = vmatpush1.msra.mxu0 0.0
      %2194 = vmatprep.subr.mxu0 0.0
      %2195 = vmatpush1.msra.mxu0 0.0
      %2196 = vmatprep.subr.mxu0 0.0
      %2197 = vmatpush1.msra.mxu0 0.0
      %2198 = vmatprep.subr.mxu0 0.0
      %2199 = vmatpush1.msra.mxu0 0.0
      %2200 = vmatprep.subr.mxu0 0.0
      %2201 = vmatpush1.msra.mxu0 0.0
      %2202 = vmatprep.subr.mxu0 0.0
      %2203 = vmatpush1.msra.mxu0 0.0
      %2204 = vmatprep.subr.mxu0 0.0
      %2205 = vmatpush1.msra.mxu0 0.0
      %2206 = vmatprep.subr.mxu0 0.0
      %2207 = vmatpush1.msra.mxu0 0.0
      %2208 = vmatprep.subr.mxu0 0.0
      %2209 = vmatpush1.msra.mxu0 0.0
      %2210 = vmatprep.subr.mxu0 0.0
      %2211 = vmatpush1.msra.mxu0 0.0
      %2212 = vmatprep.subr.mxu0 0.0
      %2213 = vmatpush1.msra.mxu0 0.0
      %2214 = vmatprep.mubr.f32.mxu0 0.0
      %2215 = vmatmul.mubr.f32.gmra.mrb[0].mxu0 %v2127
      %v2216 = vpop.f32.mrb[0].mxu0
      %v2217 = vadd.f32 0.0, %v2216
      %v2218 = vpop.f32.mrb[0].mxu0
      %2219 = vmatprep.mubr.f32.mxu0 0.0
      %2220 = vmatmul.mubr.f32.gmra.mrb[0].mxu0 %v2130
      %v2221 = vpop.f32.mrb[0].mxu0
      %v2222 = vadd.f32 0.0, %v2221
      %v2223 = vpop.f32.mrb[0].mxu0
      %2224 = vmatprep.mubr.f32.mxu0 0.0
      %2225 = vmatmul.mubr.f32.gmra.mrb[0].mxu0 %v2133
      %v2226 = vpop.f32.mrb[0].mxu0
      %v2227 = vadd.f32 0.0, %v2226
      %v2228 = vpop.f32.mrb[0].mxu0
      %2229 = vmatprep.mubr.f32.mxu0 0.0
      %2230 = vmatmul.mubr.f32.gmra.mrb[0].mxu0 %v2136
      %v2231 = vpop.f32.mrb[0].mxu0
      %v2232 = vadd.f32 0.0, %v2231
      %v2233 = vpop.f32.mrb[0].mxu0
      %2234 = vmatprep.mubr.f32.mxu0 0.0
      %2235 = vmatmul.mubr.f32.gmra.mrb[0].mxu0 %v2139
      %v2236 = vpop.f32.mrb[0].mxu0
      %v2237 = vadd.f32 0.0, %v2236
      %v2238 = vpop.f32.mrb[0].mxu0
      %2239 = vmatprep.mubr.f32.mxu0 0.0
      %2240 = vmatmul.mubr.f32.gmra.mrb[0].mxu0 %v2142
      %v2241 = vpop.f32.mrb[0].mxu0
      %v2242 = vadd.f32 0.0, %v2241
      %v2243 = vpop.f32.mrb[0].mxu0
      %2244 = vmatprep.mubr.f32.mxu0 0.0
      %2245 = vmatmul.mubr.f32.gmra.mrb[0].mxu0 %v2145
      %v2246 = vpop.f32.mrb[0].mxu0
      %v2247 = vadd.f32 0.0, %v2246
      %v2248 = vpop.f32.mrb[0].mxu0
      %2249 = vmatprep.mubr.f32.mxu0 0.0
      %2250 = vmatmul.mubr.f32.gmra.mrb[0].mxu0 %v2148
      %v2251 = vpop.f32.mrb[0].mxu0
      %v2252 = vadd.f32 0.0, %v2251
      %v2253 = vpop.f32.mrb[0].mxu0
      %2254 = vdwg.mxu0
      %2263 = vrot.lane.b32.xlu0 %v2217, 16
      %v2264 = vpop.permute.xlu0 %2263
      %2265 = vrot.lane.b32.xlu0 %v2222, 16
      %v2266 = vpop.permute.xlu0 %2265
      %2267 = vrot.lane.b32.xlu0 %v2227, 16
      %v2268 = vpop.permute.xlu0 %2267
      %2269 = vrot.lane.b32.xlu0 %v2232, 16
      %v2270 = vpop.permute.xlu0 %2269
      %2271 = vrot.lane.b32.xlu0 %v2237, 16
      %v2272 = vpop.permute.xlu0 %2271
      %2273 = vrot.lane.b32.xlu0 %v2242, 16
      %v2274 = vpop.permute.xlu0 %2273
      %2275 = vrot.lane.b32.xlu0 %v2247, 16
      %v2276 = vpop.permute.xlu0 %2275
      %2277 = vrot.lane.b32.xlu0 %v2252, 16
      %v2278 = vpop.permute.xlu0 %2277
      %vm2287 = vcmask 261248
      %2288 = vst.msk [vmem:[%s363] sm:$0xff] %vm2287, %v2264
      %2289 = vst.msk [vmem:[%s363 + $0x8] sm:$0xff] %vm2287, %v2266
      %2290 = vst.msk [vmem:[%s363 + $0x10] sm:$0xff] %vm2287, %v2268
      %2291 = vst.msk [vmem:[%s363 + $0x18] sm:$0xff] %vm2287, %v2270
      %2292 = vst.msk [vmem:[%s363 + $0x20] sm:$0xff] %vm2287, %v2272
      %2293 = vst.msk [vmem:[%s363 + $0x28] sm:$0xff] %vm2287, %v2274
      %2294 = vst.msk [vmem:[%s363 + $0x30] sm:$0xff] %vm2287, %v2276
      %2295 = vst.msk [vmem:[%s363 + $0x38] sm:$0xff] %vm2287, %v2278
      %2296 = vrot.lane.b32.xlu0 %v476, 112
      %v2297 = vpop.permute.xlu0 %2296
      %2298 = vrot.lane.b32.xlu0 %v481, 112
      %v2299 = vpop.permute.xlu0 %2298
      %2300 = vrot.lane.b32.xlu0 %v486, 112
      %v2301 = vpop.permute.xlu0 %2300
      %2302 = vrot.lane.b32.xlu0 %v491, 112
      %v2303 = vpop.permute.xlu0 %2302
      %2304 = vrot.lane.b32.xlu0 %v496, 112
      %v2305 = vpop.permute.xlu0 %2304
      %2306 = vrot.lane.b32.xlu0 %v501, 112
      %v2307 = vpop.permute.xlu0 %2306
      %2308 = vrot.lane.b32.xlu0 %v506, 112
      %v2309 = vpop.permute.xlu0 %2308
      %2310 = vrot.lane.b32.xlu0 %v511, 112
      %v2311 = vpop.permute.xlu0 %2310
      %v2320 = vsel %vm520, %v2297, 0.0
      %2321 = vadd.xlane.f32.xlu0 %v2320
      %v2322 = vpop.xlane.xlu0 %2321
      %v2323 = vsel %vm520, %v2299, 0.0
      %2324 = vadd.xlane.f32.xlu0 %v2323
      %v2325 = vpop.xlane.xlu0 %2324
      %v2326 = vsel %vm520, %v2301, 0.0
      %2327 = vadd.xlane.f32.xlu0 %v2326
      %v2328 = vpop.xlane.xlu0 %2327
      %v2329 = vsel %vm520, %v2303, 0.0
      %2330 = vadd.xlane.f32.xlu0 %v2329
      %v2331 = vpop.xlane.xlu0 %2330
      %v2332 = vsel %vm520, %v2305, 0.0
      %2333 = vadd.xlane.f32.xlu0 %v2332
      %v2334 = vpop.xlane.xlu0 %2333
      %v2335 = vsel %vm520, %v2307, 0.0
      %2336 = vadd.xlane.f32.xlu0 %v2335
      %v2337 = vpop.xlane.xlu0 %2336
      %v2338 = vsel %vm520, %v2309, 0.0
      %2339 = vadd.xlane.f32.xlu0 %v2338
      %v2340 = vpop.xlane.xlu0 %2339
      %v2341 = vsel %vm520, %v2311, 0.0
      %2342 = vadd.xlane.f32.xlu0 %v2341
      %v2343 = vpop.xlane.xlu0 %2342
      %v2344 = vmul.f32 %v2322, %v545
      %v2345 = vmul.f32 %v2325, %v545
      %v2346 = vmul.f32 %v2328, %v545
      %v2347 = vmul.f32 %v2331, %v545
      %v2348 = vmul.f32 %v2334, %v545
      %v2349 = vmul.f32 %v2337, %v545
      %v2350 = vmul.f32 %v2340, %v545
      %v2351 = vmul.f32 %v2343, %v545
      %v2352 = vsub.f32 %v476, %v2344
      %v2353 = vsub.f32 %v481, %v2345
      %v2354 = vsub.f32 %v486, %v2346
      %v2355 = vsub.f32 %v491, %v2347
      %v2356 = vsub.f32 %v496, %v2348
      %v2357 = vsub.f32 %v501, %v2349
      %v2358 = vsub.f32 %v506, %v2350
      %v2359 = vsub.f32 %v511, %v2351
      %v2360 = vmul.f32 %v2352, %v2352
      %v2361 = vmul.f32 %v2353, %v2353
      %v2362 = vmul.f32 %v2354, %v2354
      %v2363 = vmul.f32 %v2355, %v2355
      %v2364 = vmul.f32 %v2356, %v2356
      %v2365 = vmul.f32 %v2357, %v2357
      %v2366 = vmul.f32 %v2358, %v2358
      %v2367 = vmul.f32 %v2359, %v2359
      %2376 = vrot.lane.b32.xlu0 %v2360, 112
      %v2377 = vpop.permute.xlu0 %2376
      %2378 = vrot.lane.b32.xlu0 %v2361, 112
      %v2379 = vpop.permute.xlu0 %2378
      %2380 = vrot.lane.b32.xlu0 %v2362, 112
      %v2381 = vpop.permute.xlu0 %2380
      %2382 = vrot.lane.b32.xlu0 %v2363, 112
      %v2383 = vpop.permute.xlu0 %2382
      %2384 = vrot.lane.b32.xlu0 %v2364, 112
      %v2385 = vpop.permute.xlu0 %2384
      %2386 = vrot.lane.b32.xlu0 %v2365, 112
      %v2387 = vpop.permute.xlu0 %2386
      %2388 = vrot.lane.b32.xlu0 %v2366, 112
      %v2389 = vpop.permute.xlu0 %2388
      %2390 = vrot.lane.b32.xlu0 %v2367, 112
      %v2391 = vpop.permute.xlu0 %2390
      %v2400 = vsel %vm520, %v2377, 0.0
      %2401 = vadd.xlane.f32.xlu0 %v2400
      %v2402 = vpop.xlane.xlu0 %2401
      %v2403 = vsel %vm520, %v2379, 0.0
      %2404 = vadd.xlane.f32.xlu0 %v2403
      %v2405 = vpop.xlane.xlu0 %2404
      %v2406 = vsel %vm520, %v2381, 0.0
      %2407 = vadd.xlane.f32.xlu0 %v2406
      %v2408 = vpop.xlane.xlu0 %2407
      %v2409 = vsel %vm520, %v2383, 0.0
      %2410 = vadd.xlane.f32.xlu0 %v2409
      %v2411 = vpop.xlane.xlu0 %2410
      %v2412 = vsel %vm520, %v2385, 0.0
      %2413 = vadd.xlane.f32.xlu0 %v2412
      %v2414 = vpop.xlane.xlu0 %2413
      %v2415 = vsel %vm520, %v2387, 0.0
      %2416 = vadd.xlane.f32.xlu0 %v2415
      %v2417 = vpop.xlane.xlu0 %2416
      %v2418 = vsel %vm520, %v2389, 0.0
      %2419 = vadd.xlane.f32.xlu0 %v2418
      %v2420 = vpop.xlane.xlu0 %2419
      %v2421 = vsel %vm520, %v2391, 0.0
      %2422 = vadd.xlane.f32.xlu0 %v2421
      %v2423 = vpop.xlane.xlu0 %2422
      %v2424 = vmul.f32 %v2402, %v545
      %v2425 = vmul.f32 %v2405, %v545
      %v2426 = vmul.f32 %v2408, %v545
      %v2427 = vmul.f32 %v2411, %v545
      %v2428 = vmul.f32 %v2414, %v545
      %v2429 = vmul.f32 %v2417, %v545
      %v2430 = vmul.f32 %v2420, %v545
      %v2431 = vmul.f32 %v2423, %v545
      %v2432 = vadd.f32 %v2424, 1e-06
      %v2433 = vadd.f32 %v2425, 1e-06
      %v2434 = vadd.f32 %v2426, 1e-06
      %v2435 = vadd.f32 %v2427, 1e-06
      %v2436 = vadd.f32 %v2428, 1e-06
      %v2437 = vadd.f32 %v2429, 1e-06
      %v2438 = vadd.f32 %v2430, 1e-06
      %v2439 = vadd.f32 %v2431, 1e-06
      %v2440 = vrsqrt.pop %v2432
      %v2441 = vrsqrt.pop %v2433
      %v2442 = vrsqrt.pop %v2434
      %v2443 = vrsqrt.pop %v2435
      %v2444 = vrsqrt.pop %v2436
      %v2445 = vrsqrt.pop %v2437
      %v2446 = vrsqrt.pop %v2438
      %v2447 = vrsqrt.pop %v2439
      %v2448 = vmul.f32 %v2352, %v2440
      %v2449 = vmul.f32 %v2353, %v2441
      %v2450 = vmul.f32 %v2354, %v2442
      %v2451 = vmul.f32 %v2355, %v2443
      %v2452 = vmul.f32 %v2356, %v2444
      %v2453 = vmul.f32 %v2357, %v2445
      %v2454 = vmul.f32 %v2358, %v2446
      %v2455 = vmul.f32 %v2359, %v2447
      %2456 = vrot.lane.b32.xlu0 %v630, 16
      %v2457 = vpop.permute.xlu0 %2456
      %v2459 = vmul.f32 %v2448, %v2457
      %v2460 = vmul.f32 %v2449, %v2457
      %v2461 = vmul.f32 %v2450, %v2457
      %v2462 = vmul.f32 %v2451, %v2457
      %v2463 = vmul.f32 %v2452, %v2457
      %v2464 = vmul.f32 %v2453, %v2457
      %v2465 = vmul.f32 %v2454, %v2457
      %v2466 = vmul.f32 %v2455, %v2457
      %2467 = vrot.lane.b32.xlu0 %v644, 16
      %v2468 = vpop.permute.xlu0 %2467
      %v2470 = vadd.f32 %v2459, %v2468
      %v2471 = vadd.f32 %v2460, %v2468
      %v2472 = vadd.f32 %v2461, %v2468
      %v2473 = vadd.f32 %v2462, %v2468
      %v2474 = vadd.f32 %v2463, %v2468
      %v2475 = vadd.f32 %v2464, %v2468
      %v2476 = vadd.f32 %v2465, %v2468
      %v2477 = vadd.f32 %v2466, %v2468
      %v2478 = vmul.f32 %v2470, 0.5
      %v2479 = vmul.f32 %v2471, 0.5
      %v2480 = vmul.f32 %v2472, 0.5
      %v2481 = vmul.f32 %v2473, 0.5
      %v2482 = vmul.f32 %v2474, 0.5
      %v2483 = vmul.f32 %v2475, 0.5
      %v2484 = vmul.f32 %v2476, 0.5
      %v2485 = vmul.f32 %v2477, 0.5
      %v2486 = vmul.f32 %v2470, 0.70710677
      %v2487 = vmul.f32 %v2471, 0.70710677
      %v2488 = vmul.f32 %v2472, 0.70710677
      %v2489 = vmul.f32 %v2473, 0.70710677
      %v2490 = vmul.f32 %v2474, 0.70710677
      %v2491 = vmul.f32 %v2475, 0.70710677
      %v2492 = vmul.f32 %v2476, 0.70710677
      %v2493 = vmul.f32 %v2477, 0.70710677
      %vm2494 = vcmp.ge.f32.partialorder %v2486, 0.0
      %vm2495 = vcmp.ge.f32.partialorder %v2487, 0.0
      %vm2496 = vcmp.ge.f32.partialorder %v2488, 0.0
      %vm2497 = vcmp.ge.f32.partialorder %v2489, 0.0
      %vm2498 = vcmp.ge.f32.partialorder %v2490, 0.0
      %vm2499 = vcmp.ge.f32.partialorder %v2491, 0.0
      %vm2500 = vcmp.ge.f32.partialorder %v2492, 0.0
      %vm2501 = vcmp.ge.f32.partialorder %v2493, 0.0
      %v2502 = vsel %vm2494, 1.0, -1.0
      %v2503 = vsel %vm2495, 1.0, -1.0
      %v2504 = vsel %vm2496, 1.0, -1.0
      %v2505 = vsel %vm2497, 1.0, -1.0
      %v2506 = vsel %vm2498, 1.0, -1.0
      %v2507 = vsel %vm2499, 1.0, -1.0
      %v2508 = vsel %vm2500, 1.0, -1.0
      %v2509 = vsel %vm2501, 1.0, -1.0
      %v2510 = vand.u32 2147483647, %v2486
      %v2511 = vand.u32 2147483647, %v2487
      %v2512 = vand.u32 2147483647, %v2488
      %v2513 = vand.u32 2147483647, %v2489
      %v2514 = vand.u32 2147483647, %v2490
      %v2515 = vand.u32 2147483647, %v2491
      %v2516 = vand.u32 2147483647, %v2492
      %v2517 = vand.u32 2147483647, %v2493
      %v2518 = vmul.f32 %v2510, 0.3275911
      %v2519 = vmul.f32 %v2511, 0.3275911
      %v2520 = vmul.f32 %v2512, 0.3275911
      %v2521 = vmul.f32 %v2513, 0.3275911
      %v2522 = vmul.f32 %v2514, 0.3275911
      %v2523 = vmul.f32 %v2515, 0.3275911
      %v2524 = vmul.f32 %v2516, 0.3275911
      %v2525 = vmul.f32 %v2517, 0.3275911
      %v2526 = vadd.f32 %v2518, 1.0
      %v2527 = vadd.f32 %v2519, 1.0
      %v2528 = vadd.f32 %v2520, 1.0
      %v2529 = vadd.f32 %v2521, 1.0
      %v2530 = vadd.f32 %v2522, 1.0
      %v2531 = vadd.f32 %v2523, 1.0
      %v2532 = vadd.f32 %v2524, 1.0
      %v2533 = vadd.f32 %v2525, 1.0
      %v2534 = vrcp.pop %v2526
      %v2535 = vmul.f32 1.0, %v2534
      %v2536 = vrcp.pop %v2527
      %v2537 = vmul.f32 1.0, %v2536
      %v2538 = vrcp.pop %v2528
      %v2539 = vmul.f32 1.0, %v2538
      %v2540 = vrcp.pop %v2529
      %v2541 = vmul.f32 1.0, %v2540
      %v2542 = vrcp.pop %v2530
      %v2543 = vmul.f32 1.0, %v2542
      %v2544 = vrcp.pop %v2531
      %v2545 = vmul.f32 1.0, %v2544
      %v2546 = vrcp.pop %v2532
      %v2547 = vmul.f32 1.0, %v2546
      %v2548 = vrcp.pop %v2533
      %v2549 = vmul.f32 1.0, %v2548
      %v2550 = vmul.f32 %v2535, 1.0614054
      %v2551 = vmul.f32 %v2537, 1.0614054
      %v2552 = vmul.f32 %v2539, 1.0614054
      %v2553 = vmul.f32 %v2541, 1.0614054
      %v2554 = vmul.f32 %v2543, 1.0614054
      %v2555 = vmul.f32 %v2545, 1.0614054
      %v2556 = vmul.f32 %v2547, 1.0614054
      %v2557 = vmul.f32 %v2549, 1.0614054
      %v2558 = vadd.f32 %v2550, -1.4531521
      %v2559 = vadd.f32 %v2551, -1.4531521
      %v2560 = vadd.f32 %v2552, -1.4531521
      %v2561 = vadd.f32 %v2553, -1.4531521
      %v2562 = vadd.f32 %v2554, -1.4531521
      %v2563 = vadd.f32 %v2555, -1.4531521
      %v2564 = vadd.f32 %v2556, -1.4531521
      %v2565 = vadd.f32 %v2557, -1.4531521
      %v2566 = vmul.f32 %v2558, %v2535
      %v2567 = vmul.f32 %v2559, %v2537
      %v2568 = vmul.f32 %v2560, %v2539
      %v2569 = vmul.f32 %v2561, %v2541
      %v2570 = vmul.f32 %v2562, %v2543
      %v2571 = vmul.f32 %v2563, %v2545
      %v2572 = vmul.f32 %v2564, %v2547
      %v2573 = vmul.f32 %v2565, %v2549
      %v2574 = vadd.f32 %v2566, 1.4214138
      %v2575 = vadd.f32 %v2567, 1.4214138
      %v2576 = vadd.f32 %v2568, 1.4214138
      %v2577 = vadd.f32 %v2569, 1.4214138
      %v2578 = vadd.f32 %v2570, 1.4214138
      %v2579 = vadd.f32 %v2571, 1.4214138
      %v2580 = vadd.f32 %v2572, 1.4214138
      %v2581 = vadd.f32 %v2573, 1.4214138
      %v2582 = vmul.f32 %v2574, %v2535
      %v2583 = vmul.f32 %v2575, %v2537
      %v2584 = vmul.f32 %v2576, %v2539
      %v2585 = vmul.f32 %v2577, %v2541
      %v2586 = vmul.f32 %v2578, %v2543
      %v2587 = vmul.f32 %v2579, %v2545
      %v2588 = vmul.f32 %v2580, %v2547
      %v2589 = vmul.f32 %v2581, %v2549
      %v2590 = vadd.f32 %v2582, -0.28449672
      %v2591 = vadd.f32 %v2583, -0.28449672
      %v2592 = vadd.f32 %v2584, -0.28449672
      %v2593 = vadd.f32 %v2585, -0.28449672
      %v2594 = vadd.f32 %v2586, -0.28449672
      %v2595 = vadd.f32 %v2587, -0.28449672
      %v2596 = vadd.f32 %v2588, -0.28449672
      %v2597 = vadd.f32 %v2589, -0.28449672
      %v2598 = vmul.f32 %v2590, %v2535
      %v2599 = vmul.f32 %v2591, %v2537
      %v2600 = vmul.f32 %v2592, %v2539
      %v2601 = vmul.f32 %v2593, %v2541
      %v2602 = vmul.f32 %v2594, %v2543
      %v2603 = vmul.f32 %v2595, %v2545
      %v2604 = vmul.f32 %v2596, %v2547
      %v2605 = vmul.f32 %v2597, %v2549
      %v2606 = vadd.f32 %v2598, 0.2548296
      %v2607 = vadd.f32 %v2599, 0.2548296
      %v2608 = vadd.f32 %v2600, 0.2548296
      %v2609 = vadd.f32 %v2601, 0.2548296
      %v2610 = vadd.f32 %v2602, 0.2548296
      %v2611 = vadd.f32 %v2603, 0.2548296
      %v2612 = vadd.f32 %v2604, 0.2548296
      %v2613 = vadd.f32 %v2605, 0.2548296
      %v2614 = vmul.f32 %v2606, %v2535
      %v2615 = vmul.f32 %v2607, %v2537
      %v2616 = vmul.f32 %v2608, %v2539
      %v2617 = vmul.f32 %v2609, %v2541
      %v2618 = vmul.f32 %v2610, %v2543
      %v2619 = vmul.f32 %v2611, %v2545
      %v2620 = vmul.f32 %v2612, %v2547
      %v2621 = vmul.f32 %v2613, %v2549
      %v2622 = vsub.f32 0.0, %v2510
      %v2623 = vsub.f32 0.0, %v2511
      %v2624 = vsub.f32 0.0, %v2512
      %v2625 = vsub.f32 0.0, %v2513
      %v2626 = vsub.f32 0.0, %v2514
      %v2627 = vsub.f32 0.0, %v2515
      %v2628 = vsub.f32 0.0, %v2516
      %v2629 = vsub.f32 0.0, %v2517
      %v2630 = vmul.f32 %v2622, %v2510
      %v2631 = vmul.f32 %v2623, %v2511
      %v2632 = vmul.f32 %v2624, %v2512
      %v2633 = vmul.f32 %v2625, %v2513
      %v2634 = vmul.f32 %v2626, %v2514
      %v2635 = vmul.f32 %v2627, %v2515
      %v2636 = vmul.f32 %v2628, %v2516
      %v2637 = vmul.f32 %v2629, %v2517
      %v2638 = vmul.f32 %v2630, 1.442695
      %v2639 = vpow.pop %v2638
      %v2640 = vmul.f32 %v2631, 1.442695
      %v2641 = vpow.pop %v2640
      %v2642 = vmul.f32 %v2632, 1.442695
      %v2643 = vpow.pop %v2642
      %v2644 = vmul.f32 %v2633, 1.442695
      %v2645 = vpow.pop %v2644
      %v2646 = vmul.f32 %v2634, 1.442695
      %v2647 = vpow.pop %v2646
      %v2648 = vmul.f32 %v2635, 1.442695
      %v2649 = vpow.pop %v2648
      %v2650 = vmul.f32 %v2636, 1.442695
      %v2651 = vpow.pop %v2650
      %v2652 = vmul.f32 %v2637, 1.442695
      %v2653 = vpow.pop %v2652
      %v2654 = vmul.f32 %v2614, %v2639
      %v2655 = vmul.f32 %v2615, %v2641
      %v2656 = vmul.f32 %v2616, %v2643
      %v2657 = vmul.f32 %v2617, %v2645
      %v2658 = vmul.f32 %v2618, %v2647
      %v2659 = vmul.f32 %v2619, %v2649
      %v2660 = vmul.f32 %v2620, %v2651
      %v2661 = vmul.f32 %v2621, %v2653
      %v2662 = vsub.f32 1.0, %v2654
      %v2663 = vsub.f32 1.0, %v2655
      %v2664 = vsub.f32 1.0, %v2656
      %v2665 = vsub.f32 1.0, %v2657
      %v2666 = vsub.f32 1.0, %v2658
      %v2667 = vsub.f32 1.0, %v2659
      %v2668 = vsub.f32 1.0, %v2660
      %v2669 = vsub.f32 1.0, %v2661
      %v2670 = vmul.f32 %v2502, %v2662
      %v2671 = vmul.f32 %v2503, %v2663
      %v2672 = vmul.f32 %v2504, %v2664
      %v2673 = vmul.f32 %v2505, %v2665
      %v2674 = vmul.f32 %v2506, %v2666
      %v2675 = vmul.f32 %v2507, %v2667
      %v2676 = vmul.f32 %v2508, %v2668
      %v2677 = vmul.f32 %v2509, %v2669
      %v2678 = vadd.f32 %v2670, 1.0
      %v2679 = vadd.f32 %v2671, 1.0
      %v2680 = vadd.f32 %v2672, 1.0
      %v2681 = vadd.f32 %v2673, 1.0
      %v2682 = vadd.f32 %v2674, 1.0
      %v2683 = vadd.f32 %v2675, 1.0
      %v2684 = vadd.f32 %v2676, 1.0
      %v2685 = vadd.f32 %v2677, 1.0
      %v2686 = vmul.f32 %v2478, %v2678
      %v2687 = vmul.f32 %v2479, %v2679
      %v2688 = vmul.f32 %v2480, %v2680
      %v2689 = vmul.f32 %v2481, %v2681
      %v2690 = vmul.f32 %v2482, %v2682
      %v2691 = vmul.f32 %v2483, %v2683
      %v2692 = vmul.f32 %v2484, %v2684
      %v2693 = vmul.f32 %v2485, %v2685
      %2702 = vrot.lane.b32.xlu0 %v2686, 112
      %v2703 = vpop.permute.xlu0 %2702
      %2704 = vrot.lane.b32.xlu0 %v2687, 112
      %v2705 = vpop.permute.xlu0 %2704
      %2706 = vrot.lane.b32.xlu0 %v2688, 112
      %v2707 = vpop.permute.xlu0 %2706
      %2708 = vrot.lane.b32.xlu0 %v2689, 112
      %v2709 = vpop.permute.xlu0 %2708
      %2710 = vrot.lane.b32.xlu0 %v2690, 112
      %v2711 = vpop.permute.xlu0 %2710
      %2712 = vrot.lane.b32.xlu0 %v2691, 112
      %v2713 = vpop.permute.xlu0 %2712
      %2714 = vrot.lane.b32.xlu0 %v2692, 112
      %v2715 = vpop.permute.xlu0 %2714
      %2716 = vrot.lane.b32.xlu0 %v2693, 112
      %v2717 = vpop.permute.xlu0 %2716
      %v2718 = vsel %vm520, %v2703, 0
      %v2720 = vsel %vm520, %v2705, 0
      %v2722 = vsel %vm520, %v2707, 0
      %v2724 = vsel %vm520, %v2709, 0
      %v2726 = vsel %vm520, %v2711, 0
      %v2728 = vsel %vm520, %v2713, 0
      %v2730 = vsel %vm520, %v2715, 0
      %v2732 = vsel %vm520, %v2717, 0
      %2734 = vmatprep.subr.mxu0 0.0
      %2735 = vmatpush1.msra.mxu0 %v516
      %2736 = vmatprep.subr.mxu0 0.0
      %2737 = vmatpush1.msra.mxu0 0.0
      %2738 = vmatprep.subr.mxu0 0.0
      %2739 = vmatpush1.msra.mxu0 0.0
      %2740 = vmatprep.subr.mxu0 0.0
      %2741 = vmatpush1.msra.mxu0 0.0
      %2742 = vmatprep.subr.mxu0 0.0
      %2743 = vmatpush1.msra.mxu0 0.0
      %2744 = vmatprep.subr.mxu0 0.0
      %2745 = vmatpush1.msra.mxu0 0.0
      %2746 = vmatprep.subr.mxu0 0.0
      %2747 = vmatpush1.msra.mxu0 0.0
      %2748 = vmatprep.subr.mxu0 0.0
      %2749 = vmatpush1.msra.mxu0 0.0
      %2750 = vmatprep.subr.mxu0 0.0
      %2751 = vmatpush1.msra.mxu0 0.0
      %2752 = vmatprep.subr.mxu0 0.0
      %2753 = vmatpush1.msra.mxu0 0.0
      %2754 = vmatprep.subr.mxu0 0.0
      %2755 = vmatpush1.msra.mxu0 0.0
      %2756 = vmatprep.subr.mxu0 0.0
      %2757 = vmatpush1.msra.mxu0 0.0
      %2758 = vmatprep.subr.mxu0 0.0
      %2759 = vmatpush1.msra.mxu0 0.0
      %2760 = vmatprep.subr.mxu0 0.0
      %2761 = vmatpush1.msra.mxu0 0.0
      %2762 = vmatprep.subr.mxu0 0.0
      %2763 = vmatpush1.msra.mxu0 0.0
      %2764 = vmatprep.subr.mxu0 0.0
      %2765 = vmatpush1.msra.mxu0 0.0
      %2766 = vmatprep.subr.mxu0 0.0
      %2767 = vmatpush1.msra.mxu0 0.0
      %2768 = vmatprep.subr.mxu0 0.0
      %2769 = vmatpush1.msra.mxu0 0.0
      %2770 = vmatprep.subr.mxu0 0.0
      %2771 = vmatpush1.msra.mxu0 0.0
      %2772 = vmatprep.subr.mxu0 0.0
      %2773 = vmatpush1.msra.mxu0 0.0
      %2774 = vmatprep.subr.mxu0 0.0
      %2775 = vmatpush1.msra.mxu0 0.0
      %2776 = vmatprep.subr.mxu0 0.0
      %2777 = vmatpush1.msra.mxu0 0.0
      %2778 = vmatprep.subr.mxu0 0.0
      %2779 = vmatpush1.msra.mxu0 0.0
      %2780 = vmatprep.subr.mxu0 0.0
      %2781 = vmatpush1.msra.mxu0 0.0
      %2782 = vmatprep.subr.mxu0 0.0
      %2783 = vmatpush1.msra.mxu0 0.0
      %2784 = vmatprep.subr.mxu0 0.0
      %2785 = vmatpush1.msra.mxu0 0.0
      %2786 = vmatprep.subr.mxu0 0.0
      %2787 = vmatpush1.msra.mxu0 0.0
      %2788 = vmatprep.subr.mxu0 0.0
      %2789 = vmatpush1.msra.mxu0 0.0
      %2790 = vmatprep.subr.mxu0 0.0
      %2791 = vmatpush1.msra.mxu0 0.0
      %2792 = vmatprep.subr.mxu0 0.0
      %2793 = vmatpush1.msra.mxu0 0.0
      %2794 = vmatprep.subr.mxu0 0.0
      %2795 = vmatpush1.msra.mxu0 0.0
      %2796 = vmatprep.subr.mxu0 0.0
      %2797 = vmatpush1.msra.mxu0 0.0
      %2798 = vmatprep.mubr.f32.mxu0 0.0
      %2799 = vmatmul.mubr.f32.gmra.mrb[0].mxu0 %v2718
      %v2800 = vpop.f32.mrb[0].mxu0
      %v2801 = vadd.f32 %v874, %v2800
      %v2802 = vpop.f32.mrb[0].mxu0
      %2803 = vmatprep.mubr.f32.mxu0 0.0
      %2804 = vmatmul.mubr.f32.gmra.mrb[0].mxu0 %v2720
      %v2805 = vpop.f32.mrb[0].mxu0
      %v2806 = vadd.f32 %v874, %v2805
      %v2807 = vpop.f32.mrb[0].mxu0
      %2808 = vmatprep.mubr.f32.mxu0 0.0
      %2809 = vmatmul.mubr.f32.gmra.mrb[0].mxu0 %v2722
      %v2810 = vpop.f32.mrb[0].mxu0
      %v2811 = vadd.f32 %v874, %v2810
      %v2812 = vpop.f32.mrb[0].mxu0
      %2813 = vmatprep.mubr.f32.mxu0 0.0
      %2814 = vmatmul.mubr.f32.gmra.mrb[0].mxu0 %v2724
      %v2815 = vpop.f32.mrb[0].mxu0
      %v2816 = vadd.f32 %v874, %v2815
      %v2817 = vpop.f32.mrb[0].mxu0
      %2818 = vmatprep.mubr.f32.mxu0 0.0
      %2819 = vmatmul.mubr.f32.gmra.mrb[0].mxu0 %v2726
      %v2820 = vpop.f32.mrb[0].mxu0
      %v2821 = vadd.f32 %v874, %v2820
      %v2822 = vpop.f32.mrb[0].mxu0
      %2823 = vmatprep.mubr.f32.mxu0 0.0
      %2824 = vmatmul.mubr.f32.gmra.mrb[0].mxu0 %v2728
      %v2825 = vpop.f32.mrb[0].mxu0
      %v2826 = vadd.f32 %v874, %v2825
      %v2827 = vpop.f32.mrb[0].mxu0
      %2828 = vmatprep.mubr.f32.mxu0 0.0
      %2829 = vmatmul.mubr.f32.gmra.mrb[0].mxu0 %v2730
      %v2830 = vpop.f32.mrb[0].mxu0
      %v2831 = vadd.f32 %v874, %v2830
      %v2832 = vpop.f32.mrb[0].mxu0
      %2833 = vmatprep.mubr.f32.mxu0 0.0
      %2834 = vmatmul.mubr.f32.gmra.mrb[0].mxu0 %v2732
      %v2835 = vpop.f32.mrb[0].mxu0
      %v2836 = vadd.f32 %v874, %v2835
      %v2837 = vpop.f32.mrb[0].mxu0
      %2838 = vdwg.mxu0
      %v2839 = vmul.f32 %v2801, 0.5
      %v2840 = vmul.f32 %v2806, 0.5
      %v2841 = vmul.f32 %v2811, 0.5
      %v2842 = vmul.f32 %v2816, 0.5
      %v2843 = vmul.f32 %v2821, 0.5
      %v2844 = vmul.f32 %v2826, 0.5
      %v2845 = vmul.f32 %v2831, 0.5
      %v2846 = vmul.f32 %v2836, 0.5
      %v2847 = vmul.f32 %v2801, 0.70710677
      %v2848 = vmul.f32 %v2806, 0.70710677
      %v2849 = vmul.f32 %v2811, 0.70710677
      %v2850 = vmul.f32 %v2816, 0.70710677
      %v2851 = vmul.f32 %v2821, 0.70710677
      %v2852 = vmul.f32 %v2826, 0.70710677
      %v2853 = vmul.f32 %v2831, 0.70710677
      %v2854 = vmul.f32 %v2836, 0.70710677
      %vm2855 = vcmp.ge.f32.partialorder %v2847, 0.0
      %vm2856 = vcmp.ge.f32.partialorder %v2848, 0.0
      %vm2857 = vcmp.ge.f32.partialorder %v2849, 0.0
      %vm2858 = vcmp.ge.f32.partialorder %v2850, 0.0
      %vm2859 = vcmp.ge.f32.partialorder %v2851, 0.0
      %vm2860 = vcmp.ge.f32.partialorder %v2852, 0.0
      %vm2861 = vcmp.ge.f32.partialorder %v2853, 0.0
      %vm2862 = vcmp.ge.f32.partialorder %v2854, 0.0
      %v2863 = vsel %vm2855, 1.0, -1.0
      %v2864 = vsel %vm2856, 1.0, -1.0
      %v2865 = vsel %vm2857, 1.0, -1.0
      %v2866 = vsel %vm2858, 1.0, -1.0
      %v2867 = vsel %vm2859, 1.0, -1.0
      %v2868 = vsel %vm2860, 1.0, -1.0
      %v2869 = vsel %vm2861, 1.0, -1.0
      %v2870 = vsel %vm2862, 1.0, -1.0
      %v2871 = vand.u32 2147483647, %v2847
      %v2872 = vand.u32 2147483647, %v2848
      %v2873 = vand.u32 2147483647, %v2849
      %v2874 = vand.u32 2147483647, %v2850
      %v2875 = vand.u32 2147483647, %v2851
      %v2876 = vand.u32 2147483647, %v2852
      %v2877 = vand.u32 2147483647, %v2853
      %v2878 = vand.u32 2147483647, %v2854
      %v2879 = vmul.f32 %v2871, 0.3275911
      %v2880 = vmul.f32 %v2872, 0.3275911
      %v2881 = vmul.f32 %v2873, 0.3275911
      %v2882 = vmul.f32 %v2874, 0.3275911
      %v2883 = vmul.f32 %v2875, 0.3275911
      %v2884 = vmul.f32 %v2876, 0.3275911
      %v2885 = vmul.f32 %v2877, 0.3275911
      %v2886 = vmul.f32 %v2878, 0.3275911
      %v2887 = vadd.f32 %v2879, 1.0
      %v2888 = vadd.f32 %v2880, 1.0
      %v2889 = vadd.f32 %v2881, 1.0
      %v2890 = vadd.f32 %v2882, 1.0
      %v2891 = vadd.f32 %v2883, 1.0
      %v2892 = vadd.f32 %v2884, 1.0
      %v2893 = vadd.f32 %v2885, 1.0
      %v2894 = vadd.f32 %v2886, 1.0
      %v2895 = vrcp.pop %v2887
      %v2896 = vmul.f32 1.0, %v2895
      %v2897 = vrcp.pop %v2888
      %v2898 = vmul.f32 1.0, %v2897
      %v2899 = vrcp.pop %v2889
      %v2900 = vmul.f32 1.0, %v2899
      %v2901 = vrcp.pop %v2890
      %v2902 = vmul.f32 1.0, %v2901
      %v2903 = vrcp.pop %v2891
      %v2904 = vmul.f32 1.0, %v2903
      %v2905 = vrcp.pop %v2892
      %v2906 = vmul.f32 1.0, %v2905
      %v2907 = vrcp.pop %v2893
      %v2908 = vmul.f32 1.0, %v2907
      %v2909 = vrcp.pop %v2894
      %v2910 = vmul.f32 1.0, %v2909
      %v2911 = vmul.f32 %v2896, 1.0614054
      %v2912 = vmul.f32 %v2898, 1.0614054
      %v2913 = vmul.f32 %v2900, 1.0614054
      %v2914 = vmul.f32 %v2902, 1.0614054
      %v2915 = vmul.f32 %v2904, 1.0614054
      %v2916 = vmul.f32 %v2906, 1.0614054
      %v2917 = vmul.f32 %v2908, 1.0614054
      %v2918 = vmul.f32 %v2910, 1.0614054
      %v2919 = vadd.f32 %v2911, -1.4531521
      %v2920 = vadd.f32 %v2912, -1.4531521
      %v2921 = vadd.f32 %v2913, -1.4531521
      %v2922 = vadd.f32 %v2914, -1.4531521
      %v2923 = vadd.f32 %v2915, -1.4531521
      %v2924 = vadd.f32 %v2916, -1.4531521
      %v2925 = vadd.f32 %v2917, -1.4531521
      %v2926 = vadd.f32 %v2918, -1.4531521
      %v2927 = vmul.f32 %v2919, %v2896
      %v2928 = vmul.f32 %v2920, %v2898
      %v2929 = vmul.f32 %v2921, %v2900
      %v2930 = vmul.f32 %v2922, %v2902
      %v2931 = vmul.f32 %v2923, %v2904
      %v2932 = vmul.f32 %v2924, %v2906
      %v2933 = vmul.f32 %v2925, %v2908
      %v2934 = vmul.f32 %v2926, %v2910
      %v2935 = vadd.f32 %v2927, 1.4214138
      %v2936 = vadd.f32 %v2928, 1.4214138
      %v2937 = vadd.f32 %v2929, 1.4214138
      %v2938 = vadd.f32 %v2930, 1.4214138
      %v2939 = vadd.f32 %v2931, 1.4214138
      %v2940 = vadd.f32 %v2932, 1.4214138
      %v2941 = vadd.f32 %v2933, 1.4214138
      %v2942 = vadd.f32 %v2934, 1.4214138
      %v2943 = vmul.f32 %v2935, %v2896
      %v2944 = vmul.f32 %v2936, %v2898
      %v2945 = vmul.f32 %v2937, %v2900
      %v2946 = vmul.f32 %v2938, %v2902
      %v2947 = vmul.f32 %v2939, %v2904
      %v2948 = vmul.f32 %v2940, %v2906
      %v2949 = vmul.f32 %v2941, %v2908
      %v2950 = vmul.f32 %v2942, %v2910
      %v2951 = vadd.f32 %v2943, -0.28449672
      %v2952 = vadd.f32 %v2944, -0.28449672
      %v2953 = vadd.f32 %v2945, -0.28449672
      %v2954 = vadd.f32 %v2946, -0.28449672
      %v2955 = vadd.f32 %v2947, -0.28449672
      %v2956 = vadd.f32 %v2948, -0.28449672
      %v2957 = vadd.f32 %v2949, -0.28449672
      %v2958 = vadd.f32 %v2950, -0.28449672
      %v2959 = vmul.f32 %v2951, %v2896
      %v2960 = vmul.f32 %v2952, %v2898
      %v2961 = vmul.f32 %v2953, %v2900
      %v2962 = vmul.f32 %v2954, %v2902
      %v2963 = vmul.f32 %v2955, %v2904
      %v2964 = vmul.f32 %v2956, %v2906
      %v2965 = vmul.f32 %v2957, %v2908
      %v2966 = vmul.f32 %v2958, %v2910
      %v2967 = vadd.f32 %v2959, 0.2548296
      %v2968 = vadd.f32 %v2960, 0.2548296
      %v2969 = vadd.f32 %v2961, 0.2548296
      %v2970 = vadd.f32 %v2962, 0.2548296
      %v2971 = vadd.f32 %v2963, 0.2548296
      %v2972 = vadd.f32 %v2964, 0.2548296
      %v2973 = vadd.f32 %v2965, 0.2548296
      %v2974 = vadd.f32 %v2966, 0.2548296
      %v2975 = vmul.f32 %v2967, %v2896
      %v2976 = vmul.f32 %v2968, %v2898
      %v2977 = vmul.f32 %v2969, %v2900
      %v2978 = vmul.f32 %v2970, %v2902
      %v2979 = vmul.f32 %v2971, %v2904
      %v2980 = vmul.f32 %v2972, %v2906
      %v2981 = vmul.f32 %v2973, %v2908
      %v2982 = vmul.f32 %v2974, %v2910
      %v2983 = vsub.f32 0.0, %v2871
      %v2984 = vsub.f32 0.0, %v2872
      %v2985 = vsub.f32 0.0, %v2873
      %v2986 = vsub.f32 0.0, %v2874
      %v2987 = vsub.f32 0.0, %v2875
      %v2988 = vsub.f32 0.0, %v2876
      %v2989 = vsub.f32 0.0, %v2877
      %v2990 = vsub.f32 0.0, %v2878
      %v2991 = vmul.f32 %v2983, %v2871
      %v2992 = vmul.f32 %v2984, %v2872
      %v2993 = vmul.f32 %v2985, %v2873
      %v2994 = vmul.f32 %v2986, %v2874
      %v2995 = vmul.f32 %v2987, %v2875
      %v2996 = vmul.f32 %v2988, %v2876
      %v2997 = vmul.f32 %v2989, %v2877
      %v2998 = vmul.f32 %v2990, %v2878
      %v2999 = vmul.f32 %v2991, 1.442695
      %v3000 = vpow.pop %v2999
      %v3001 = vmul.f32 %v2992, 1.442695
      %v3002 = vpow.pop %v3001
      %v3003 = vmul.f32 %v2993, 1.442695
      %v3004 = vpow.pop %v3003
      %v3005 = vmul.f32 %v2994, 1.442695
      %v3006 = vpow.pop %v3005
      %v3007 = vmul.f32 %v2995, 1.442695
      %v3008 = vpow.pop %v3007
      %v3009 = vmul.f32 %v2996, 1.442695
      %v3010 = vpow.pop %v3009
      %v3011 = vmul.f32 %v2997, 1.442695
      %v3012 = vpow.pop %v3011
      %v3013 = vmul.f32 %v2998, 1.442695
      %v3014 = vpow.pop %v3013
      %v3015 = vmul.f32 %v2975, %v3000
      %v3016 = vmul.f32 %v2976, %v3002
      %v3017 = vmul.f32 %v2977, %v3004
      %v3018 = vmul.f32 %v2978, %v3006
      %v3019 = vmul.f32 %v2979, %v3008
      %v3020 = vmul.f32 %v2980, %v3010
      %v3021 = vmul.f32 %v2981, %v3012
      %v3022 = vmul.f32 %v2982, %v3014
      %v3023 = vsub.f32 1.0, %v3015
      %v3024 = vsub.f32 1.0, %v3016
      %v3025 = vsub.f32 1.0, %v3017
      %v3026 = vsub.f32 1.0, %v3018
      %v3027 = vsub.f32 1.0, %v3019
      %v3028 = vsub.f32 1.0, %v3020
      %v3029 = vsub.f32 1.0, %v3021
      %v3030 = vsub.f32 1.0, %v3022
      %v3031 = vmul.f32 %v2863, %v3023
      %v3032 = vmul.f32 %v2864, %v3024
      %v3033 = vmul.f32 %v2865, %v3025
      %v3034 = vmul.f32 %v2866, %v3026
      %v3035 = vmul.f32 %v2867, %v3027
      %v3036 = vmul.f32 %v2868, %v3028
      %v3037 = vmul.f32 %v2869, %v3029
      %v3038 = vmul.f32 %v2870, %v3030
      %v3039 = vadd.f32 %v3031, 1.0
      %v3040 = vadd.f32 %v3032, 1.0
      %v3041 = vadd.f32 %v3033, 1.0
      %v3042 = vadd.f32 %v3034, 1.0
      %v3043 = vadd.f32 %v3035, 1.0
      %v3044 = vadd.f32 %v3036, 1.0
      %v3045 = vadd.f32 %v3037, 1.0
      %v3046 = vadd.f32 %v3038, 1.0
      %v3047 = vmul.f32 %v2839, %v3039
      %v3048 = vmul.f32 %v2840, %v3040
      %v3049 = vmul.f32 %v2841, %v3041
      %v3050 = vmul.f32 %v2842, %v3042
      %v3051 = vmul.f32 %v2843, %v3043
      %v3052 = vmul.f32 %v2844, %v3044
      %v3053 = vmul.f32 %v2845, %v3045
      %v3054 = vmul.f32 %v2846, %v3046
      %v3056 = vsel %vm1221, %v3047, 0
      %v3059 = vsel %vm1221, %v3048, 0
      %v3062 = vsel %vm1221, %v3049, 0
      %v3065 = vsel %vm1221, %v3050, 0
      %v3068 = vsel %vm1221, %v3051, 0
      %v3071 = vsel %vm1221, %v3052, 0
      %v3074 = vsel %vm1221, %v3053, 0
      %v3077 = vsel %vm1221, %v3054, 0
      %3079 = vmatprep.subr.mxu0 0.0
      %3080 = vmatpush1.msra.mxu0 %v518
      %3081 = vmatprep.subr.mxu0 0.0
      %3082 = vmatpush1.msra.mxu0 %v519
      %3083 = vmatprep.subr.mxu0 0.0
      %3084 = vmatpush1.msra.mxu0 0.0
      %3085 = vmatprep.subr.mxu0 0.0
      %3086 = vmatpush1.msra.mxu0 0.0
      %3087 = vmatprep.subr.mxu0 0.0
      %3088 = vmatpush1.msra.mxu0 0.0
      %3089 = vmatprep.subr.mxu0 0.0
      %3090 = vmatpush1.msra.mxu0 0.0
      %3091 = vmatprep.subr.mxu0 0.0
      %3092 = vmatpush1.msra.mxu0 0.0
      %3093 = vmatprep.subr.mxu0 0.0
      %3094 = vmatpush1.msra.mxu0 0.0
      %3095 = vmatprep.subr.mxu0 0.0
      %3096 = vmatpush1.msra.mxu0 0.0
      %3097 = vmatprep.subr.mxu0 0.0
      %3098 = vmatpush1.msra.mxu0 0.0
      %3099 = vmatprep.subr.mxu0 0.0
      %3100 = vmatpush1.msra.mxu0 0.0
      %3101 = vmatprep.subr.mxu0 0.0
      %3102 = vmatpush1.msra.mxu0 0.0
      %3103 = vmatprep.subr.mxu0 0.0
      %3104 = vmatpush1.msra.mxu0 0.0
      %3105 = vmatprep.subr.mxu0 0.0
      %3106 = vmatpush1.msra.mxu0 0.0
      %3107 = vmatprep.subr.mxu0 0.0
      %3108 = vmatpush1.msra.mxu0 0.0
      %3109 = vmatprep.subr.mxu0 0.0
      %3110 = vmatpush1.msra.mxu0 0.0
      %3111 = vmatprep.subr.mxu0 0.0
      %3112 = vmatpush1.msra.mxu0 0.0
      %3113 = vmatprep.subr.mxu0 0.0
      %3114 = vmatpush1.msra.mxu0 0.0
      %3115 = vmatprep.subr.mxu0 0.0
      %3116 = vmatpush1.msra.mxu0 0.0
      %3117 = vmatprep.subr.mxu0 0.0
      %3118 = vmatpush1.msra.mxu0 0.0
      %3119 = vmatprep.subr.mxu0 0.0
      %3120 = vmatpush1.msra.mxu0 0.0
      %3121 = vmatprep.subr.mxu0 0.0
      %3122 = vmatpush1.msra.mxu0 0.0
      %3123 = vmatprep.subr.mxu0 0.0
      %3124 = vmatpush1.msra.mxu0 0.0
      %3125 = vmatprep.subr.mxu0 0.0
      %3126 = vmatpush1.msra.mxu0 0.0
      %3127 = vmatprep.subr.mxu0 0.0
      %3128 = vmatpush1.msra.mxu0 0.0
      %3129 = vmatprep.subr.mxu0 0.0
      %3130 = vmatpush1.msra.mxu0 0.0
      %3131 = vmatprep.subr.mxu0 0.0
      %3132 = vmatpush1.msra.mxu0 0.0
      %3133 = vmatprep.subr.mxu0 0.0
      %3134 = vmatpush1.msra.mxu0 0.0
      %3135 = vmatprep.subr.mxu0 0.0
      %3136 = vmatpush1.msra.mxu0 0.0
      %3137 = vmatprep.subr.mxu0 0.0
      %3138 = vmatpush1.msra.mxu0 0.0
      %3139 = vmatprep.subr.mxu0 0.0
      %3140 = vmatpush1.msra.mxu0 0.0
      %3141 = vmatprep.subr.mxu0 0.0
      %3142 = vmatpush1.msra.mxu0 0.0
      %3143 = vmatprep.mubr.f32.mxu0 0.0
      %3144 = vmatmul.mubr.f32.gmra.mrb[0].mxu0 %v3056
      %v3145 = vpop.f32.mrb[0].mxu0
      %v3146 = vadd.f32 0.0, %v3145
      %v3147 = vpop.f32.mrb[0].mxu0
      %3148 = vmatprep.mubr.f32.mxu0 0.0
      %3149 = vmatmul.mubr.f32.gmra.mrb[0].mxu0 %v3059
      %v3150 = vpop.f32.mrb[0].mxu0
      %v3151 = vadd.f32 0.0, %v3150
      %v3152 = vpop.f32.mrb[0].mxu0
      %3153 = vmatprep.mubr.f32.mxu0 0.0
      %3154 = vmatmul.mubr.f32.gmra.mrb[0].mxu0 %v3062
      %v3155 = vpop.f32.mrb[0].mxu0
      %v3156 = vadd.f32 0.0, %v3155
      %v3157 = vpop.f32.mrb[0].mxu0
      %3158 = vmatprep.mubr.f32.mxu0 0.0
      %3159 = vmatmul.mubr.f32.gmra.mrb[0].mxu0 %v3065
      %v3160 = vpop.f32.mrb[0].mxu0
      %v3161 = vadd.f32 0.0, %v3160
      %v3162 = vpop.f32.mrb[0].mxu0
      %3163 = vmatprep.mubr.f32.mxu0 0.0
      %3164 = vmatmul.mubr.f32.gmra.mrb[0].mxu0 %v3068
      %v3165 = vpop.f32.mrb[0].mxu0
      %v3166 = vadd.f32 0.0, %v3165
      %v3167 = vpop.f32.mrb[0].mxu0
      %3168 = vmatprep.mubr.f32.mxu0 0.0
      %3169 = vmatmul.mubr.f32.gmra.mrb[0].mxu0 %v3071
      %v3170 = vpop.f32.mrb[0].mxu0
      %v3171 = vadd.f32 0.0, %v3170
      %v3172 = vpop.f32.mrb[0].mxu0
      %3173 = vmatprep.mubr.f32.mxu0 0.0
      %3174 = vmatmul.mubr.f32.gmra.mrb[0].mxu0 %v3074
      %v3175 = vpop.f32.mrb[0].mxu0
      %v3176 = vadd.f32 0.0, %v3175
      %v3177 = vpop.f32.mrb[0].mxu0
      %3178 = vmatprep.mubr.f32.mxu0 0.0
      %3179 = vmatmul.mubr.f32.gmra.mrb[0].mxu0 %v3077
      %v3180 = vpop.f32.mrb[0].mxu0
      %v3181 = vadd.f32 0.0, %v3180
      %v3182 = vpop.f32.mrb[0].mxu0
      %3183 = vdwg.mxu0
      %3192 = vrot.lane.b32.xlu0 %v3146, 32
      %v3193 = vpop.permute.xlu0 %3192
      %3194 = vrot.lane.b32.xlu0 %v3151, 32
      %v3195 = vpop.permute.xlu0 %3194
      %3196 = vrot.lane.b32.xlu0 %v3156, 32
      %v3197 = vpop.permute.xlu0 %3196
      %3198 = vrot.lane.b32.xlu0 %v3161, 32
      %v3199 = vpop.permute.xlu0 %3198
      %3200 = vrot.lane.b32.xlu0 %v3166, 32
      %v3201 = vpop.permute.xlu0 %3200
      %3202 = vrot.lane.b32.xlu0 %v3171, 32
      %v3203 = vpop.permute.xlu0 %3202
      %3204 = vrot.lane.b32.xlu0 %v3176, 32
      %v3205 = vpop.permute.xlu0 %3204
      %3206 = vrot.lane.b32.xlu0 %v3181, 32
      %v3207 = vpop.permute.xlu0 %3206
      %vm3216 = vcmask 392448
      %3217 = vst.msk [vmem:[%s363] sm:$0xff] %vm3216, %v3193
      %3218 = vst.msk [vmem:[%s363 + $0x8] sm:$0xff] %vm3216, %v3195
      %3219 = vst.msk [vmem:[%s363 + $0x10] sm:$0xff] %vm3216, %v3197
      %3220 = vst.msk [vmem:[%s363 + $0x18] sm:$0xff] %vm3216, %v3199
      %3221 = vst.msk [vmem:[%s363 + $0x20] sm:$0xff] %vm3216, %v3201
      %3222 = vst.msk [vmem:[%s363 + $0x28] sm:$0xff] %vm3216, %v3203
      %3223 = vst.msk [vmem:[%s363 + $0x30] sm:$0xff] %vm3216, %v3205
      %3224 = vst.msk [vmem:[%s363 + $0x38] sm:$0xff] %vm3216, %v3207
      %3225 = vrot.lane.b32.xlu0 %v476, 104
      %v3226 = vpop.permute.xlu0 %3225
      %3227 = vrot.lane.b32.xlu0 %v481, 104
      %v3228 = vpop.permute.xlu0 %3227
      %3229 = vrot.lane.b32.xlu0 %v486, 104
      %v3230 = vpop.permute.xlu0 %3229
      %3231 = vrot.lane.b32.xlu0 %v491, 104
      %v3232 = vpop.permute.xlu0 %3231
      %3233 = vrot.lane.b32.xlu0 %v496, 104
      %v3234 = vpop.permute.xlu0 %3233
      %3235 = vrot.lane.b32.xlu0 %v501, 104
      %v3236 = vpop.permute.xlu0 %3235
      %3237 = vrot.lane.b32.xlu0 %v506, 104
      %v3238 = vpop.permute.xlu0 %3237
      %3239 = vrot.lane.b32.xlu0 %v511, 104
      %v3240 = vpop.permute.xlu0 %3239
      %v3249 = vsel %vm520, %v3226, 0.0
      %3250 = vadd.xlane.f32.xlu0 %v3249
      %v3251 = vpop.xlane.xlu0 %3250
      %v3252 = vsel %vm520, %v3228, 0.0
      %3253 = vadd.xlane.f32.xlu0 %v3252
      %v3254 = vpop.xlane.xlu0 %3253
      %v3255 = vsel %vm520, %v3230, 0.0
      %3256 = vadd.xlane.f32.xlu0 %v3255
      %v3257 = vpop.xlane.xlu0 %3256
      %v3258 = vsel %vm520, %v3232, 0.0
      %3259 = vadd.xlane.f32.xlu0 %v3258
      %v3260 = vpop.xlane.xlu0 %3259
      %v3261 = vsel %vm520, %v3234, 0.0
      %3262 = vadd.xlane.f32.xlu0 %v3261
      %v3263 = vpop.xlane.xlu0 %3262
      %v3264 = vsel %vm520, %v3236, 0.0
      %3265 = vadd.xlane.f32.xlu0 %v3264
      %v3266 = vpop.xlane.xlu0 %3265
      %v3267 = vsel %vm520, %v3238, 0.0
      %3268 = vadd.xlane.f32.xlu0 %v3267
      %v3269 = vpop.xlane.xlu0 %3268
      %v3270 = vsel %vm520, %v3240, 0.0
      %3271 = vadd.xlane.f32.xlu0 %v3270
      %v3272 = vpop.xlane.xlu0 %3271
      %v3273 = vmul.f32 %v3251, %v545
      %v3274 = vmul.f32 %v3254, %v545
      %v3275 = vmul.f32 %v3257, %v545
      %v3276 = vmul.f32 %v3260, %v545
      %v3277 = vmul.f32 %v3263, %v545
      %v3278 = vmul.f32 %v3266, %v545
      %v3279 = vmul.f32 %v3269, %v545
      %v3280 = vmul.f32 %v3272, %v545
      %v3281 = vsub.f32 %v476, %v3273
      %v3282 = vsub.f32 %v481, %v3274
      %v3283 = vsub.f32 %v486, %v3275
      %v3284 = vsub.f32 %v491, %v3276
      %v3285 = vsub.f32 %v496, %v3277
      %v3286 = vsub.f32 %v501, %v3278
      %v3287 = vsub.f32 %v506, %v3279
      %v3288 = vsub.f32 %v511, %v3280
      %v3289 = vmul.f32 %v3281, %v3281
      %v3290 = vmul.f32 %v3282, %v3282
      %v3291 = vmul.f32 %v3283, %v3283
      %v3292 = vmul.f32 %v3284, %v3284
      %v3293 = vmul.f32 %v3285, %v3285
      %v3294 = vmul.f32 %v3286, %v3286
      %v3295 = vmul.f32 %v3287, %v3287
      %v3296 = vmul.f32 %v3288, %v3288
      %3305 = vrot.lane.b32.xlu0 %v3289, 104
      %v3306 = vpop.permute.xlu0 %3305
      %3307 = vrot.lane.b32.xlu0 %v3290, 104
      %v3308 = vpop.permute.xlu0 %3307
      %3309 = vrot.lane.b32.xlu0 %v3291, 104
      %v3310 = vpop.permute.xlu0 %3309
      %3311 = vrot.lane.b32.xlu0 %v3292, 104
      %v3312 = vpop.permute.xlu0 %3311
      %3313 = vrot.lane.b32.xlu0 %v3293, 104
      %v3314 = vpop.permute.xlu0 %3313
      %3315 = vrot.lane.b32.xlu0 %v3294, 104
      %v3316 = vpop.permute.xlu0 %3315
      %3317 = vrot.lane.b32.xlu0 %v3295, 104
      %v3318 = vpop.permute.xlu0 %3317
      %3319 = vrot.lane.b32.xlu0 %v3296, 104
      %v3320 = vpop.permute.xlu0 %3319
      %v3329 = vsel %vm520, %v3306, 0.0
      %3330 = vadd.xlane.f32.xlu0 %v3329
      %v3331 = vpop.xlane.xlu0 %3330
      %v3332 = vsel %vm520, %v3308, 0.0
      %3333 = vadd.xlane.f32.xlu0 %v3332
      %v3334 = vpop.xlane.xlu0 %3333
      %v3335 = vsel %vm520, %v3310, 0.0
      %3336 = vadd.xlane.f32.xlu0 %v3335
      %v3337 = vpop.xlane.xlu0 %3336
      %v3338 = vsel %vm520, %v3312, 0.0
      %3339 = vadd.xlane.f32.xlu0 %v3338
      %v3340 = vpop.xlane.xlu0 %3339
      %v3341 = vsel %vm520, %v3314, 0.0
      %3342 = vadd.xlane.f32.xlu0 %v3341
      %v3343 = vpop.xlane.xlu0 %3342
      %v3344 = vsel %vm520, %v3316, 0.0
      %3345 = vadd.xlane.f32.xlu0 %v3344
      %v3346 = vpop.xlane.xlu0 %3345
      %v3347 = vsel %vm520, %v3318, 0.0
      %3348 = vadd.xlane.f32.xlu0 %v3347
      %v3349 = vpop.xlane.xlu0 %3348
      %v3350 = vsel %vm520, %v3320, 0.0
      %3351 = vadd.xlane.f32.xlu0 %v3350
      %v3352 = vpop.xlane.xlu0 %3351
      %v3353 = vmul.f32 %v3331, %v545
      %v3354 = vmul.f32 %v3334, %v545
      %v3355 = vmul.f32 %v3337, %v545
      %v3356 = vmul.f32 %v3340, %v545
      %v3357 = vmul.f32 %v3343, %v545
      %v3358 = vmul.f32 %v3346, %v545
      %v3359 = vmul.f32 %v3349, %v545
      %v3360 = vmul.f32 %v3352, %v545
      %v3361 = vadd.f32 %v3353, 1e-06
      %v3362 = vadd.f32 %v3354, 1e-06
      %v3363 = vadd.f32 %v3355, 1e-06
      %v3364 = vadd.f32 %v3356, 1e-06
      %v3365 = vadd.f32 %v3357, 1e-06
      %v3366 = vadd.f32 %v3358, 1e-06
      %v3367 = vadd.f32 %v3359, 1e-06
      %v3368 = vadd.f32 %v3360, 1e-06
      %v3369 = vrsqrt.pop %v3361
      %v3370 = vrsqrt.pop %v3362
      %v3371 = vrsqrt.pop %v3363
      %v3372 = vrsqrt.pop %v3364
      %v3373 = vrsqrt.pop %v3365
      %v3374 = vrsqrt.pop %v3366
      %v3375 = vrsqrt.pop %v3367
      %v3376 = vrsqrt.pop %v3368
      %v3377 = vmul.f32 %v3281, %v3369
      %v3378 = vmul.f32 %v3282, %v3370
      %v3379 = vmul.f32 %v3283, %v3371
      %v3380 = vmul.f32 %v3284, %v3372
      %v3381 = vmul.f32 %v3285, %v3373
      %v3382 = vmul.f32 %v3286, %v3374
      %v3383 = vmul.f32 %v3287, %v3375
      %v3384 = vmul.f32 %v3288, %v3376
      %3385 = vrot.lane.b32.xlu0 %v630, 24
      %v3386 = vpop.permute.xlu0 %3385
      %v3388 = vmul.f32 %v3377, %v3386
      %v3389 = vmul.f32 %v3378, %v3386
      %v3390 = vmul.f32 %v3379, %v3386
      %v3391 = vmul.f32 %v3380, %v3386
      %v3392 = vmul.f32 %v3381, %v3386
      %v3393 = vmul.f32 %v3382, %v3386
      %v3394 = vmul.f32 %v3383, %v3386
      %v3395 = vmul.f32 %v3384, %v3386
      %3396 = vrot.lane.b32.xlu0 %v644, 24
      %v3397 = vpop.permute.xlu0 %3396
      %v3399 = vadd.f32 %v3388, %v3397
      %v3400 = vadd.f32 %v3389, %v3397
      %v3401 = vadd.f32 %v3390, %v3397
      %v3402 = vadd.f32 %v3391, %v3397
      %v3403 = vadd.f32 %v3392, %v3397
      %v3404 = vadd.f32 %v3393, %v3397
      %v3405 = vadd.f32 %v3394, %v3397
      %v3406 = vadd.f32 %v3395, %v3397
      %v3407 = vmul.f32 %v3399, 0.5
      %v3408 = vmul.f32 %v3400, 0.5
      %v3409 = vmul.f32 %v3401, 0.5
      %v3410 = vmul.f32 %v3402, 0.5
      %v3411 = vmul.f32 %v3403, 0.5
      %v3412 = vmul.f32 %v3404, 0.5
      %v3413 = vmul.f32 %v3405, 0.5
      %v3414 = vmul.f32 %v3406, 0.5
      %v3415 = vmul.f32 %v3399, 0.70710677
      %v3416 = vmul.f32 %v3400, 0.70710677
      %v3417 = vmul.f32 %v3401, 0.70710677
      %v3418 = vmul.f32 %v3402, 0.70710677
      %v3419 = vmul.f32 %v3403, 0.70710677
      %v3420 = vmul.f32 %v3404, 0.70710677
      %v3421 = vmul.f32 %v3405, 0.70710677
      %v3422 = vmul.f32 %v3406, 0.70710677
      %vm3423 = vcmp.ge.f32.partialorder %v3415, 0.0
      %vm3424 = vcmp.ge.f32.partialorder %v3416, 0.0
      %vm3425 = vcmp.ge.f32.partialorder %v3417, 0.0
      %vm3426 = vcmp.ge.f32.partialorder %v3418, 0.0
      %vm3427 = vcmp.ge.f32.partialorder %v3419, 0.0
      %vm3428 = vcmp.ge.f32.partialorder %v3420, 0.0
      %vm3429 = vcmp.ge.f32.partialorder %v3421, 0.0
      %vm3430 = vcmp.ge.f32.partialorder %v3422, 0.0
      %v3431 = vsel %vm3423, 1.0, -1.0
      %v3432 = vsel %vm3424, 1.0, -1.0
      %v3433 = vsel %vm3425, 1.0, -1.0
      %v3434 = vsel %vm3426, 1.0, -1.0
      %v3435 = vsel %vm3427, 1.0, -1.0
      %v3436 = vsel %vm3428, 1.0, -1.0
      %v3437 = vsel %vm3429, 1.0, -1.0
      %v3438 = vsel %vm3430, 1.0, -1.0
      %v3439 = vand.u32 2147483647, %v3415
      %v3440 = vand.u32 2147483647, %v3416
      %v3441 = vand.u32 2147483647, %v3417
      %v3442 = vand.u32 2147483647, %v3418
      %v3443 = vand.u32 2147483647, %v3419
      %v3444 = vand.u32 2147483647, %v3420
      %v3445 = vand.u32 2147483647, %v3421
      %v3446 = vand.u32 2147483647, %v3422
      %v3447 = vmul.f32 %v3439, 0.3275911
      %v3448 = vmul.f32 %v3440, 0.3275911
      %v3449 = vmul.f32 %v3441, 0.3275911
      %v3450 = vmul.f32 %v3442, 0.3275911
      %v3451 = vmul.f32 %v3443, 0.3275911
      %v3452 = vmul.f32 %v3444, 0.3275911
      %v3453 = vmul.f32 %v3445, 0.3275911
      %v3454 = vmul.f32 %v3446, 0.3275911
      %v3455 = vadd.f32 %v3447, 1.0
      %v3456 = vadd.f32 %v3448, 1.0
      %v3457 = vadd.f32 %v3449, 1.0
      %v3458 = vadd.f32 %v3450, 1.0
      %v3459 = vadd.f32 %v3451, 1.0
      %v3460 = vadd.f32 %v3452, 1.0
      %v3461 = vadd.f32 %v3453, 1.0
      %v3462 = vadd.f32 %v3454, 1.0
      %v3463 = vrcp.pop %v3455
      %v3464 = vmul.f32 1.0, %v3463
      %v3465 = vrcp.pop %v3456
      %v3466 = vmul.f32 1.0, %v3465
      %v3467 = vrcp.pop %v3457
      %v3468 = vmul.f32 1.0, %v3467
      %v3469 = vrcp.pop %v3458
      %v3470 = vmul.f32 1.0, %v3469
      %v3471 = vrcp.pop %v3459
      %v3472 = vmul.f32 1.0, %v3471
      %v3473 = vrcp.pop %v3460
      %v3474 = vmul.f32 1.0, %v3473
      %v3475 = vrcp.pop %v3461
      %v3476 = vmul.f32 1.0, %v3475
      %v3477 = vrcp.pop %v3462
      %v3478 = vmul.f32 1.0, %v3477
      %v3479 = vmul.f32 %v3464, 1.0614054
      %v3480 = vmul.f32 %v3466, 1.0614054
      %v3481 = vmul.f32 %v3468, 1.0614054
      %v3482 = vmul.f32 %v3470, 1.0614054
      %v3483 = vmul.f32 %v3472, 1.0614054
      %v3484 = vmul.f32 %v3474, 1.0614054
      %v3485 = vmul.f32 %v3476, 1.0614054
      %v3486 = vmul.f32 %v3478, 1.0614054
      %v3487 = vadd.f32 %v3479, -1.4531521
      %v3488 = vadd.f32 %v3480, -1.4531521
      %v3489 = vadd.f32 %v3481, -1.4531521
      %v3490 = vadd.f32 %v3482, -1.4531521
      %v3491 = vadd.f32 %v3483, -1.4531521
      %v3492 = vadd.f32 %v3484, -1.4531521
      %v3493 = vadd.f32 %v3485, -1.4531521
      %v3494 = vadd.f32 %v3486, -1.4531521
      %v3495 = vmul.f32 %v3487, %v3464
      %v3496 = vmul.f32 %v3488, %v3466
      %v3497 = vmul.f32 %v3489, %v3468
      %v3498 = vmul.f32 %v3490, %v3470
      %v3499 = vmul.f32 %v3491, %v3472
      %v3500 = vmul.f32 %v3492, %v3474
      %v3501 = vmul.f32 %v3493, %v3476
      %v3502 = vmul.f32 %v3494, %v3478
      %v3503 = vadd.f32 %v3495, 1.4214138
      %v3504 = vadd.f32 %v3496, 1.4214138
      %v3505 = vadd.f32 %v3497, 1.4214138
      %v3506 = vadd.f32 %v3498, 1.4214138
      %v3507 = vadd.f32 %v3499, 1.4214138
      %v3508 = vadd.f32 %v3500, 1.4214138
      %v3509 = vadd.f32 %v3501, 1.4214138
      %v3510 = vadd.f32 %v3502, 1.4214138
      %v3511 = vmul.f32 %v3503, %v3464
      %v3512 = vmul.f32 %v3504, %v3466
      %v3513 = vmul.f32 %v3505, %v3468
      %v3514 = vmul.f32 %v3506, %v3470
      %v3515 = vmul.f32 %v3507, %v3472
      %v3516 = vmul.f32 %v3508, %v3474
      %v3517 = vmul.f32 %v3509, %v3476
      %v3518 = vmul.f32 %v3510, %v3478
      %v3519 = vadd.f32 %v3511, -0.28449672
      %v3520 = vadd.f32 %v3512, -0.28449672
      %v3521 = vadd.f32 %v3513, -0.28449672
      %v3522 = vadd.f32 %v3514, -0.28449672
      %v3523 = vadd.f32 %v3515, -0.28449672
      %v3524 = vadd.f32 %v3516, -0.28449672
      %v3525 = vadd.f32 %v3517, -0.28449672
      %v3526 = vadd.f32 %v3518, -0.28449672
      %v3527 = vmul.f32 %v3519, %v3464
      %v3528 = vmul.f32 %v3520, %v3466
      %v3529 = vmul.f32 %v3521, %v3468
      %v3530 = vmul.f32 %v3522, %v3470
      %v3531 = vmul.f32 %v3523, %v3472
      %v3532 = vmul.f32 %v3524, %v3474
      %v3533 = vmul.f32 %v3525, %v3476
      %v3534 = vmul.f32 %v3526, %v3478
      %v3535 = vadd.f32 %v3527, 0.2548296
      %v3536 = vadd.f32 %v3528, 0.2548296
      %v3537 = vadd.f32 %v3529, 0.2548296
      %v3538 = vadd.f32 %v3530, 0.2548296
      %v3539 = vadd.f32 %v3531, 0.2548296
      %v3540 = vadd.f32 %v3532, 0.2548296
      %v3541 = vadd.f32 %v3533, 0.2548296
      %v3542 = vadd.f32 %v3534, 0.2548296
      %v3543 = vmul.f32 %v3535, %v3464
      %v3544 = vmul.f32 %v3536, %v3466
      %v3545 = vmul.f32 %v3537, %v3468
      %v3546 = vmul.f32 %v3538, %v3470
      %v3547 = vmul.f32 %v3539, %v3472
      %v3548 = vmul.f32 %v3540, %v3474
      %v3549 = vmul.f32 %v3541, %v3476
      %v3550 = vmul.f32 %v3542, %v3478
      %v3551 = vsub.f32 0.0, %v3439
      %v3552 = vsub.f32 0.0, %v3440
      %v3553 = vsub.f32 0.0, %v3441
      %v3554 = vsub.f32 0.0, %v3442
      %v3555 = vsub.f32 0.0, %v3443
      %v3556 = vsub.f32 0.0, %v3444
      %v3557 = vsub.f32 0.0, %v3445
      %v3558 = vsub.f32 0.0, %v3446
      %v3559 = vmul.f32 %v3551, %v3439
      %v3560 = vmul.f32 %v3552, %v3440
      %v3561 = vmul.f32 %v3553, %v3441
      %v3562 = vmul.f32 %v3554, %v3442
      %v3563 = vmul.f32 %v3555, %v3443
      %v3564 = vmul.f32 %v3556, %v3444
      %v3565 = vmul.f32 %v3557, %v3445
      %v3566 = vmul.f32 %v3558, %v3446
      %v3567 = vmul.f32 %v3559, 1.442695
      %v3568 = vpow.pop %v3567
      %v3569 = vmul.f32 %v3560, 1.442695
      %v3570 = vpow.pop %v3569
      %v3571 = vmul.f32 %v3561, 1.442695
      %v3572 = vpow.pop %v3571
      %v3573 = vmul.f32 %v3562, 1.442695
      %v3574 = vpow.pop %v3573
      %v3575 = vmul.f32 %v3563, 1.442695
      %v3576 = vpow.pop %v3575
      %v3577 = vmul.f32 %v3564, 1.442695
      %v3578 = vpow.pop %v3577
      %v3579 = vmul.f32 %v3565, 1.442695
      %v3580 = vpow.pop %v3579
      %v3581 = vmul.f32 %v3566, 1.442695
      %v3582 = vpow.pop %v3581
      %v3583 = vmul.f32 %v3543, %v3568
      %v3584 = vmul.f32 %v3544, %v3570
      %v3585 = vmul.f32 %v3545, %v3572
      %v3586 = vmul.f32 %v3546, %v3574
      %v3587 = vmul.f32 %v3547, %v3576
      %v3588 = vmul.f32 %v3548, %v3578
      %v3589 = vmul.f32 %v3549, %v3580
      %v3590 = vmul.f32 %v3550, %v3582
      %v3591 = vsub.f32 1.0, %v3583
      %v3592 = vsub.f32 1.0, %v3584
      %v3593 = vsub.f32 1.0, %v3585
      %v3594 = vsub.f32 1.0, %v3586
      %v3595 = vsub.f32 1.0, %v3587
      %v3596 = vsub.f32 1.0, %v3588
      %v3597 = vsub.f32 1.0, %v3589
      %v3598 = vsub.f32 1.0, %v3590
      %v3599 = vmul.f32 %v3431, %v3591
      %v3600 = vmul.f32 %v3432, %v3592
      %v3601 = vmul.f32 %v3433, %v3593
      %v3602 = vmul.f32 %v3434, %v3594
      %v3603 = vmul.f32 %v3435, %v3595
      %v3604 = vmul.f32 %v3436, %v3596
      %v3605 = vmul.f32 %v3437, %v3597
      %v3606 = vmul.f32 %v3438, %v3598
      %v3607 = vadd.f32 %v3599, 1.0
      %v3608 = vadd.f32 %v3600, 1.0
      %v3609 = vadd.f32 %v3601, 1.0
      %v3610 = vadd.f32 %v3602, 1.0
      %v3611 = vadd.f32 %v3603, 1.0
      %v3612 = vadd.f32 %v3604, 1.0
      %v3613 = vadd.f32 %v3605, 1.0
      %v3614 = vadd.f32 %v3606, 1.0
      %v3615 = vmul.f32 %v3407, %v3607
      %v3616 = vmul.f32 %v3408, %v3608
      %v3617 = vmul.f32 %v3409, %v3609
      %v3618 = vmul.f32 %v3410, %v3610
      %v3619 = vmul.f32 %v3411, %v3611
      %v3620 = vmul.f32 %v3412, %v3612
      %v3621 = vmul.f32 %v3413, %v3613
      %v3622 = vmul.f32 %v3414, %v3614
      %3631 = vrot.lane.b32.xlu0 %v3615, 104
      %v3632 = vpop.permute.xlu0 %3631
      %3633 = vrot.lane.b32.xlu0 %v3616, 104
      %v3634 = vpop.permute.xlu0 %3633
      %3635 = vrot.lane.b32.xlu0 %v3617, 104
      %v3636 = vpop.permute.xlu0 %3635
      %3637 = vrot.lane.b32.xlu0 %v3618, 104
      %v3638 = vpop.permute.xlu0 %3637
      %3639 = vrot.lane.b32.xlu0 %v3619, 104
      %v3640 = vpop.permute.xlu0 %3639
      %3641 = vrot.lane.b32.xlu0 %v3620, 104
      %v3642 = vpop.permute.xlu0 %3641
      %3643 = vrot.lane.b32.xlu0 %v3621, 104
      %v3644 = vpop.permute.xlu0 %3643
      %3645 = vrot.lane.b32.xlu0 %v3622, 104
      %v3646 = vpop.permute.xlu0 %3645
      %v3647 = vsel %vm520, %v3632, 0
      %v3649 = vsel %vm520, %v3634, 0
      %v3651 = vsel %vm520, %v3636, 0
      %v3653 = vsel %vm520, %v3638, 0
      %v3655 = vsel %vm520, %v3640, 0
      %v3657 = vsel %vm520, %v3642, 0
      %v3659 = vsel %vm520, %v3644, 0
      %v3661 = vsel %vm520, %v3646, 0
      %3663 = vmatprep.subr.mxu0 0.0
      %3664 = vmatpush1.msra.mxu0 %v516
      %3665 = vmatprep.subr.mxu0 0.0
      %3666 = vmatpush1.msra.mxu0 0.0
      %3667 = vmatprep.subr.mxu0 0.0
      %3668 = vmatpush1.msra.mxu0 0.0
      %3669 = vmatprep.subr.mxu0 0.0
      %3670 = vmatpush1.msra.mxu0 0.0
      %3671 = vmatprep.subr.mxu0 0.0
      %3672 = vmatpush1.msra.mxu0 0.0
      %3673 = vmatprep.subr.mxu0 0.0
      %3674 = vmatpush1.msra.mxu0 0.0
      %3675 = vmatprep.subr.mxu0 0.0
      %3676 = vmatpush1.msra.mxu0 0.0
      %3677 = vmatprep.subr.mxu0 0.0
      %3678 = vmatpush1.msra.mxu0 0.0
      %3679 = vmatprep.subr.mxu0 0.0
      %3680 = vmatpush1.msra.mxu0 0.0
      %3681 = vmatprep.subr.mxu0 0.0
      %3682 = vmatpush1.msra.mxu0 0.0
      %3683 = vmatprep.subr.mxu0 0.0
      %3684 = vmatpush1.msra.mxu0 0.0
      %3685 = vmatprep.subr.mxu0 0.0
      %3686 = vmatpush1.msra.mxu0 0.0
      %3687 = vmatprep.subr.mxu0 0.0
      %3688 = vmatpush1.msra.mxu0 0.0
      %3689 = vmatprep.subr.mxu0 0.0
      %3690 = vmatpush1.msra.mxu0 0.0
      %3691 = vmatprep.subr.mxu0 0.0
      %3692 = vmatpush1.msra.mxu0 0.0
      %3693 = vmatprep.subr.mxu0 0.0
      %3694 = vmatpush1.msra.mxu0 0.0
      %3695 = vmatprep.subr.mxu0 0.0
      %3696 = vmatpush1.msra.mxu0 0.0
      %3697 = vmatprep.subr.mxu0 0.0
      %3698 = vmatpush1.msra.mxu0 0.0
      %3699 = vmatprep.subr.mxu0 0.0
      %3700 = vmatpush1.msra.mxu0 0.0
      %3701 = vmatprep.subr.mxu0 0.0
      %3702 = vmatpush1.msra.mxu0 0.0
      %3703 = vmatprep.subr.mxu0 0.0
      %3704 = vmatpush1.msra.mxu0 0.0
      %3705 = vmatprep.subr.mxu0 0.0
      %3706 = vmatpush1.msra.mxu0 0.0
      %3707 = vmatprep.subr.mxu0 0.0
      %3708 = vmatpush1.msra.mxu0 0.0
      %3709 = vmatprep.subr.mxu0 0.0
      %3710 = vmatpush1.msra.mxu0 0.0
      %3711 = vmatprep.subr.mxu0 0.0
      %3712 = vmatpush1.msra.mxu0 0.0
      %3713 = vmatprep.subr.mxu0 0.0
      %3714 = vmatpush1.msra.mxu0 0.0
      %3715 = vmatprep.subr.mxu0 0.0
      %3716 = vmatpush1.msra.mxu0 0.0
      %3717 = vmatprep.subr.mxu0 0.0
      %3718 = vmatpush1.msra.mxu0 0.0
      %3719 = vmatprep.subr.mxu0 0.0
      %3720 = vmatpush1.msra.mxu0 0.0
      %3721 = vmatprep.subr.mxu0 0.0
      %3722 = vmatpush1.msra.mxu0 0.0
      %3723 = vmatprep.subr.mxu0 0.0
      %3724 = vmatpush1.msra.mxu0 0.0
      %3725 = vmatprep.subr.mxu0 0.0
      %3726 = vmatpush1.msra.mxu0 0.0
      %3727 = vmatprep.mubr.f32.mxu0 0.0
      %3728 = vmatmul.mubr.f32.gmra.mrb[0].mxu0 %v3647
      %v3729 = vpop.f32.mrb[0].mxu0
      %v3730 = vadd.f32 %v874, %v3729
      %v3731 = vpop.f32.mrb[0].mxu0
      %3732 = vmatprep.mubr.f32.mxu0 0.0
      %3733 = vmatmul.mubr.f32.gmra.mrb[0].mxu0 %v3649
      %v3734 = vpop.f32.mrb[0].mxu0
      %v3735 = vadd.f32 %v874, %v3734
      %v3736 = vpop.f32.mrb[0].mxu0
      %3737 = vmatprep.mubr.f32.mxu0 0.0
      %3738 = vmatmul.mubr.f32.gmra.mrb[0].mxu0 %v3651
      %v3739 = vpop.f32.mrb[0].mxu0
      %v3740 = vadd.f32 %v874, %v3739
      %v3741 = vpop.f32.mrb[0].mxu0
      %3742 = vmatprep.mubr.f32.mxu0 0.0
      %3743 = vmatmul.mubr.f32.gmra.mrb[0].mxu0 %v3653
      %v3744 = vpop.f32.mrb[0].mxu0
      %v3745 = vadd.f32 %v874, %v3744
      %v3746 = vpop.f32.mrb[0].mxu0
      %3747 = vmatprep.mubr.f32.mxu0 0.0
      %3748 = vmatmul.mubr.f32.gmra.mrb[0].mxu0 %v3655
      %v3749 = vpop.f32.mrb[0].mxu0
      %v3750 = vadd.f32 %v874, %v3749
      %v3751 = vpop.f32.mrb[0].mxu0
      %3752 = vmatprep.mubr.f32.mxu0 0.0
      %3753 = vmatmul.mubr.f32.gmra.mrb[0].mxu0 %v3657
      %v3754 = vpop.f32.mrb[0].mxu0
      %v3755 = vadd.f32 %v874, %v3754
      %v3756 = vpop.f32.mrb[0].mxu0
      %3757 = vmatprep.mubr.f32.mxu0 0.0
      %3758 = vmatmul.mubr.f32.gmra.mrb[0].mxu0 %v3659
      %v3759 = vpop.f32.mrb[0].mxu0
      %v3760 = vadd.f32 %v874, %v3759
      %v3761 = vpop.f32.mrb[0].mxu0
      %3762 = vmatprep.mubr.f32.mxu0 0.0
      %3763 = vmatmul.mubr.f32.gmra.mrb[0].mxu0 %v3661
      %v3764 = vpop.f32.mrb[0].mxu0
      %v3765 = vadd.f32 %v874, %v3764
      %v3766 = vpop.f32.mrb[0].mxu0
      %3767 = vdwg.mxu0
      %v3768 = vmul.f32 %v3730, 0.5
      %v3769 = vmul.f32 %v3735, 0.5
      %v3770 = vmul.f32 %v3740, 0.5
      %v3771 = vmul.f32 %v3745, 0.5
      %v3772 = vmul.f32 %v3750, 0.5
      %v3773 = vmul.f32 %v3755, 0.5
      %v3774 = vmul.f32 %v3760, 0.5
      %v3775 = vmul.f32 %v3765, 0.5
      %v3776 = vmul.f32 %v3730, 0.70710677
      %v3777 = vmul.f32 %v3735, 0.70710677
      %v3778 = vmul.f32 %v3740, 0.70710677
      %v3779 = vmul.f32 %v3745, 0.70710677
      %v3780 = vmul.f32 %v3750, 0.70710677
      %v3781 = vmul.f32 %v3755, 0.70710677
      %v3782 = vmul.f32 %v3760, 0.70710677
      %v3783 = vmul.f32 %v3765, 0.70710677
      %vm3784 = vcmp.ge.f32.partialorder %v3776, 0.0
      %vm3785 = vcmp.ge.f32.partialorder %v3777, 0.0
      %vm3786 = vcmp.ge.f32.partialorder %v3778, 0.0
      %vm3787 = vcmp.ge.f32.partialorder %v3779, 0.0
      %vm3788 = vcmp.ge.f32.partialorder %v3780, 0.0
      %vm3789 = vcmp.ge.f32.partialorder %v3781, 0.0
      %vm3790 = vcmp.ge.f32.partialorder %v3782, 0.0
      %vm3791 = vcmp.ge.f32.partialorder %v3783, 0.0
      %v3792 = vsel %vm3784, 1.0, -1.0
      %v3793 = vsel %vm3785, 1.0, -1.0
      %v3794 = vsel %vm3786, 1.0, -1.0
      %v3795 = vsel %vm3787, 1.0, -1.0
      %v3796 = vsel %vm3788, 1.0, -1.0
      %v3797 = vsel %vm3789, 1.0, -1.0
      %v3798 = vsel %vm3790, 1.0, -1.0
      %v3799 = vsel %vm3791, 1.0, -1.0
      %v3800 = vand.u32 2147483647, %v3776
      %v3801 = vand.u32 2147483647, %v3777
      %v3802 = vand.u32 2147483647, %v3778
      %v3803 = vand.u32 2147483647, %v3779
      %v3804 = vand.u32 2147483647, %v3780
      %v3805 = vand.u32 2147483647, %v3781
      %v3806 = vand.u32 2147483647, %v3782
      %v3807 = vand.u32 2147483647, %v3783
      %v3808 = vmul.f32 %v3800, 0.3275911
      %v3809 = vmul.f32 %v3801, 0.3275911
      %v3810 = vmul.f32 %v3802, 0.3275911
      %v3811 = vmul.f32 %v3803, 0.3275911
      %v3812 = vmul.f32 %v3804, 0.3275911
      %v3813 = vmul.f32 %v3805, 0.3275911
      %v3814 = vmul.f32 %v3806, 0.3275911
      %v3815 = vmul.f32 %v3807, 0.3275911
      %v3816 = vadd.f32 %v3808, 1.0
      %v3817 = vadd.f32 %v3809, 1.0
      %v3818 = vadd.f32 %v3810, 1.0
      %v3819 = vadd.f32 %v3811, 1.0
      %v3820 = vadd.f32 %v3812, 1.0
      %v3821 = vadd.f32 %v3813, 1.0
      %v3822 = vadd.f32 %v3814, 1.0
      %v3823 = vadd.f32 %v3815, 1.0
      %v3824 = vrcp.pop %v3816
      %v3825 = vmul.f32 1.0, %v3824
      %v3826 = vrcp.pop %v3817
      %v3827 = vmul.f32 1.0, %v3826
      %v3828 = vrcp.pop %v3818
      %v3829 = vmul.f32 1.0, %v3828
      %v3830 = vrcp.pop %v3819
      %v3831 = vmul.f32 1.0, %v3830
      %v3832 = vrcp.pop %v3820
      %v3833 = vmul.f32 1.0, %v3832
      %v3834 = vrcp.pop %v3821
      %v3835 = vmul.f32 1.0, %v3834
      %v3836 = vrcp.pop %v3822
      %v3837 = vmul.f32 1.0, %v3836
      %v3838 = vrcp.pop %v3823
      %v3839 = vmul.f32 1.0, %v3838
      %v3840 = vmul.f32 %v3825, 1.0614054
      %v3841 = vmul.f32 %v3827, 1.0614054
      %v3842 = vmul.f32 %v3829, 1.0614054
      %v3843 = vmul.f32 %v3831, 1.0614054
      %v3844 = vmul.f32 %v3833, 1.0614054
      %v3845 = vmul.f32 %v3835, 1.0614054
      %v3846 = vmul.f32 %v3837, 1.0614054
      %v3847 = vmul.f32 %v3839, 1.0614054
      %v3848 = vadd.f32 %v3840, -1.4531521
      %v3849 = vadd.f32 %v3841, -1.4531521
      %v3850 = vadd.f32 %v3842, -1.4531521
      %v3851 = vadd.f32 %v3843, -1.4531521
      %v3852 = vadd.f32 %v3844, -1.4531521
      %v3853 = vadd.f32 %v3845, -1.4531521
      %v3854 = vadd.f32 %v3846, -1.4531521
      %v3855 = vadd.f32 %v3847, -1.4531521
      %v3856 = vmul.f32 %v3848, %v3825
      %v3857 = vmul.f32 %v3849, %v3827
      %v3858 = vmul.f32 %v3850, %v3829
      %v3859 = vmul.f32 %v3851, %v3831
      %v3860 = vmul.f32 %v3852, %v3833
      %v3861 = vmul.f32 %v3853, %v3835
      %v3862 = vmul.f32 %v3854, %v3837
      %v3863 = vmul.f32 %v3855, %v3839
      %v3864 = vadd.f32 %v3856, 1.4214138
      %v3865 = vadd.f32 %v3857, 1.4214138
      %v3866 = vadd.f32 %v3858, 1.4214138
      %v3867 = vadd.f32 %v3859, 1.4214138
      %v3868 = vadd.f32 %v3860, 1.4214138
      %v3869 = vadd.f32 %v3861, 1.4214138
      %v3870 = vadd.f32 %v3862, 1.4214138
      %v3871 = vadd.f32 %v3863, 1.4214138
      %v3872 = vmul.f32 %v3864, %v3825
      %v3873 = vmul.f32 %v3865, %v3827
      %v3874 = vmul.f32 %v3866, %v3829
      %v3875 = vmul.f32 %v3867, %v3831
      %v3876 = vmul.f32 %v3868, %v3833
      %v3877 = vmul.f32 %v3869, %v3835
      %v3878 = vmul.f32 %v3870, %v3837
      %v3879 = vmul.f32 %v3871, %v3839
      %v3880 = vadd.f32 %v3872, -0.28449672
      %v3881 = vadd.f32 %v3873, -0.28449672
      %v3882 = vadd.f32 %v3874, -0.28449672
      %v3883 = vadd.f32 %v3875, -0.28449672
      %v3884 = vadd.f32 %v3876, -0.28449672
      %v3885 = vadd.f32 %v3877, -0.28449672
      %v3886 = vadd.f32 %v3878, -0.28449672
      %v3887 = vadd.f32 %v3879, -0.28449672
      %v3888 = vmul.f32 %v3880, %v3825
      %v3889 = vmul.f32 %v3881, %v3827
      %v3890 = vmul.f32 %v3882, %v3829
      %v3891 = vmul.f32 %v3883, %v3831
      %v3892 = vmul.f32 %v3884, %v3833
      %v3893 = vmul.f32 %v3885, %v3835
      %v3894 = vmul.f32 %v3886, %v3837
      %v3895 = vmul.f32 %v3887, %v3839
      %v3896 = vadd.f32 %v3888, 0.2548296
      %v3897 = vadd.f32 %v3889, 0.2548296
      %v3898 = vadd.f32 %v3890, 0.2548296
      %v3899 = vadd.f32 %v3891, 0.2548296
      %v3900 = vadd.f32 %v3892, 0.2548296
      %v3901 = vadd.f32 %v3893, 0.2548296
      %v3902 = vadd.f32 %v3894, 0.2548296
      %v3903 = vadd.f32 %v3895, 0.2548296
      %v3904 = vmul.f32 %v3896, %v3825
      %v3905 = vmul.f32 %v3897, %v3827
      %v3906 = vmul.f32 %v3898, %v3829
      %v3907 = vmul.f32 %v3899, %v3831
      %v3908 = vmul.f32 %v3900, %v3833
      %v3909 = vmul.f32 %v3901, %v3835
      %v3910 = vmul.f32 %v3902, %v3837
      %v3911 = vmul.f32 %v3903, %v3839
      %v3912 = vsub.f32 0.0, %v3800
      %v3913 = vsub.f32 0.0, %v3801
      %v3914 = vsub.f32 0.0, %v3802
      %v3915 = vsub.f32 0.0, %v3803
      %v3916 = vsub.f32 0.0, %v3804
      %v3917 = vsub.f32 0.0, %v3805
      %v3918 = vsub.f32 0.0, %v3806
      %v3919 = vsub.f32 0.0, %v3807
      %v3920 = vmul.f32 %v3912, %v3800
      %v3921 = vmul.f32 %v3913, %v3801
      %v3922 = vmul.f32 %v3914, %v3802
      %v3923 = vmul.f32 %v3915, %v3803
      %v3924 = vmul.f32 %v3916, %v3804
      %v3925 = vmul.f32 %v3917, %v3805
      %v3926 = vmul.f32 %v3918, %v3806
      %v3927 = vmul.f32 %v3919, %v3807
      %v3928 = vmul.f32 %v3920, 1.442695
      %v3929 = vpow.pop %v3928
      %v3930 = vmul.f32 %v3921, 1.442695
      %v3931 = vpow.pop %v3930
      %v3932 = vmul.f32 %v3922, 1.442695
      %v3933 = vpow.pop %v3932
      %v3934 = vmul.f32 %v3923, 1.442695
      %v3935 = vpow.pop %v3934
      %v3936 = vmul.f32 %v3924, 1.442695
      %v3937 = vpow.pop %v3936
      %v3938 = vmul.f32 %v3925, 1.442695
      %v3939 = vpow.pop %v3938
      %v3940 = vmul.f32 %v3926, 1.442695
      %v3941 = vpow.pop %v3940
      %v3942 = vmul.f32 %v3927, 1.442695
      %v3943 = vpow.pop %v3942
      %v3944 = vmul.f32 %v3904, %v3929
      %v3945 = vmul.f32 %v3905, %v3931
      %v3946 = vmul.f32 %v3906, %v3933
      %v3947 = vmul.f32 %v3907, %v3935
      %v3948 = vmul.f32 %v3908, %v3937
      %v3949 = vmul.f32 %v3909, %v3939
      %v3950 = vmul.f32 %v3910, %v3941
      %v3951 = vmul.f32 %v3911, %v3943
      %v3952 = vsub.f32 1.0, %v3944
      %v3953 = vsub.f32 1.0, %v3945
      %v3954 = vsub.f32 1.0, %v3946
      %v3955 = vsub.f32 1.0, %v3947
      %v3956 = vsub.f32 1.0, %v3948
      %v3957 = vsub.f32 1.0, %v3949
      %v3958 = vsub.f32 1.0, %v3950
      %v3959 = vsub.f32 1.0, %v3951
      %v3960 = vmul.f32 %v3792, %v3952
      %v3961 = vmul.f32 %v3793, %v3953
      %v3962 = vmul.f32 %v3794, %v3954
      %v3963 = vmul.f32 %v3795, %v3955
      %v3964 = vmul.f32 %v3796, %v3956
      %v3965 = vmul.f32 %v3797, %v3957
      %v3966 = vmul.f32 %v3798, %v3958
      %v3967 = vmul.f32 %v3799, %v3959
      %v3968 = vadd.f32 %v3960, 1.0
      %v3969 = vadd.f32 %v3961, 1.0
      %v3970 = vadd.f32 %v3962, 1.0
      %v3971 = vadd.f32 %v3963, 1.0
      %v3972 = vadd.f32 %v3964, 1.0
      %v3973 = vadd.f32 %v3965, 1.0
      %v3974 = vadd.f32 %v3966, 1.0
      %v3975 = vadd.f32 %v3967, 1.0
      %v3976 = vmul.f32 %v3768, %v3968
      %v3977 = vmul.f32 %v3769, %v3969
      %v3978 = vmul.f32 %v3770, %v3970
      %v3979 = vmul.f32 %v3771, %v3971
      %v3980 = vmul.f32 %v3772, %v3972
      %v3981 = vmul.f32 %v3773, %v3973
      %v3982 = vmul.f32 %v3774, %v3974
      %v3983 = vmul.f32 %v3775, %v3975
      %v3985 = vsel %vm1221, %v3976, 0
      %v3988 = vsel %vm1221, %v3977, 0
      %v3991 = vsel %vm1221, %v3978, 0
      %v3994 = vsel %vm1221, %v3979, 0
      %v3997 = vsel %vm1221, %v3980, 0
      %v4000 = vsel %vm1221, %v3981, 0
      %v4003 = vsel %vm1221, %v3982, 0
      %v4006 = vsel %vm1221, %v3983, 0
      %4008 = vmatprep.subr.mxu0 0.0
      %4009 = vmatpush1.msra.mxu0 %v518
      %4010 = vmatprep.subr.mxu0 0.0
      %4011 = vmatpush1.msra.mxu0 %v519
      %4012 = vmatprep.subr.mxu0 0.0
      %4013 = vmatpush1.msra.mxu0 0.0
      %4014 = vmatprep.subr.mxu0 0.0
      %4015 = vmatpush1.msra.mxu0 0.0
      %4016 = vmatprep.subr.mxu0 0.0
      %4017 = vmatpush1.msra.mxu0 0.0
      %4018 = vmatprep.subr.mxu0 0.0
      %4019 = vmatpush1.msra.mxu0 0.0
      %4020 = vmatprep.subr.mxu0 0.0
      %4021 = vmatpush1.msra.mxu0 0.0
      %4022 = vmatprep.subr.mxu0 0.0
      %4023 = vmatpush1.msra.mxu0 0.0
      %4024 = vmatprep.subr.mxu0 0.0
      %4025 = vmatpush1.msra.mxu0 0.0
      %4026 = vmatprep.subr.mxu0 0.0
      %4027 = vmatpush1.msra.mxu0 0.0
      %4028 = vmatprep.subr.mxu0 0.0
      %4029 = vmatpush1.msra.mxu0 0.0
      %4030 = vmatprep.subr.mxu0 0.0
      %4031 = vmatpush1.msra.mxu0 0.0
      %4032 = vmatprep.subr.mxu0 0.0
      %4033 = vmatpush1.msra.mxu0 0.0
      %4034 = vmatprep.subr.mxu0 0.0
      %4035 = vmatpush1.msra.mxu0 0.0
      %4036 = vmatprep.subr.mxu0 0.0
      %4037 = vmatpush1.msra.mxu0 0.0
      %4038 = vmatprep.subr.mxu0 0.0
      %4039 = vmatpush1.msra.mxu0 0.0
      %4040 = vmatprep.subr.mxu0 0.0
      %4041 = vmatpush1.msra.mxu0 0.0
      %4042 = vmatprep.subr.mxu0 0.0
      %4043 = vmatpush1.msra.mxu0 0.0
      %4044 = vmatprep.subr.mxu0 0.0
      %4045 = vmatpush1.msra.mxu0 0.0
      %4046 = vmatprep.subr.mxu0 0.0
      %4047 = vmatpush1.msra.mxu0 0.0
      %4048 = vmatprep.subr.mxu0 0.0
      %4049 = vmatpush1.msra.mxu0 0.0
      %4050 = vmatprep.subr.mxu0 0.0
      %4051 = vmatpush1.msra.mxu0 0.0
      %4052 = vmatprep.subr.mxu0 0.0
      %4053 = vmatpush1.msra.mxu0 0.0
      %4054 = vmatprep.subr.mxu0 0.0
      %4055 = vmatpush1.msra.mxu0 0.0
      %4056 = vmatprep.subr.mxu0 0.0
      %4057 = vmatpush1.msra.mxu0 0.0
      %4058 = vmatprep.subr.mxu0 0.0
      %4059 = vmatpush1.msra.mxu0 0.0
      %4060 = vmatprep.subr.mxu0 0.0
      %4061 = vmatpush1.msra.mxu0 0.0
      %4062 = vmatprep.subr.mxu0 0.0
      %4063 = vmatpush1.msra.mxu0 0.0
      %4064 = vmatprep.subr.mxu0 0.0
      %4065 = vmatpush1.msra.mxu0 0.0
      %4066 = vmatprep.subr.mxu0 0.0
      %4067 = vmatpush1.msra.mxu0 0.0
      %4068 = vmatprep.subr.mxu0 0.0
      %4069 = vmatpush1.msra.mxu0 0.0
      %4070 = vmatprep.subr.mxu0 0.0
      %4071 = vmatpush1.msra.mxu0 0.0
      %4072 = vmatprep.mubr.f32.mxu0 0.0
      %4073 = vmatmul.mubr.f32.gmra.mrb[0].mxu0 %v3985
      %v4074 = vpop.f32.mrb[0].mxu0
      %v4075 = vadd.f32 0.0, %v4074
      %v4076 = vpop.f32.mrb[0].mxu0
      %4077 = vmatprep.mubr.f32.mxu0 0.0
      %4078 = vmatmul.mubr.f32.gmra.mrb[0].mxu0 %v3988
      %v4079 = vpop.f32.mrb[0].mxu0
      %v4080 = vadd.f32 0.0, %v4079
      %v4081 = vpop.f32.mrb[0].mxu0
      %4082 = vmatprep.mubr.f32.mxu0 0.0
      %4083 = vmatmul.mubr.f32.gmra.mrb[0].mxu0 %v3991
      %v4084 = vpop.f32.mrb[0].mxu0
      %v4085 = vadd.f32 0.0, %v4084
      %v4086 = vpop.f32.mrb[0].mxu0
      %4087 = vmatprep.mubr.f32.mxu0 0.0
      %4088 = vmatmul.mubr.f32.gmra.mrb[0].mxu0 %v3994
      %v4089 = vpop.f32.mrb[0].mxu0
      %v4090 = vadd.f32 0.0, %v4089
      %v4091 = vpop.f32.mrb[0].mxu0
      %4092 = vmatprep.mubr.f32.mxu0 0.0
      %4093 = vmatmul.mubr.f32.gmra.mrb[0].mxu0 %v3997
      %v4094 = vpop.f32.mrb[0].mxu0
      %v4095 = vadd.f32 0.0, %v4094
      %v4096 = vpop.f32.mrb[0].mxu0
      %4097 = vmatprep.mubr.f32.mxu0 0.0
      %4098 = vmatmul.mubr.f32.gmra.mrb[0].mxu0 %v4000
      %v4099 = vpop.f32.mrb[0].mxu0
      %v4100 = vadd.f32 0.0, %v4099
      %v4101 = vpop.f32.mrb[0].mxu0
      %4102 = vmatprep.mubr.f32.mxu0 0.0
      %4103 = vmatmul.mubr.f32.gmra.mrb[0].mxu0 %v4003
      %v4104 = vpop.f32.mrb[0].mxu0
      %v4105 = vadd.f32 0.0, %v4104
      %v4106 = vpop.f32.mrb[0].mxu0
      %4107 = vmatprep.mubr.f32.mxu0 0.0
      %4108 = vmatmul.mubr.f32.gmra.mrb[0].mxu0 %v4006
      %v4109 = vpop.f32.mrb[0].mxu0
      %v4110 = vadd.f32 0.0, %v4109
      %v4111 = vpop.f32.mrb[0].mxu0
      %4112 = vdwg.mxu0
      %4121 = vrot.lane.b32.xlu0 %v4075, 48
      %v4122 = vpop.permute.xlu0 %4121
      %4123 = vrot.lane.b32.xlu0 %v4080, 48
      %v4124 = vpop.permute.xlu0 %4123
      %4125 = vrot.lane.b32.xlu0 %v4085, 48
      %v4126 = vpop.permute.xlu0 %4125
      %4127 = vrot.lane.b32.xlu0 %v4090, 48
      %v4128 = vpop.permute.xlu0 %4127
      %4129 = vrot.lane.b32.xlu0 %v4095, 48
      %v4130 = vpop.permute.xlu0 %4129
      %4131 = vrot.lane.b32.xlu0 %v4100, 48
      %v4132 = vpop.permute.xlu0 %4131
      %4133 = vrot.lane.b32.xlu0 %v4105, 48
      %v4134 = vpop.permute.xlu0 %4133
      %4135 = vrot.lane.b32.xlu0 %v4110, 48
      %v4136 = vpop.permute.xlu0 %4135
      %vm4145 = vcmask 523648
      %4146 = vst.msk [vmem:[%s363] sm:$0xff] %vm4145, %v4122
      %4147 = vst.msk [vmem:[%s363 + $0x8] sm:$0xff] %vm4145, %v4124
      %4148 = vst.msk [vmem:[%s363 + $0x10] sm:$0xff] %vm4145, %v4126
      %4149 = vst.msk [vmem:[%s363 + $0x18] sm:$0xff] %vm4145, %v4128
      %4150 = vst.msk [vmem:[%s363 + $0x20] sm:$0xff] %vm4145, %v4130
      %4151 = vst.msk [vmem:[%s363 + $0x28] sm:$0xff] %vm4145, %v4132
      %4152 = vst.msk [vmem:[%s363 + $0x30] sm:$0xff] %vm4145, %v4134
      %4153 = vst.msk [vmem:[%s363 + $0x38] sm:$0xff] %vm4145, %v4136
      %s4154 = smul.u32 8, %s24
      %p4155 = scmp.lt.s32.totalorder %s23, 1
      %s4156 = scalar_select %p4155, %s23, 1
      %p4157 = scmp.lt.s32.totalorder %s4154, 7
      %s4158 = scalar_select %p4157, %s4154, 7
      %s4159 = smul.addr %s4156, 8
      %s4160 = sadd.s32 %s4158, %s4159
      %s4161 = smul.addr %s4160, 8
      %s4162 = scalar_lea.vmem %s8, %s4161
      // Predicated region
      $region53: #{_mask_decoder_forward_impl.4} parent=51 // pred_check
        %p4163 = pneg %p231
      $region54: #{_mask_decoder_forward_impl.4} parent=51 // pred_check_branch
        %4165 = sbr.rel (%p4163) target = $region56
      $region55: #{_mask_decoder_forward_impl.4} parent=51 // pred_region
        %s4166 = smul.u32 8, %s24
      $region56: #{_mask_decoder_forward_impl.4} parent=51 // pred_fallthru
        _
    $region52: #{_mask_decoder_forward_impl.4} parent=5 // pred_fallthru
      _
    %p4167 = scmp.le.s32.totalorder 2, %s14
    // Predicated region
    $region57: #{_mask_decoder_forward_impl.4} parent=5 // pred_check
      %p4168 = pneg %p4167
    $region58: #{_mask_decoder_forward_impl.4} parent=5 // pred_check_branch
      %4170 = sbr.rel (%p4168) target = $region60
    $region59: #{_mask_decoder_forward_impl.4} parent=5 // pred_region
      %s4171 = ssub.s32 %s14, 2
      // Predicated region
      $region61: #{_mask_decoder_forward_impl.4} parent=59 // pred_check
        %p4172 = pneg %p237
      $region62: #{_mask_decoder_forward_impl.4} parent=59 // pred_check_branch
        %4174 = sbr.rel (%p4172) target = $region64
      $region63: #{_mask_decoder_forward_impl.4} parent=59 // pred_region
        %s4175 = smul.u32 8, %s26
        %p4176 = scmp.lt.s32.totalorder %s25, 1
        %s4177 = scalar_select %p4176, %s25, 1
        %p4178 = scmp.lt.s32.totalorder %s4175, 7
        %s4179 = scalar_select %p4178, %s4175, 7
        %s4180 = smul.addr %s4177, 8
        %s4181 = sadd.s32 %s4179, %s4180
        %s4182 = smul.addr %s4181, 8
        %s4183 = scalar_lea.vmem %s8, %s4182
      $region64: #{_mask_decoder_forward_impl.4} parent=59 // pred_fallthru
        _
    $region60: #{_mask_decoder_forward_impl.4} parent=5 // pred_fallthru
      _
  $region6: #{_mask_decoder_forward_impl.4} parent=0 // loop_footer
    %s18 = sadd.s32 1, %s14
  $region7: #{_mask_decoder_forward_impl.4} parent=0 // loop_footer_branch
    %13 = sbr.rel target = $region3
  $region8: #{_mask_decoder_forward_impl.4} parent=0 // loop_exit
    _

</llo_original>
